<compile_context>
chip_gen: v7x
topology: tpu7x:2x2x1
jax: 0.10.0
libtpu: 0.0.40
codegen_flags: <defaults>
</compile_context>

<pallas_src>
import functools

import jax
import jax.numpy as jnp
import numpy as np
from jax import lax
from jax.experimental import pallas as pl
from jax.experimental.pallas import tpu as pltpu

EPS = 1e-5          # GroupNorm default eps in PyTorch
LANE = 128          # TPU lane width
MXU_BF16 = True     # feed the 1x1-conv matmul in bf16 (f32 accumulation)


def _gelu_exact(v):
    # nn.GELU() default is the exact erf-based GELU.
    return 0.5 * v * (1.0 + lax.erf(v * 0.7071067811865475))


def _conv_mixer_kernel(x_ref, dww_ref, w1_ref, b1_ref, g1_ref, bt1_ref,
                       g2_ref, bt2_ref, o_ref, xn_ref, a_ref,
                       *, H, W, Cp, K, P, R, n_real):
    """One batch sample per grid step. Channel axis padded to Cp (lane-dense).

    x_ref   : (1, H, W, Cp)        input sample
    dww_ref : (K, K, Cp)           depthwise weight (torch (C,1,K,K) -> (K,K,C), padded)
    w1_ref  : (Cp, Cp)             1x1 weight (Cin, Cout), bf16 when MXU_BF16
    b1_ref  : (1, Cp)              1x1 bias (f32)
    g*/bt*  : (1, 1, Cp)           GroupNorm affine params (padded with zeros)
    xn_ref  : (H+2P, W+2P, Cp) f32 scratch: GN1(x) with zero halo
    a_ref   : (H, W, Cp) f32       scratch: GELU(depthwise(GN1(x)))
    """
    Hp, Wp = H + 2 * P, W + 2 * P
    inv_n = 1.0 / float(n_real)

    # ---- zero only the halo ring; the interior is fully overwritten below.
    # Done every step (cheap, ~halo-sized stores) so the scratch is valid even
    # when the batch axis is sharded across TensorCores ("parallel").
    if P > 0:
        xn_ref[0:P, :, :] = jnp.zeros((P, Wp, Cp), jnp.float32)
        xn_ref[P + H:Hp, :, :] = jnp.zeros((P, Wp, Cp), jnp.float32)
        xn_ref[P:P + H, 0:P, :] = jnp.zeros((H, P, Cp), jnp.float32)
        xn_ref[P:P + H, P + W:Wp, :] = jnp.zeros((H, P, Cp), jnp.float32)

    # ---- GroupNorm(1, C) of the input: fused single-pass sum / sum-of-squares.
    # (Padded channels are exactly zero, so they do not perturb the sums; the
    #  divisor n_real = C*H*W uses the true channel count.)
    x = x_ref[0].astype(jnp.float32)                         # (H, W, Cp)
    s1 = jnp.sum(x)
    q1 = jnp.sum(x * x)
    m1 = s1 * inv_n
    v1 = jnp.maximum(q1 * inv_n - m1 * m1, 0.0)
    inv1 = lax.rsqrt(v1 + EPS)
    xn_ref[P:P + H, P:P + W, :] = (x - m1) * inv1 * g1_ref[0, 0, :] + bt1_ref[0, 0, :]

    # ---- Depthwise KxK conv ('same', no bias) + GELU, tiled over row blocks of
    # R rows so each accumulator tile stays register-resident.  GN2 statistics
    # (sum / sum-of-squares) are fused into the same pass.
    s2 = jnp.float32(0.0)
    q2 = jnp.float32(0.0)
    nb = H // R
    for bi in range(nb):
        h0 = bi * R
        acc = None
        for i in range(K):                                   # fully unrolled taps
            for j in range(K):
                sl = xn_ref[h0 + i:h0 + i + R, j:j + W, :]   # (R, W, Cp)
                term = sl * dww_ref[i, j, :]
                acc = term if acc is None else acc + term
        a_blk = _gelu_exact(acc)
        a_ref[h0:h0 + R, :, :] = a_blk
        s2 = s2 + jnp.sum(a_blk)
        q2 = q2 + jnp.sum(a_blk * a_blk)

    m2 = s2 * inv_n
    v2 = jnp.maximum(q2 * inv_n - m2 * m2, 0.0)
    inv2 = lax.rsqrt(v2 + EPS)

    # ---- residual + GN2 + 1x1 conv (MXU, bf16 feed) + GELU, per row block.
    w1 = w1_ref[...]                                         # (Cp, Cp)
    for bi in range(nb):
        h0 = bi * R
        a_blk = a_ref[h0:h0 + R, :, :]
        an = (a_blk - m2) * inv2 * g2_ref[0, 0, :] + bt2_ref[0, 0, :]
        y = x_ref[0, h0:h0 + R, :, :].astype(jnp.float32) + an    # (R, W, Cp)
        # (R, W, Cp) -> (R*W, Cp) is a layout no-op when W % 8 == 0, Cp % 128 == 0.
        y2d = y.reshape(R * W, Cp).astype(w1.dtype)
        out = jnp.dot(y2d, w1, preferred_element_type=jnp.float32) + b1_ref[...]
        out = _gelu_exact(out)
        o_ref[0, h0:h0 + R, :, :] = out.reshape(R, W, Cp).astype(o_ref.dtype)


def conv_mixer_forward(x_nchw, params, *, kernel_size):
    """Wrapper: NCHW in, NCHW out (matching the PyTorch module)."""
    dww, w1, b1, g1, bt1, g2, bt2 = params
    B, C, H, W = x_nchw.shape
    K = kernel_size
    assert K % 2 == 1, "padding='same' implemented for odd kernels"
    P = K // 2

    # Pad the channel axis to a multiple of 128 so lanes are dense.
    Cp = ((C + LANE - 1) // LANE) * LANE
    pc = Cp - C
    # Row-block size for the depthwise/matmul tiling.
    R = 8 if H % 8 == 0 else H

    x = jnp.transpose(x_nchw, (0, 2, 3, 1))                  # (B, H, W, C)
    if pc:
        x = jnp.pad(x, ((0, 0), (0, 0), (0, 0), (0, pc)))
        dww = jnp.pad(dww, ((0, 0), (0, 0), (0, pc)))
        w1 = jnp.pad(w1, ((0, pc), (0, pc)))
        b1, g1, bt1, g2, bt2 = [jnp.pad(v, (0, pc)) for v in (b1, g1, bt1, g2, bt2)]
    w1 = w1.astype(jnp.bfloat16) if MXU_BF16 else w1.astype(jnp.float32)

    kernel = functools.partial(_conv_mixer_kernel, H=H, W=W, Cp=Cp, K=K, P=P,
                               R=R, n_real=C * H * W)

    def full_spec(shape):
        return pl.BlockSpec(shape, lambda b: (0,) * len(shape))

    out = pl.pallas_call(
        kernel,
        out_shape=jax.ShapeDtypeStruct((B, H, W, Cp), x.dtype),
        grid_spec=pltpu.PrefetchScalarGridSpec(
            num_scalar_prefetch=0,
            grid=(B,),
            in_specs=[
                pl.BlockSpec((1, H, W, Cp), lambda b: (b, 0, 0, 0)),  # x
                full_spec((K, K, Cp)),                                # depthwise weight
                full_spec((Cp, Cp)),                                  # 1x1 weight
                full_spec((1, Cp)),                                   # 1x1 bias
                full_spec((1, 1, Cp)),                                # gn1 gamma
                full_spec((1, 1, Cp)),                                # gn1 beta
                full_spec((1, 1, Cp)),                                # gn2 gamma
                full_spec((1, 1, Cp)),                                # gn2 beta
            ],
            out_specs=pl.BlockSpec((1, H, W, Cp), lambda b: (b, 0, 0, 0)),
            scratch_shapes=[
                pltpu.VMEM((H + 2 * P, W + 2 * P, Cp), jnp.float32),  # GN1(x), zero halo
                pltpu.VMEM((H, W, Cp), jnp.float32),                  # gelu(depthwise)
            ],
        ),
        compiler_params=pltpu.CompilerParams(
            dimension_semantics=("parallel",),        # independent batch -> both v7x TCs
            vmem_limit_bytes=32 * 1024 * 1024,        # explicit scoped-VMEM budget
        ),
    )(x, dww, w1, b1.reshape(1, Cp),
      g1.reshape(1, 1, Cp), bt1.reshape(1, 1, Cp),
      g2.reshape(1, 1, Cp), bt2.reshape(1, 1, Cp))

    out = out[..., :C]                                       # drop channel padding
    return jnp.transpose(out, (0, 3, 1, 2))                  # back to NCHW


def ref_forward(x_nchw, params, *, kernel_size):
    """Pure-JAX reference (lax.conv / einsum) for validation.

    When MXU_BF16 is True the reference mirrors the kernel's bf16 MXU feed for
    the 1x1 conv (f32 accumulation); everything else is f32/HIGHEST precision.
    """
    dww, w1, b1, g1, bt1, g2, bt2 = params
    B, C, H, W = x_nchw.shape
    x = jnp.transpose(x_nchw, (0, 2, 3, 1)).astype(jnp.float32)

    def gn(v, g, b):
        m = jnp.mean(v, axis=(1, 2, 3), keepdims=True)
        var = jnp.mean((v - m) ** 2, axis=(1, 2, 3), keepdims=True)
        return (v - m) / jnp.sqrt(var + EPS) * g + b

    xn = gn(x, g1, bt1)
    conv = lax.conv_general_dilated(
        xn, dww[:, :, None, :], window_strides=(1, 1), padding="SAME",
        dimension_numbers=("NHWC", "HWIO", "NHWC"), feature_group_count=C,
        precision=lax.Precision.HIGHEST)
    a = _gelu_exact(conv)
    y = x + gn(a, g2, bt2)
    if MXU_BF16:
        out = jnp.einsum("bhwc,cd->bhwd", y.astype(jnp.bfloat16),
                         w1.astype(jnp.bfloat16),
                         preferred_element_type=jnp.float32) + b1
    else:
        out = jnp.einsum("bhwc,cd->bhwd", y, w1,
                         precision=lax.Precision.HIGHEST) + b1
    out = _gelu_exact(out)
    return jnp.transpose(out, (0, 3, 1, 2))


if __name__ == "__main__":
    # Small, deterministic synthetic shapes (embedding_dim=C=8, kernel_size=5).
    B, C, H, W = 2, 8, 16, 16
    K = 5

    key = jax.random.PRNGKey(0)
    ks = jax.random.split(key, 8)
    x = jax.random.normal(ks[0], (B, C, H, W), jnp.float32)

    # Deterministic parameter init (shapes per the module's __init__):
    dww = 0.1 * jax.random.normal(ks[1], (K, K, C), jnp.float32)           # (C,1,K,K)->(K,K,C)
    w1 = jax.random.normal(ks[2], (C, C), jnp.float32) / jnp.sqrt(C)       # (Cin, Cout)
    b1 = 0.1 * jax.random.normal(ks[3], (C,), jnp.float32)
    g1 = 1.0 + 0.1 * jax.random.normal(ks[4], (C,), jnp.float32)
    bt1 = 0.1 * jax.random.normal(ks[5], (C,), jnp.float32)
    g2 = 1.0 + 0.1 * jax.random.normal(ks[6], (C,), jnp.float32)
    bt2 = 0.1 * jax.random.normal(ks[7], (C,), jnp.float32)
    params = (dww, w1, b1, g1, bt1, g2, bt2)

    out = conv_mixer_forward(x, params, kernel_size=K)
    out = jax.block_until_ready(out)
    assert out.shape == x.shape

    ref = ref_forward(x, params, kernel_size=K)
    tol = 5e-3 if MXU_BF16 else 2e-4
    np.testing.assert_allclose(np.asarray(out), np.asarray(ref), atol=tol, rtol=tol)
    print("KERNEL_OK")
</pallas_src>

<mosaic_0001>
module attributes {stable_mosaic.version = 11 : i64} {
  func.func @_conv_mixer_kernel(%arg0: i32, %arg1: memref<1x16x16x128xf32, #tpu.memory_space<vmem>>, %arg2: memref<5x5x128xf32, #tpu.memory_space<vmem>>, %arg3: memref<128x128xbf16, #tpu.memory_space<vmem>>, %arg4: memref<1x128xf32, #tpu.memory_space<vmem>>, %arg5: memref<1x1x128xf32, #tpu.memory_space<vmem>>, %arg6: memref<1x1x128xf32, #tpu.memory_space<vmem>>, %arg7: memref<1x1x128xf32, #tpu.memory_space<vmem>>, %arg8: memref<1x1x128xf32, #tpu.memory_space<vmem>>, %arg9: memref<1x16x16x128xf32, #tpu.memory_space<vmem>>, %arg10: memref<20x20x128xf32, #tpu.memory_space<vmem>>, %arg11: memref<16x16x128xf32, #tpu.memory_space<vmem>>) attributes {dimension_semantics = [#tpu.dimension_semantics<parallel>], iteration_bounds = array<i64: 2>, scalar_prefetch = 0 : i64, scratch_operands = 2 : i64, tpu.core_type = #tpu.core_type<tc>, window_params = [{transform_indices = @transform_0, window_bounds = array<i64: 1, 16, 16, 128>}, {pipeline_mode = #tpu.pipeline_mode<synchronous>, transform_indices = @transform_1, window_bounds = array<i64: 5, 5, 128>}, {pipeline_mode = #tpu.pipeline_mode<synchronous>, transform_indices = @transform_2, window_bounds = array<i64: 128, 128>}, {pipeline_mode = #tpu.pipeline_mode<synchronous>, transform_indices = @transform_3, window_bounds = array<i64: 1, 128>}, {pipeline_mode = #tpu.pipeline_mode<synchronous>, transform_indices = @transform_4, window_bounds = array<i64: 1, 1, 128>}, {pipeline_mode = #tpu.pipeline_mode<synchronous>, transform_indices = @transform_5, window_bounds = array<i64: 1, 1, 128>}, {pipeline_mode = #tpu.pipeline_mode<synchronous>, transform_indices = @transform_6, window_bounds = array<i64: 1, 1, 128>}, {pipeline_mode = #tpu.pipeline_mode<synchronous>, transform_indices = @transform_7, window_bounds = array<i64: 1, 1, 128>}, {transform_indices = @transform_8, window_bounds = array<i64: 1, 16, 16, 128>}]} {
    %cst = arith.constant 0.000000e+00 : f32
    %0 = vector.broadcast %cst : f32 to vector<2x20x128xf32>
    %c0 = arith.constant 0 : index
    %c0_0 = arith.constant 0 : index
    %c0_1 = arith.constant 0 : index
    %1 = vector.load %arg10[%c0, %c0_0, %c0_1] : memref<20x20x128xf32, #tpu.memory_space<vmem>>, vector<2x20x128xf32>
    tpu.vector_store %arg10[%c0, %c0_0, %c0_1], %0 {strides = array<i32>} : memref<20x20x128xf32, #tpu.memory_space<vmem>>, vector<2x20x128xf32>,
    %cst_2 = arith.constant 0.000000e+00 : f32
    %2 = vector.broadcast %cst_2 : f32 to vector<2x20x128xf32>
    %c18 = arith.constant 18 : index
    %c0_3 = arith.constant 0 : index
    %c0_4 = arith.constant 0 : index
    %3 = vector.load %arg10[%c18, %c0_3, %c0_4] : memref<20x20x128xf32, #tpu.memory_space<vmem>>, vector<2x20x128xf32>
    tpu.vector_store %arg10[%c18, %c0_3, %c0_4], %2 {strides = array<i32>} : memref<20x20x128xf32, #tpu.memory_space<vmem>>, vector<2x20x128xf32>,
    %cst_5 = arith.constant 0.000000e+00 : f32
    %4 = vector.broadcast %cst_5 : f32 to vector<16x2x128xf32>
    %c2 = arith.constant 2 : index
    %c0_6 = arith.constant 0 : index
    %c0_7 = arith.constant 0 : index
    %5 = vector.load %arg10[%c2, %c0_6, %c0_7] : memref<20x20x128xf32, #tpu.memory_space<vmem>>, vector<16x2x128xf32>
    tpu.vector_store %arg10[%c2, %c0_6, %c0_7], %4 {strides = array<i32>} : memref<20x20x128xf32, #tpu.memory_space<vmem>>, vector<16x2x128xf32>,
    %cst_8 = arith.constant 0.000000e+00 : f32
    %6 = vector.broadcast %cst_8 : f32 to vector<16x2x128xf32>
    %c2_9 = arith.constant 2 : index
    %c18_10 = arith.constant 18 : index
    %c0_11 = arith.constant 0 : index
    %7 = vector.load %arg10[%c2_9, %c18_10, %c0_11] : memref<20x20x128xf32, #tpu.memory_space<vmem>>, vector<16x2x128xf32>
    tpu.vector_store %arg10[%c2_9, %c18_10, %c0_11], %6 {strides = array<i32>} : memref<20x20x128xf32, #tpu.memory_space<vmem>>, vector<16x2x128xf32>,
    %c0_12 = arith.constant 0 : index
    %c0_13 = arith.constant 0 : index
    %c0_14 = arith.constant 0 : index
    %c0_15 = arith.constant 0 : index
    %8 = vector.load %arg1[%c0_12, %c0_13, %c0_14, %c0_15] : memref<1x16x16x128xf32, #tpu.memory_space<vmem>>, vector<1x16x16x128xf32>
    %9 = vector.shape_cast %8 : vector<1x16x16x128xf32> to vector<16x16x128xf32>
    %10 = vector.shape_cast %9 : vector<16x16x128xf32> to vector<1x16x16x128xf32>
    %cst_16 = arith.constant dense<0.000000e+00> : vector<1xf32>
    %11 = vector.multi_reduction <add>, %10, %cst_16 [1, 2, 3] : vector<1x16x16x128xf32> to vector<1xf32>
    %12 = vector.shape_cast %11 : vector<1xf32> to vector<1x1x1x1xf32>
    %13 = vector.extract %12[0, 0, 0, 0] : f32 from vector<1x1x1x1xf32>
    %14 = arith.mulf %9, %9 : vector<16x16x128xf32>
    %15 = vector.shape_cast %14 : vector<16x16x128xf32> to vector<1x16x16x128xf32>
    %cst_17 = arith.constant dense<0.000000e+00> : vector<1xf32>
    %16 = vector.multi_reduction <add>, %15, %cst_17 [1, 2, 3] : vector<1x16x16x128xf32> to vector<1xf32>
    %17 = vector.shape_cast %16 : vector<1xf32> to vector<1x1x1x1xf32>
    %18 = vector.extract %17[0, 0, 0, 0] : f32 from vector<1x1x1x1xf32>
    %cst_18 = arith.constant 4.8828125E-4 : f32
    %19 = arith.mulf %13, %cst_18 : f32
    %cst_19 = arith.constant 4.8828125E-4 : f32
    %20 = arith.mulf %18, %cst_19 : f32
    %21 = arith.mulf %19, %19 : f32
    %22 = arith.subf %20, %21 : f32
    %cst_20 = arith.constant 0.000000e+00 : f32
    %23 = arith.maximumf %22, %cst_20 : f32
    %cst_21 = arith.constant 9.99999974E-6 : f32
    %24 = arith.addf %23, %cst_21 : f32
    %25 = math.rsqrt %24 : f32
    %26 = vector.broadcast %19 : f32 to vector<16x16x128xf32>
    %27 = arith.subf %9, %26 : vector<16x16x128xf32>
    %28 = vector.broadcast %25 : f32 to vector<16x16x128xf32>
    %29 = arith.mulf %27, %28 : vector<16x16x128xf32>
    %c0_22 = arith.constant 0 : index
    %c0_23 = arith.constant 0 : index
    %c0_24 = arith.constant 0 : index
    %30 = vector.load %arg5[%c0_22, %c0_23, %c0_24] : memref<1x1x128xf32, #tpu.memory_space<vmem>>, vector<1x1x128xf32>
    %31 = vector.shape_cast %30 : vector<1x1x128xf32> to vector<128xf32>
    %32 = vector.shape_cast %31 : vector<128xf32> to vector<1x1x128xf32>
    %33 = vector.broadcast %32 : vector<1x1x128xf32> to vector<16x16x128xf32>
    %34 = arith.mulf %29, %33 : vector<16x16x128xf32>
    %c0_25 = arith.constant 0 : index
    %c0_26 = arith.constant 0 : index
    %c0_27 = arith.constant 0 : index
    %35 = vector.load %arg6[%c0_25, %c0_26, %c0_27] : memref<1x1x128xf32, #tpu.memory_space<vmem>>, vector<1x1x128xf32>
    %36 = vector.shape_cast %35 : vector<1x1x128xf32> to vector<128xf32>
    %37 = vector.shape_cast %36 : vector<128xf32> to vector<1x1x128xf32>
    %38 = vector.broadcast %37 : vector<1x1x128xf32> to vector<16x16x128xf32>
    %39 = arith.addf %34, %38 : vector<16x16x128xf32>
    %c2_28 = arith.constant 2 : index
    %c2_29 = arith.constant 2 : index
    %c0_30 = arith.constant 0 : index
    %40 = vector.load %arg10[%c2_28, %c2_29, %c0_30] : memref<20x20x128xf32, #tpu.memory_space<vmem>>, vector<16x16x128xf32>
    tpu.vector_store %arg10[%c2_28, %c2_29, %c0_30], %39 {strides = array<i32>} : memref<20x20x128xf32, #tpu.memory_space<vmem>>, vector<16x16x128xf32>,
    %c0_31 = arith.constant 0 : index
    %c0_32 = arith.constant 0 : index
    %c0_33 = arith.constant 0 : index
    %41 = vector.load %arg10[%c0_31, %c0_32, %c0_33] : memref<20x20x128xf32, #tpu.memory_space<vmem>>, vector<8x16x128xf32>
    %c0_34 = arith.constant 0 : index
    %c0_35 = arith.constant 0 : index
    %c0_36 = arith.constant 0 : index
    %42 = vector.load %arg2[%c0_34, %c0_35, %c0_36] : memref<5x5x128xf32, #tpu.memory_space<vmem>>, vector<1x1x128xf32>
    %43 = vector.shape_cast %42 : vector<1x1x128xf32> to vector<128xf32>
    %44 = vector.shape_cast %43 : vector<128xf32> to vector<1x1x128xf32>
    %45 = vector.broadcast %44 : vector<1x1x128xf32> to vector<8x16x128xf32>
    %46 = arith.mulf %41, %45 : vector<8x16x128xf32>
    %c0_37 = arith.constant 0 : index
    %c1 = arith.constant 1 : index
    %c0_38 = arith.constant 0 : index
    %47 = vector.load %arg10[%c0_37, %c1, %c0_38] : memref<20x20x128xf32, #tpu.memory_space<vmem>>, vector<8x16x128xf32>
    %c0_39 = arith.constant 0 : index
    %c1_40 = arith.constant 1 : index
    %c0_41 = arith.constant 0 : index
    %48 = vector.load %arg2[%c0_39, %c1_40, %c0_41] : memref<5x5x128xf32, #tpu.memory_space<vmem>>, vector<1x1x128xf32>
    %49 = vector.shape_cast %48 : vector<1x1x128xf32> to vector<128xf32>
    %50 = vector.shape_cast %49 : vector<128xf32> to vector<1x1x128xf32>
    %51 = vector.broadcast %50 : vector<1x1x128xf32> to vector<8x16x128xf32>
    %52 = arith.mulf %47, %51 : vector<8x16x128xf32>
    %53 = arith.addf %46, %52 : vector<8x16x128xf32>
    %c0_42 = arith.constant 0 : index
    %c2_43 = arith.constant 2 : index
    %c0_44 = arith.constant 0 : index
    %54 = vector.load %arg10[%c0_42, %c2_43, %c0_44] : memref<20x20x128xf32, #tpu.memory_space<vmem>>, vector<8x16x128xf32>
    %c0_45 = arith.constant 0 : index
    %c2_46 = arith.constant 2 : index
    %c0_47 = arith.constant 0 : index
    %55 = vector.load %arg2[%c0_45, %c2_46, %c0_47] : memref<5x5x128xf32, #tpu.memory_space<vmem>>, vector<1x1x128xf32>
    %56 = vector.shape_cast %55 : vector<1x1x128xf32> to vector<128xf32>
    %57 = vector.shape_cast %56 : vector<128xf32> to vector<1x1x128xf32>
    %58 = vector.broadcast %57 : vector<1x1x128xf32> to vector<8x16x128xf32>
    %59 = arith.mulf %54, %58 : vector<8x16x128xf32>
    %60 = arith.addf %53, %59 : vector<8x16x128xf32>
    %c0_48 = arith.constant 0 : index
    %c3 = arith.constant 3 : index
    %c0_49 = arith.constant 0 : index
    %61 = vector.load %arg10[%c0_48, %c3, %c0_49] : memref<20x20x128xf32, #tpu.memory_space<vmem>>, vector<8x16x128xf32>
    %c0_50 = arith.constant 0 : index
    %c3_51 = arith.constant 3 : index
    %c0_52 = arith.constant 0 : index
    %62 = vector.load %arg2[%c0_50, %c3_51, %c0_52] : memref<5x5x128xf32, #tpu.memory_space<vmem>>, vector<1x1x128xf32>
    %63 = vector.shape_cast %62 : vector<1x1x128xf32> to vector<128xf32>
    %64 = vector.shape_cast %63 : vector<128xf32> to vector<1x1x128xf32>
    %65 = vector.broadcast %64 : vector<1x1x128xf32> to vector<8x16x128xf32>
    %66 = arith.mulf %61, %65 : vector<8x16x128xf32>
    %67 = arith.addf %60, %66 : vector<8x16x128xf32>
    %c0_53 = arith.constant 0 : index
    %c4 = arith.constant 4 : index
    %c0_54 = arith.constant 0 : index
    %68 = vector.load %arg10[%c0_53, %c4, %c0_54] : memref<20x20x128xf32, #tpu.memory_space<vmem>>, vector<8x16x128xf32>
    %c0_55 = arith.constant 0 : index
    %c4_56 = arith.constant 4 : index
    %c0_57 = arith.constant 0 : index
    %69 = vector.load %arg2[%c0_55, %c4_56, %c0_57] : memref<5x5x128xf32, #tpu.memory_space<vmem>>, vector<1x1x128xf32>
    %70 = vector.shape_cast %69 : vector<1x1x128xf32> to vector<128xf32>
    %71 = vector.shape_cast %70 : vector<128xf32> to vector<1x1x128xf32>
    %72 = vector.broadcast %71 : vector<1x1x128xf32> to vector<8x16x128xf32>
    %73 = arith.mulf %68, %72 : vector<8x16x128xf32>
    %74 = arith.addf %67, %73 : vector<8x16x128xf32>
    %c1_58 = arith.constant 1 : index
    %c0_59 = arith.constant 0 : index
    %c0_60 = arith.constant 0 : index
    %75 = vector.load %arg10[%c1_58, %c0_59, %c0_60] : memref<20x20x128xf32, #tpu.memory_space<vmem>>, vector<8x16x128xf32>
    %c1_61 = arith.constant 1 : index
    %c0_62 = arith.constant 0 : index
    %c0_63 = arith.constant 0 : index
    %76 = vector.load %arg2[%c1_61, %c0_62, %c0_63] : memref<5x5x128xf32, #tpu.memory_space<vmem>>, vector<1x1x128xf32>
    %77 = vector.shape_cast %76 : vector<1x1x128xf32> to vector<128xf32>
    %78 = vector.shape_cast %77 : vector<128xf32> to vector<1x1x128xf32>
    %79 = vector.broadcast %78 : vector<1x1x128xf32> to vector<8x16x128xf32>
    %80 = arith.mulf %75, %79 : vector<8x16x128xf32>
    %81 = arith.addf %74, %80 : vector<8x16x128xf32>
    %c1_64 = arith.constant 1 : index
    %c1_65 = arith.constant 1 : index
    %c0_66 = arith.constant 0 : index
    %82 = vector.load %arg10[%c1_64, %c1_65, %c0_66] : memref<20x20x128xf32, #tpu.memory_space<vmem>>, vector<8x16x128xf32>
    %c1_67 = arith.constant 1 : index
    %c1_68 = arith.constant 1 : index
    %c0_69 = arith.constant 0 : index
    %83 = vector.load %arg2[%c1_67, %c1_68, %c0_69] : memref<5x5x128xf32, #tpu.memory_space<vmem>>, vector<1x1x128xf32>
    %84 = vector.shape_cast %83 : vector<1x1x128xf32> to vector<128xf32>
    %85 = vector.shape_cast %84 : vector<128xf32> to vector<1x1x128xf32>
    %86 = vector.broadcast %85 : vector<1x1x128xf32> to vector<8x16x128xf32>
    %87 = arith.mulf %82, %86 : vector<8x16x128xf32>
    %88 = arith.addf %81, %87 : vector<8x16x128xf32>
    %c1_70 = arith.constant 1 : index
    %c2_71 = arith.constant 2 : index
    %c0_72 = arith.constant 0 : index
    %89 = vector.load %arg10[%c1_70, %c2_71, %c0_72] : memref<20x20x128xf32, #tpu.memory_space<vmem>>, vector<8x16x128xf32>
    %c1_73 = arith.constant 1 : index
    %c2_74 = arith.constant 2 : index
    %c0_75 = arith.constant 0 : index
    %90 = vector.load %arg2[%c1_73, %c2_74, %c0_75] : memref<5x5x128xf32, #tpu.memory_space<vmem>>, vector<1x1x128xf32>
    %91 = vector.shape_cast %90 : vector<1x1x128xf32> to vector<128xf32>
    %92 = vector.shape_cast %91 : vector<128xf32> to vector<1x1x128xf32>
    %93 = vector.broadcast %92 : vector<1x1x128xf32> to vector<8x16x128xf32>
    %94 = arith.mulf %89, %93 : vector<8x16x128xf32>
    %95 = arith.addf %88, %94 : vector<8x16x128xf32>
    %c1_76 = arith.constant 1 : index
    %c3_77 = arith.constant 3 : index
    %c0_78 = arith.constant 0 : index
    %96 = vector.load %arg10[%c1_76, %c3_77, %c0_78] : memref<20x20x128xf32, #tpu.memory_space<vmem>>, vector<8x16x128xf32>
    %c1_79 = arith.constant 1 : index
    %c3_80 = arith.constant 3 : index
    %c0_81 = arith.constant 0 : index
    %97 = vector.load %arg2[%c1_79, %c3_80, %c0_81] : memref<5x5x128xf32, #tpu.memory_space<vmem>>, vector<1x1x128xf32>
    %98 = vector.shape_cast %97 : vector<1x1x128xf32> to vector<128xf32>
    %99 = vector.shape_cast %98 : vector<128xf32> to vector<1x1x128xf32>
    %100 = vector.broadcast %99 : vector<1x1x128xf32> to vector<8x16x128xf32>
    %101 = arith.mulf %96, %100 : vector<8x16x128xf32>
    %102 = arith.addf %95, %101 : vector<8x16x128xf32>
    %c1_82 = arith.constant 1 : index
    %c4_83 = arith.constant 4 : index
    %c0_84 = arith.constant 0 : index
    %103 = vector.load %arg10[%c1_82, %c4_83, %c0_84] : memref<20x20x128xf32, #tpu.memory_space<vmem>>, vector<8x16x128xf32>
    %c1_85 = arith.constant 1 : index
    %c4_86 = arith.constant 4 : index
    %c0_87 = arith.constant 0 : index
    %104 = vector.load %arg2[%c1_85, %c4_86, %c0_87] : memref<5x5x128xf32, #tpu.memory_space<vmem>>, vector<1x1x128xf32>
    %105 = vector.shape_cast %104 : vector<1x1x128xf32> to vector<128xf32>
    %106 = vector.shape_cast %105 : vector<128xf32> to vector<1x1x128xf32>
    %107 = vector.broadcast %106 : vector<1x1x128xf32> to vector<8x16x128xf32>
    %108 = arith.mulf %103, %107 : vector<8x16x128xf32>
    %109 = arith.addf %102, %108 : vector<8x16x128xf32>
    %c2_88 = arith.constant 2 : index
    %c0_89 = arith.constant 0 : index
    %c0_90 = arith.constant 0 : index
    %110 = vector.load %arg10[%c2_88, %c0_89, %c0_90] : memref<20x20x128xf32, #tpu.memory_space<vmem>>, vector<8x16x128xf32>
    %c2_91 = arith.constant 2 : index
    %c0_92 = arith.constant 0 : index
    %c0_93 = arith.constant 0 : index
    %111 = vector.load %arg2[%c2_91, %c0_92, %c0_93] : memref<5x5x128xf32, #tpu.memory_space<vmem>>, vector<1x1x128xf32>
    %112 = vector.shape_cast %111 : vector<1x1x128xf32> to vector<128xf32>
    %113 = vector.shape_cast %112 : vector<128xf32> to vector<1x1x128xf32>
    %114 = vector.broadcast %113 : vector<1x1x128xf32> to vector<8x16x128xf32>
    %115 = arith.mulf %110, %114 : vector<8x16x128xf32>
    %116 = arith.addf %109, %115 : vector<8x16x128xf32>
    %c2_94 = arith.constant 2 : index
    %c1_95 = arith.constant 1 : index
    %c0_96 = arith.constant 0 : index
    %117 = vector.load %arg10[%c2_94, %c1_95, %c0_96] : memref<20x20x128xf32, #tpu.memory_space<vmem>>, vector<8x16x128xf32>
    %c2_97 = arith.constant 2 : index
    %c1_98 = arith.constant 1 : index
    %c0_99 = arith.constant 0 : index
    %118 = vector.load %arg2[%c2_97, %c1_98, %c0_99] : memref<5x5x128xf32, #tpu.memory_space<vmem>>, vector<1x1x128xf32>
    %119 = vector.shape_cast %118 : vector<1x1x128xf32> to vector<128xf32>
    %120 = vector.shape_cast %119 : vector<128xf32> to vector<1x1x128xf32>
    %121 = vector.broadcast %120 : vector<1x1x128xf32> to vector<8x16x128xf32>
    %122 = arith.mulf %117, %121 : vector<8x16x128xf32>
    %123 = arith.addf %116, %122 : vector<8x16x128xf32>
    %c2_100 = arith.constant 2 : index
    %c2_101 = arith.constant 2 : index
    %c0_102 = arith.constant 0 : index
    %124 = vector.load %arg10[%c2_100, %c2_101, %c0_102] : memref<20x20x128xf32, #tpu.memory_space<vmem>>, vector<8x16x128xf32>
    %c2_103 = arith.constant 2 : index
    %c2_104 = arith.constant 2 : index
    %c0_105 = arith.constant 0 : index
    %125 = vector.load %arg2[%c2_103, %c2_104, %c0_105] : memref<5x5x128xf32, #tpu.memory_space<vmem>>, vector<1x1x128xf32>
    %126 = vector.shape_cast %125 : vector<1x1x128xf32> to vector<128xf32>
    %127 = vector.shape_cast %126 : vector<128xf32> to vector<1x1x128xf32>
    %128 = vector.broadcast %127 : vector<1x1x128xf32> to vector<8x16x128xf32>
    %129 = arith.mulf %124, %128 : vector<8x16x128xf32>
    %130 = arith.addf %123, %129 : vector<8x16x128xf32>
    %c2_106 = arith.constant 2 : index
    %c3_107 = arith.constant 3 : index
    %c0_108 = arith.constant 0 : index
    %131 = vector.load %arg10[%c2_106, %c3_107, %c0_108] : memref<20x20x128xf32, #tpu.memory_space<vmem>>, vector<8x16x128xf32>
    %c2_109 = arith.constant 2 : index
    %c3_110 = arith.constant 3 : index
    %c0_111 = arith.constant 0 : index
    %132 = vector.load %arg2[%c2_109, %c3_110, %c0_111] : memref<5x5x128xf32, #tpu.memory_space<vmem>>, vector<1x1x128xf32>
    %133 = vector.shape_cast %132 : vector<1x1x128xf32> to vector<128xf32>
    %134 = vector.shape_cast %133 : vector<128xf32> to vector<1x1x128xf32>
    %135 = vector.broadcast %134 : vector<1x1x128xf32> to vector<8x16x128xf32>
    %136 = arith.mulf %131, %135 : vector<8x16x128xf32>
    %137 = arith.addf %130, %136 : vector<8x16x128xf32>
    %c2_112 = arith.constant 2 : index
    %c4_113 = arith.constant 4 : index
    %c0_114 = arith.constant 0 : index
    %138 = vector.load %arg10[%c2_112, %c4_113, %c0_114] : memref<20x20x128xf32, #tpu.memory_space<vmem>>, vector<8x16x128xf32>
    %c2_115 = arith.constant 2 : index
    %c4_116 = arith.constant 4 : index
    %c0_117 = arith.constant 0 : index
    %139 = vector.load %arg2[%c2_115, %c4_116, %c0_117] : memref<5x5x128xf32, #tpu.memory_space<vmem>>, vector<1x1x128xf32>
    %140 = vector.shape_cast %139 : vector<1x1x128xf32> to vector<128xf32>
    %141 = vector.shape_cast %140 : vector<128xf32> to vector<1x1x128xf32>
    %142 = vector.broadcast %141 : vector<1x1x128xf32> to vector<8x16x128xf32>
    %143 = arith.mulf %138, %142 : vector<8x16x128xf32>
    %144 = arith.addf %137, %143 : vector<8x16x128xf32>
    %c3_118 = arith.constant 3 : index
    %c0_119 = arith.constant 0 : index
    %c0_120 = arith.constant 0 : index
    %145 = vector.load %arg10[%c3_118, %c0_119, %c0_120] : memref<20x20x128xf32, #tpu.memory_space<vmem>>, vector<8x16x128xf32>
    %c3_121 = arith.constant 3 : index
    %c0_122 = arith.constant 0 : index
    %c0_123 = arith.constant 0 : index
    %146 = vector.load %arg2[%c3_121, %c0_122, %c0_123] : memref<5x5x128xf32, #tpu.memory_space<vmem>>, vector<1x1x128xf32>
    %147 = vector.shape_cast %146 : vector<1x1x128xf32> to vector<128xf32>
    %148 = vector.shape_cast %147 : vector<128xf32> to vector<1x1x128xf32>
    %149 = vector.broadcast %148 : vector<1x1x128xf32> to vector<8x16x128xf32>
    %150 = arith.mulf %145, %149 : vector<8x16x128xf32>
    %151 = arith.addf %144, %150 : vector<8x16x128xf32>
    %c3_124 = arith.constant 3 : index
    %c1_125 = arith.constant 1 : index
    %c0_126 = arith.constant 0 : index
    %152 = vector.load %arg10[%c3_124, %c1_125, %c0_126] : memref<20x20x128xf32, #tpu.memory_space<vmem>>, vector<8x16x128xf32>
    %c3_127 = arith.constant 3 : index
    %c1_128 = arith.constant 1 : index
    %c0_129 = arith.constant 0 : index
    %153 = vector.load %arg2[%c3_127, %c1_128, %c0_129] : memref<5x5x128xf32, #tpu.memory_space<vmem>>, vector<1x1x128xf32>
    %154 = vector.shape_cast %153 : vector<1x1x128xf32> to vector<128xf32>
    %155 = vector.shape_cast %154 : vector<128xf32> to vector<1x1x128xf32>
    %156 = vector.broadcast %155 : vector<1x1x128xf32> to vector<8x16x128xf32>
    %157 = arith.mulf %152, %156 : vector<8x16x128xf32>
    %158 = arith.addf %151, %157 : vector<8x16x128xf32>
    %c3_130 = arith.constant 3 : index
    %c2_131 = arith.constant 2 : index
    %c0_132 = arith.constant 0 : index
    %159 = vector.load %arg10[%c3_130, %c2_131, %c0_132] : memref<20x20x128xf32, #tpu.memory_space<vmem>>, vector<8x16x128xf32>
    %c3_133 = arith.constant 3 : index
    %c2_134 = arith.constant 2 : index
    %c0_135 = arith.constant 0 : index
    %160 = vector.load %arg2[%c3_133, %c2_134, %c0_135] : memref<5x5x128xf32, #tpu.memory_space<vmem>>, vector<1x1x128xf32>
    %161 = vector.shape_cast %160 : vector<1x1x128xf32> to vector<128xf32>
    %162 = vector.shape_cast %161 : vector<128xf32> to vector<1x1x128xf32>
    %163 = vector.broadcast %162 : vector<1x1x128xf32> to vector<8x16x128xf32>
    %164 = arith.mulf %159, %163 : vector<8x16x128xf32>
    %165 = arith.addf %158, %164 : vector<8x16x128xf32>
    %c3_136 = arith.constant 3 : index
    %c3_137 = arith.constant 3 : index
    %c0_138 = arith.constant 0 : index
    %166 = vector.load %arg10[%c3_136, %c3_137, %c0_138] : memref<20x20x128xf32, #tpu.memory_space<vmem>>, vector<8x16x128xf32>
    %c3_139 = arith.constant 3 : index
    %c3_140 = arith.constant 3 : index
    %c0_141 = arith.constant 0 : index
    %167 = vector.load %arg2[%c3_139, %c3_140, %c0_141] : memref<5x5x128xf32, #tpu.memory_space<vmem>>, vector<1x1x128xf32>
    %168 = vector.shape_cast %167 : vector<1x1x128xf32> to vector<128xf32>
    %169 = vector.shape_cast %168 : vector<128xf32> to vector<1x1x128xf32>
    %170 = vector.broadcast %169 : vector<1x1x128xf32> to vector<8x16x128xf32>
    %171 = arith.mulf %166, %170 : vector<8x16x128xf32>
    %172 = arith.addf %165, %171 : vector<8x16x128xf32>
    %c3_142 = arith.constant 3 : index
    %c4_143 = arith.constant 4 : index
    %c0_144 = arith.constant 0 : index
    %173 = vector.load %arg10[%c3_142, %c4_143, %c0_144] : memref<20x20x128xf32, #tpu.memory_space<vmem>>, vector<8x16x128xf32>
    %c3_145 = arith.constant 3 : index
    %c4_146 = arith.constant 4 : index
    %c0_147 = arith.constant 0 : index
    %174 = vector.load %arg2[%c3_145, %c4_146, %c0_147] : memref<5x5x128xf32, #tpu.memory_space<vmem>>, vector<1x1x128xf32>
    %175 = vector.shape_cast %174 : vector<1x1x128xf32> to vector<128xf32>
    %176 = vector.shape_cast %175 : vector<128xf32> to vector<1x1x128xf32>
    %177 = vector.broadcast %176 : vector<1x1x128xf32> to vector<8x16x128xf32>
    %178 = arith.mulf %173, %177 : vector<8x16x128xf32>
    %179 = arith.addf %172, %178 : vector<8x16x128xf32>
    %c4_148 = arith.constant 4 : index
    %c0_149 = arith.constant 0 : index
    %c0_150 = arith.constant 0 : index
    %180 = vector.load %arg10[%c4_148, %c0_149, %c0_150] : memref<20x20x128xf32, #tpu.memory_space<vmem>>, vector<8x16x128xf32>
    %c4_151 = arith.constant 4 : index
    %c0_152 = arith.constant 0 : index
    %c0_153 = arith.constant 0 : index
    %181 = vector.load %arg2[%c4_151, %c0_152, %c0_153] : memref<5x5x128xf32, #tpu.memory_space<vmem>>, vector<1x1x128xf32>
    %182 = vector.shape_cast %181 : vector<1x1x128xf32> to vector<128xf32>
    %183 = vector.shape_cast %182 : vector<128xf32> to vector<1x1x128xf32>
    %184 = vector.broadcast %183 : vector<1x1x128xf32> to vector<8x16x128xf32>
    %185 = arith.mulf %180, %184 : vector<8x16x128xf32>
    %186 = arith.addf %179, %185 : vector<8x16x128xf32>
    %c4_154 = arith.constant 4 : index
    %c1_155 = arith.constant 1 : index
    %c0_156 = arith.constant 0 : index
    %187 = vector.load %arg10[%c4_154, %c1_155, %c0_156] : memref<20x20x128xf32, #tpu.memory_space<vmem>>, vector<8x16x128xf32>
    %c4_157 = arith.constant 4 : index
    %c1_158 = arith.constant 1 : index
    %c0_159 = arith.constant 0 : index
    %188 = vector.load %arg2[%c4_157, %c1_158, %c0_159] : memref<5x5x128xf32, #tpu.memory_space<vmem>>, vector<1x1x128xf32>
    %189 = vector.shape_cast %188 : vector<1x1x128xf32> to vector<128xf32>
    %190 = vector.shape_cast %189 : vector<128xf32> to vector<1x1x128xf32>
    %191 = vector.broadcast %190 : vector<1x1x128xf32> to vector<8x16x128xf32>
    %192 = arith.mulf %187, %191 : vector<8x16x128xf32>
    %193 = arith.addf %186, %192 : vector<8x16x128xf32>
    %c4_160 = arith.constant 4 : index
    %c2_161 = arith.constant 2 : index
    %c0_162 = arith.constant 0 : index
    %194 = vector.load %arg10[%c4_160, %c2_161, %c0_162] : memref<20x20x128xf32, #tpu.memory_space<vmem>>, vector<8x16x128xf32>
    %c4_163 = arith.constant 4 : index
    %c2_164 = arith.constant 2 : index
    %c0_165 = arith.constant 0 : index
    %195 = vector.load %arg2[%c4_163, %c2_164, %c0_165] : memref<5x5x128xf32, #tpu.memory_space<vmem>>, vector<1x1x128xf32>
    %196 = vector.shape_cast %195 : vector<1x1x128xf32> to vector<128xf32>
    %197 = vector.shape_cast %196 : vector<128xf32> to vector<1x1x128xf32>
    %198 = vector.broadcast %197 : vector<1x1x128xf32> to vector<8x16x128xf32>
    %199 = arith.mulf %194, %198 : vector<8x16x128xf32>
    %200 = arith.addf %193, %199 : vector<8x16x128xf32>
    %c4_166 = arith.constant 4 : index
    %c3_167 = arith.constant 3 : index
    %c0_168 = arith.constant 0 : index
    %201 = vector.load %arg10[%c4_166, %c3_167, %c0_168] : memref<20x20x128xf32, #tpu.memory_space<vmem>>, vector<8x16x128xf32>
    %c4_169 = arith.constant 4 : index
    %c3_170 = arith.constant 3 : index
    %c0_171 = arith.constant 0 : index
    %202 = vector.load %arg2[%c4_169, %c3_170, %c0_171] : memref<5x5x128xf32, #tpu.memory_space<vmem>>, vector<1x1x128xf32>
    %203 = vector.shape_cast %202 : vector<1x1x128xf32> to vector<128xf32>
    %204 = vector.shape_cast %203 : vector<128xf32> to vector<1x1x128xf32>
    %205 = vector.broadcast %204 : vector<1x1x128xf32> to vector<8x16x128xf32>
    %206 = arith.mulf %201, %205 : vector<8x16x128xf32>
    %207 = arith.addf %200, %206 : vector<8x16x128xf32>
    %c4_172 = arith.constant 4 : index
    %c4_173 = arith.constant 4 : index
    %c0_174 = arith.constant 0 : index
    %208 = vector.load %arg10[%c4_172, %c4_173, %c0_174] : memref<20x20x128xf32, #tpu.memory_space<vmem>>, vector<8x16x128xf32>
    %c4_175 = arith.constant 4 : index
    %c4_176 = arith.constant 4 : index
    %c0_177 = arith.constant 0 : index
    %209 = vector.load %arg2[%c4_175, %c4_176, %c0_177] : memref<5x5x128xf32, #tpu.memory_space<vmem>>, vector<1x1x128xf32>
    %210 = vector.shape_cast %209 : vector<1x1x128xf32> to vector<128xf32>
    %211 = vector.shape_cast %210 : vector<128xf32> to vector<1x1x128xf32>
    %212 = vector.broadcast %211 : vector<1x1x128xf32> to vector<8x16x128xf32>
    %213 = arith.mulf %208, %212 : vector<8x16x128xf32>
    %214 = arith.addf %207, %213 : vector<8x16x128xf32>
    %cst_178 = arith.constant 5.000000e-01 : f32
    %215 = vector.broadcast %cst_178 : f32 to vector<8x16x128xf32>
    %216 = arith.mulf %215, %214 : vector<8x16x128xf32>
    %cst_179 = arith.constant 0.707106769 : f32
    %217 = vector.broadcast %cst_179 : f32 to vector<8x16x128xf32>
    %218 = arith.mulf %214, %217 : vector<8x16x128xf32>
    %219 = math.erf %218 : vector<8x16x128xf32>
    %cst_180 = arith.constant 1.000000e+00 : f32
    %220 = vector.broadcast %cst_180 : f32 to vector<8x16x128xf32>
    %221 = arith.addf %220, %219 : vector<8x16x128xf32>
    %222 = arith.mulf %216, %221 : vector<8x16x128xf32>
    %c0_181 = arith.constant 0 : index
    %c0_182 = arith.constant 0 : index
    %c0_183 = arith.constant 0 : index
    %223 = vector.load %arg11[%c0_181, %c0_182, %c0_183] : memref<16x16x128xf32, #tpu.memory_space<vmem>>, vector<8x16x128xf32>
    tpu.vector_store %arg11[%c0_181, %c0_182, %c0_183], %222 {strides = array<i32>} : memref<16x16x128xf32, #tpu.memory_space<vmem>>, vector<8x16x128xf32>,
    %224 = vector.shape_cast %222 : vector<8x16x128xf32> to vector<1x8x16x128xf32>
    %cst_184 = arith.constant dense<0.000000e+00> : vector<1xf32>
    %225 = vector.multi_reduction <add>, %224, %cst_184 [1, 2, 3] : vector<1x8x16x128xf32> to vector<1xf32>
    %226 = vector.shape_cast %225 : vector<1xf32> to vector<1x1x1x1xf32>
    %227 = vector.extract %226[0, 0, 0, 0] : f32 from vector<1x1x1x1xf32>
    %cst_185 = arith.constant 0.000000e+00 : f32
    %228 = arith.addf %cst_185, %227 : f32
    %229 = arith.mulf %222, %222 : vector<8x16x128xf32>
    %230 = vector.shape_cast %229 : vector<8x16x128xf32> to vector<1x8x16x128xf32>
    %cst_186 = arith.constant dense<0.000000e+00> : vector<1xf32>
    %231 = vector.multi_reduction <add>, %230, %cst_186 [1, 2, 3] : vector<1x8x16x128xf32> to vector<1xf32>
    %232 = vector.shape_cast %231 : vector<1xf32> to vector<1x1x1x1xf32>
    %233 = vector.extract %232[0, 0, 0, 0] : f32 from vector<1x1x1x1xf32>
    %cst_187 = arith.constant 0.000000e+00 : f32
    %234 = arith.addf %cst_187, %233 : f32
    %c8 = arith.constant 8 : index
    %c0_188 = arith.constant 0 : index
    %c0_189 = arith.constant 0 : index
    %235 = vector.load %arg10[%c8, %c0_188, %c0_189] : memref<20x20x128xf32, #tpu.memory_space<vmem>>, vector<8x16x128xf32>
    %c0_190 = arith.constant 0 : index
    %c0_191 = arith.constant 0 : index
    %c0_192 = arith.constant 0 : index
    %236 = vector.load %arg2[%c0_190, %c0_191, %c0_192] : memref<5x5x128xf32, #tpu.memory_space<vmem>>, vector<1x1x128xf32>
    %237 = vector.shape_cast %236 : vector<1x1x128xf32> to vector<128xf32>
    %238 = vector.shape_cast %237 : vector<128xf32> to vector<1x1x128xf32>
    %239 = vector.broadcast %238 : vector<1x1x128xf32> to vector<8x16x128xf32>
    %240 = arith.mulf %235, %239 : vector<8x16x128xf32>
    %c8_193 = arith.constant 8 : index
    %c1_194 = arith.constant 1 : index
    %c0_195 = arith.constant 0 : index
    %241 = vector.load %arg10[%c8_193, %c1_194, %c0_195] : memref<20x20x128xf32, #tpu.memory_space<vmem>>, vector<8x16x128xf32>
    %c0_196 = arith.constant 0 : index
    %c1_197 = arith.constant 1 : index
    %c0_198 = arith.constant 0 : index
    %242 = vector.load %arg2[%c0_196, %c1_197, %c0_198] : memref<5x5x128xf32, #tpu.memory_space<vmem>>, vector<1x1x128xf32>
    %243 = vector.shape_cast %242 : vector<1x1x128xf32> to vector<128xf32>
    %244 = vector.shape_cast %243 : vector<128xf32> to vector<1x1x128xf32>
    %245 = vector.broadcast %244 : vector<1x1x128xf32> to vector<8x16x128xf32>
    %246 = arith.mulf %241, %245 : vector<8x16x128xf32>
    %247 = arith.addf %240, %246 : vector<8x16x128xf32>
    %c8_199 = arith.constant 8 : index
    %c2_200 = arith.constant 2 : index
    %c0_201 = arith.constant 0 : index
    %248 = vector.load %arg10[%c8_199, %c2_200, %c0_201] : memref<20x20x128xf32, #tpu.memory_space<vmem>>, vector<8x16x128xf32>
    %c0_202 = arith.constant 0 : index
    %c2_203 = arith.constant 2 : index
    %c0_204 = arith.constant 0 : index
    %249 = vector.load %arg2[%c0_202, %c2_203, %c0_204] : memref<5x5x128xf32, #tpu.memory_space<vmem>>, vector<1x1x128xf32>
    %250 = vector.shape_cast %249 : vector<1x1x128xf32> to vector<128xf32>
    %251 = vector.shape_cast %250 : vector<128xf32> to vector<1x1x128xf32>
    %252 = vector.broadcast %251 : vector<1x1x128xf32> to vector<8x16x128xf32>
    %253 = arith.mulf %248, %252 : vector<8x16x128xf32>
    %254 = arith.addf %247, %253 : vector<8x16x128xf32>
    %c8_205 = arith.constant 8 : index
    %c3_206 = arith.constant 3 : index
    %c0_207 = arith.constant 0 : index
    %255 = vector.load %arg10[%c8_205, %c3_206, %c0_207] : memref<20x20x128xf32, #tpu.memory_space<vmem>>, vector<8x16x128xf32>
    %c0_208 = arith.constant 0 : index
    %c3_209 = arith.constant 3 : index
    %c0_210 = arith.constant 0 : index
    %256 = vector.load %arg2[%c0_208, %c3_209, %c0_210] : memref<5x5x128xf32, #tpu.memory_space<vmem>>, vector<1x1x128xf32>
    %257 = vector.shape_cast %256 : vector<1x1x128xf32> to vector<128xf32>
    %258 = vector.shape_cast %257 : vector<128xf32> to vector<1x1x128xf32>
    %259 = vector.broadcast %258 : vector<1x1x128xf32> to vector<8x16x128xf32>
    %260 = arith.mulf %255, %259 : vector<8x16x128xf32>
    %261 = arith.addf %254, %260 : vector<8x16x128xf32>
    %c8_211 = arith.constant 8 : index
    %c4_212 = arith.constant 4 : index
    %c0_213 = arith.constant 0 : index
    %262 = vector.load %arg10[%c8_211, %c4_212, %c0_213] : memref<20x20x128xf32, #tpu.memory_space<vmem>>, vector<8x16x128xf32>
    %c0_214 = arith.constant 0 : index
    %c4_215 = arith.constant 4 : index
    %c0_216 = arith.constant 0 : index
    %263 = vector.load %arg2[%c0_214, %c4_215, %c0_216] : memref<5x5x128xf32, #tpu.memory_space<vmem>>, vector<1x1x128xf32>
    %264 = vector.shape_cast %263 : vector<1x1x128xf32> to vector<128xf32>
    %265 = vector.shape_cast %264 : vector<128xf32> to vector<1x1x128xf32>
    %266 = vector.broadcast %265 : vector<1x1x128xf32> to vector<8x16x128xf32>
    %267 = arith.mulf %262, %266 : vector<8x16x128xf32>
    %268 = arith.addf %261, %267 : vector<8x16x128xf32>
    %c9 = arith.constant 9 : index
    %c0_217 = arith.constant 0 : index
    %c0_218 = arith.constant 0 : index
    %269 = vector.load %arg10[%c9, %c0_217, %c0_218] : memref<20x20x128xf32, #tpu.memory_space<vmem>>, vector<8x16x128xf32>
    %c1_219 = arith.constant 1 : index
    %c0_220 = arith.constant 0 : index
    %c0_221 = arith.constant 0 : index
    %270 = vector.load %arg2[%c1_219, %c0_220, %c0_221] : memref<5x5x128xf32, #tpu.memory_space<vmem>>, vector<1x1x128xf32>
    %271 = vector.shape_cast %270 : vector<1x1x128xf32> to vector<128xf32>
    %272 = vector.shape_cast %271 : vector<128xf32> to vector<1x1x128xf32>
    %273 = vector.broadcast %272 : vector<1x1x128xf32> to vector<8x16x128xf32>
    %274 = arith.mulf %269, %273 : vector<8x16x128xf32>
    %275 = arith.addf %268, %274 : vector<8x16x128xf32>
    %c9_222 = arith.constant 9 : index
    %c1_223 = arith.constant 1 : index
    %c0_224 = arith.constant 0 : index
    %276 = vector.load %arg10[%c9_222, %c1_223, %c0_224] : memref<20x20x128xf32, #tpu.memory_space<vmem>>, vector<8x16x128xf32>
    %c1_225 = arith.constant 1 : index
    %c1_226 = arith.constant 1 : index
    %c0_227 = arith.constant 0 : index
    %277 = vector.load %arg2[%c1_225, %c1_226, %c0_227] : memref<5x5x128xf32, #tpu.memory_space<vmem>>, vector<1x1x128xf32>
    %278 = vector.shape_cast %277 : vector<1x1x128xf32> to vector<128xf32>
    %279 = vector.shape_cast %278 : vector<128xf32> to vector<1x1x128xf32>
    %280 = vector.broadcast %279 : vector<1x1x128xf32> to vector<8x16x128xf32>
    %281 = arith.mulf %276, %280 : vector<8x16x128xf32>
    %282 = arith.addf %275, %281 : vector<8x16x128xf32>
    %c9_228 = arith.constant 9 : index
    %c2_229 = arith.constant 2 : index
    %c0_230 = arith.constant 0 : index
    %283 = vector.load %arg10[%c9_228, %c2_229, %c0_230] : memref<20x20x128xf32, #tpu.memory_space<vmem>>, vector<8x16x128xf32>
    %c1_231 = arith.constant 1 : index
    %c2_232 = arith.constant 2 : index
    %c0_233 = arith.constant 0 : index
    %284 = vector.load %arg2[%c1_231, %c2_232, %c0_233] : memref<5x5x128xf32, #tpu.memory_space<vmem>>, vector<1x1x128xf32>
    %285 = vector.shape_cast %284 : vector<1x1x128xf32> to vector<128xf32>
    %286 = vector.shape_cast %285 : vector<128xf32> to vector<1x1x128xf32>
    %287 = vector.broadcast %286 : vector<1x1x128xf32> to vector<8x16x128xf32>
    %288 = arith.mulf %283, %287 : vector<8x16x128xf32>
    %289 = arith.addf %282, %288 : vector<8x16x128xf32>
    %c9_234 = arith.constant 9 : index
    %c3_235 = arith.constant 3 : index
    %c0_236 = arith.constant 0 : index
    %290 = vector.load %arg10[%c9_234, %c3_235, %c0_236] : memref<20x20x128xf32, #tpu.memory_space<vmem>>, vector<8x16x128xf32>
    %c1_237 = arith.constant 1 : index
    %c3_238 = arith.constant 3 : index
    %c0_239 = arith.constant 0 : index
    %291 = vector.load %arg2[%c1_237, %c3_238, %c0_239] : memref<5x5x128xf32, #tpu.memory_space<vmem>>, vector<1x1x128xf32>
    %292 = vector.shape_cast %291 : vector<1x1x128xf32> to vector<128xf32>
    %293 = vector.shape_cast %292 : vector<128xf32> to vector<1x1x128xf32>
    %294 = vector.broadcast %293 : vector<1x1x128xf32> to vector<8x16x128xf32>
    %295 = arith.mulf %290, %294 : vector<8x16x128xf32>
    %296 = arith.addf %289, %295 : vector<8x16x128xf32>
    %c9_240 = arith.constant 9 : index
    %c4_241 = arith.constant 4 : index
    %c0_242 = arith.constant 0 : index
    %297 = vector.load %arg10[%c9_240, %c4_241, %c0_242] : memref<20x20x128xf32, #tpu.memory_space<vmem>>, vector<8x16x128xf32>
    %c1_243 = arith.constant 1 : index
    %c4_244 = arith.constant 4 : index
    %c0_245 = arith.constant 0 : index
    %298 = vector.load %arg2[%c1_243, %c4_244, %c0_245] : memref<5x5x128xf32, #tpu.memory_space<vmem>>, vector<1x1x128xf32>
    %299 = vector.shape_cast %298 : vector<1x1x128xf32> to vector<128xf32>
    %300 = vector.shape_cast %299 : vector<128xf32> to vector<1x1x128xf32>
    %301 = vector.broadcast %300 : vector<1x1x128xf32> to vector<8x16x128xf32>
    %302 = arith.mulf %297, %301 : vector<8x16x128xf32>
    %303 = arith.addf %296, %302 : vector<8x16x128xf32>
    %c10 = arith.constant 10 : index
    %c0_246 = arith.constant 0 : index
    %c0_247 = arith.constant 0 : index
    %304 = vector.load %arg10[%c10, %c0_246, %c0_247] : memref<20x20x128xf32, #tpu.memory_space<vmem>>, vector<8x16x128xf32>
    %c2_248 = arith.constant 2 : index
    %c0_249 = arith.constant 0 : index
    %c0_250 = arith.constant 0 : index
    %305 = vector.load %arg2[%c2_248, %c0_249, %c0_250] : memref<5x5x128xf32, #tpu.memory_space<vmem>>, vector<1x1x128xf32>
    %306 = vector.shape_cast %305 : vector<1x1x128xf32> to vector<128xf32>
    %307 = vector.shape_cast %306 : vector<128xf32> to vector<1x1x128xf32>
    %308 = vector.broadcast %307 : vector<1x1x128xf32> to vector<8x16x128xf32>
    %309 = arith.mulf %304, %308 : vector<8x16x128xf32>
    %310 = arith.addf %303, %309 : vector<8x16x128xf32>
    %c10_251 = arith.constant 10 : index
    %c1_252 = arith.constant 1 : index
    %c0_253 = arith.constant 0 : index
    %311 = vector.load %arg10[%c10_251, %c1_252, %c0_253] : memref<20x20x128xf32, #tpu.memory_space<vmem>>, vector<8x16x128xf32>
    %c2_254 = arith.constant 2 : index
    %c1_255 = arith.constant 1 : index
    %c0_256 = arith.constant 0 : index
    %312 = vector.load %arg2[%c2_254, %c1_255, %c0_256] : memref<5x5x128xf32, #tpu.memory_space<vmem>>, vector<1x1x128xf32>
    %313 = vector.shape_cast %312 : vector<1x1x128xf32> to vector<128xf32>
    %314 = vector.shape_cast %313 : vector<128xf32> to vector<1x1x128xf32>
    %315 = vector.broadcast %314 : vector<1x1x128xf32> to vector<8x16x128xf32>
    %316 = arith.mulf %311, %315 : vector<8x16x128xf32>
    %317 = arith.addf %310, %316 : vector<8x16x128xf32>
    %c10_257 = arith.constant 10 : index
    %c2_258 = arith.constant 2 : index
    %c0_259 = arith.constant 0 : index
    %318 = vector.load %arg10[%c10_257, %c2_258, %c0_259] : memref<20x20x128xf32, #tpu.memory_space<vmem>>, vector<8x16x128xf32>
    %c2_260 = arith.constant 2 : index
    %c2_261 = arith.constant 2 : index
    %c0_262 = arith.constant 0 : index
    %319 = vector.load %arg2[%c2_260, %c2_261, %c0_262] : memref<5x5x128xf32, #tpu.memory_space<vmem>>, vector<1x1x128xf32>
    %320 = vector.shape_cast %319 : vector<1x1x128xf32> to vector<128xf32>
    %321 = vector.shape_cast %320 : vector<128xf32> to vector<1x1x128xf32>
    %322 = vector.broadcast %321 : vector<1x1x128xf32> to vector<8x16x128xf32>
    %323 = arith.mulf %318, %322 : vector<8x16x128xf32>
    %324 = arith.addf %317, %323 : vector<8x16x128xf32>
    %c10_263 = arith.constant 10 : index
    %c3_264 = arith.constant 3 : index
    %c0_265 = arith.constant 0 : index
    %325 = vector.load %arg10[%c10_263, %c3_264, %c0_265] : memref<20x20x128xf32, #tpu.memory_space<vmem>>, vector<8x16x128xf32>
    %c2_266 = arith.constant 2 : index
    %c3_267 = arith.constant 3 : index
    %c0_268 = arith.constant 0 : index
    %326 = vector.load %arg2[%c2_266, %c3_267, %c0_268] : memref<5x5x128xf32, #tpu.memory_space<vmem>>, vector<1x1x128xf32>
    %327 = vector.shape_cast %326 : vector<1x1x128xf32> to vector<128xf32>
    %328 = vector.shape_cast %327 : vector<128xf32> to vector<1x1x128xf32>
    %329 = vector.broadcast %328 : vector<1x1x128xf32> to vector<8x16x128xf32>
    %330 = arith.mulf %325, %329 : vector<8x16x128xf32>
    %331 = arith.addf %324, %330 : vector<8x16x128xf32>
    %c10_269 = arith.constant 10 : index
    %c4_270 = arith.constant 4 : index
    %c0_271 = arith.constant 0 : index
    %332 = vector.load %arg10[%c10_269, %c4_270, %c0_271] : memref<20x20x128xf32, #tpu.memory_space<vmem>>, vector<8x16x128xf32>
    %c2_272 = arith.constant 2 : index
    %c4_273 = arith.constant 4 : index
    %c0_274 = arith.constant 0 : index
    %333 = vector.load %arg2[%c2_272, %c4_273, %c0_274] : memref<5x5x128xf32, #tpu.memory_space<vmem>>, vector<1x1x128xf32>
    %334 = vector.shape_cast %333 : vector<1x1x128xf32> to vector<128xf32>
    %335 = vector.shape_cast %334 : vector<128xf32> to vector<1x1x128xf32>
    %336 = vector.broadcast %335 : vector<1x1x128xf32> to vector<8x16x128xf32>
    %337 = arith.mulf %332, %336 : vector<8x16x128xf32>
    %338 = arith.addf %331, %337 : vector<8x16x128xf32>
    %c11 = arith.constant 11 : index
    %c0_275 = arith.constant 0 : index
    %c0_276 = arith.constant 0 : index
    %339 = vector.load %arg10[%c11, %c0_275, %c0_276] : memref<20x20x128xf32, #tpu.memory_space<vmem>>, vector<8x16x128xf32>
    %c3_277 = arith.constant 3 : index
    %c0_278 = arith.constant 0 : index
    %c0_279 = arith.constant 0 : index
    %340 = vector.load %arg2[%c3_277, %c0_278, %c0_279] : memref<5x5x128xf32, #tpu.memory_space<vmem>>, vector<1x1x128xf32>
    %341 = vector.shape_cast %340 : vector<1x1x128xf32> to vector<128xf32>
    %342 = vector.shape_cast %341 : vector<128xf32> to vector<1x1x128xf32>
    %343 = vector.broadcast %342 : vector<1x1x128xf32> to vector<8x16x128xf32>
    %344 = arith.mulf %339, %343 : vector<8x16x128xf32>
    %345 = arith.addf %338, %344 : vector<8x16x128xf32>
    %c11_280 = arith.constant 11 : index
    %c1_281 = arith.constant 1 : index
    %c0_282 = arith.constant 0 : index
    %346 = vector.load %arg10[%c11_280, %c1_281, %c0_282] : memref<20x20x128xf32, #tpu.memory_space<vmem>>, vector<8x16x128xf32>
    %c3_283 = arith.constant 3 : index
    %c1_284 = arith.constant 1 : index
    %c0_285 = arith.constant 0 : index
    %347 = vector.load %arg2[%c3_283, %c1_284, %c0_285] : memref<5x5x128xf32, #tpu.memory_space<vmem>>, vector<1x1x128xf32>
    %348 = vector.shape_cast %347 : vector<1x1x128xf32> to vector<128xf32>
    %349 = vector.shape_cast %348 : vector<128xf32> to vector<1x1x128xf32>
    %350 = vector.broadcast %349 : vector<1x1x128xf32> to vector<8x16x128xf32>
    %351 = arith.mulf %346, %350 : vector<8x16x128xf32>
    %352 = arith.addf %345, %351 : vector<8x16x128xf32>
    %c11_286 = arith.constant 11 : index
    %c2_287 = arith.constant 2 : index
    %c0_288 = arith.constant 0 : index
    %353 = vector.load %arg10[%c11_286, %c2_287, %c0_288] : memref<20x20x128xf32, #tpu.memory_space<vmem>>, vector<8x16x128xf32>
    %c3_289 = arith.constant 3 : index
    %c2_290 = arith.constant 2 : index
    %c0_291 = arith.constant 0 : index
    %354 = vector.load %arg2[%c3_289, %c2_290, %c0_291] : memref<5x5x128xf32, #tpu.memory_space<vmem>>, vector<1x1x128xf32>
    %355 = vector.shape_cast %354 : vector<1x1x128xf32> to vector<128xf32>
    %356 = vector.shape_cast %355 : vector<128xf32> to vector<1x1x128xf32>
    %357 = vector.broadcast %356 : vector<1x1x128xf32> to vector<8x16x128xf32>
    %358 = arith.mulf %353, %357 : vector<8x16x128xf32>
    %359 = arith.addf %352, %358 : vector<8x16x128xf32>
    %c11_292 = arith.constant 11 : index
    %c3_293 = arith.constant 3 : index
    %c0_294 = arith.constant 0 : index
    %360 = vector.load %arg10[%c11_292, %c3_293, %c0_294] : memref<20x20x128xf32, #tpu.memory_space<vmem>>, vector<8x16x128xf32>
    %c3_295 = arith.constant 3 : index
    %c3_296 = arith.constant 3 : index
    %c0_297 = arith.constant 0 : index
    %361 = vector.load %arg2[%c3_295, %c3_296, %c0_297] : memref<5x5x128xf32, #tpu.memory_space<vmem>>, vector<1x1x128xf32>
    %362 = vector.shape_cast %361 : vector<1x1x128xf32> to vector<128xf32>
    %363 = vector.shape_cast %362 : vector<128xf32> to vector<1x1x128xf32>
    %364 = vector.broadcast %363 : vector<1x1x128xf32> to vector<8x16x128xf32>
    %365 = arith.mulf %360, %364 : vector<8x16x128xf32>
    %366 = arith.addf %359, %365 : vector<8x16x128xf32>
    %c11_298 = arith.constant 11 : index
    %c4_299 = arith.constant 4 : index
    %c0_300 = arith.constant 0 : index
    %367 = vector.load %arg10[%c11_298, %c4_299, %c0_300] : memref<20x20x128xf32, #tpu.memory_space<vmem>>, vector<8x16x128xf32>
    %c3_301 = arith.constant 3 : index
    %c4_302 = arith.constant 4 : index
    %c0_303 = arith.constant 0 : index
    %368 = vector.load %arg2[%c3_301, %c4_302, %c0_303] : memref<5x5x128xf32, #tpu.memory_space<vmem>>, vector<1x1x128xf32>
    %369 = vector.shape_cast %368 : vector<1x1x128xf32> to vector<128xf32>
    %370 = vector.shape_cast %369 : vector<128xf32> to vector<1x1x128xf32>
    %371 = vector.broadcast %370 : vector<1x1x128xf32> to vector<8x16x128xf32>
    %372 = arith.mulf %367, %371 : vector<8x16x128xf32>
    %373 = arith.addf %366, %372 : vector<8x16x128xf32>
    %c12 = arith.constant 12 : index
    %c0_304 = arith.constant 0 : index
    %c0_305 = arith.constant 0 : index
    %374 = vector.load %arg10[%c12, %c0_304, %c0_305] : memref<20x20x128xf32, #tpu.memory_space<vmem>>, vector<8x16x128xf32>
    %c4_306 = arith.constant 4 : index
    %c0_307 = arith.constant 0 : index
    %c0_308 = arith.constant 0 : index
    %375 = vector.load %arg2[%c4_306, %c0_307, %c0_308] : memref<5x5x128xf32, #tpu.memory_space<vmem>>, vector<1x1x128xf32>
    %376 = vector.shape_cast %375 : vector<1x1x128xf32> to vector<128xf32>
    %377 = vector.shape_cast %376 : vector<128xf32> to vector<1x1x128xf32>
    %378 = vector.broadcast %377 : vector<1x1x128xf32> to vector<8x16x128xf32>
    %379 = arith.mulf %374, %378 : vector<8x16x128xf32>
    %380 = arith.addf %373, %379 : vector<8x16x128xf32>
    %c12_309 = arith.constant 12 : index
    %c1_310 = arith.constant 1 : index
    %c0_311 = arith.constant 0 : index
    %381 = vector.load %arg10[%c12_309, %c1_310, %c0_311] : memref<20x20x128xf32, #tpu.memory_space<vmem>>, vector<8x16x128xf32>
    %c4_312 = arith.constant 4 : index
    %c1_313 = arith.constant 1 : index
    %c0_314 = arith.constant 0 : index
    %382 = vector.load %arg2[%c4_312, %c1_313, %c0_314] : memref<5x5x128xf32, #tpu.memory_space<vmem>>, vector<1x1x128xf32>
    %383 = vector.shape_cast %382 : vector<1x1x128xf32> to vector<128xf32>
    %384 = vector.shape_cast %383 : vector<128xf32> to vector<1x1x128xf32>
    %385 = vector.broadcast %384 : vector<1x1x128xf32> to vector<8x16x128xf32>
    %386 = arith.mulf %381, %385 : vector<8x16x128xf32>
    %387 = arith.addf %380, %386 : vector<8x16x128xf32>
    %c12_315 = arith.constant 12 : index
    %c2_316 = arith.constant 2 : index
    %c0_317 = arith.constant 0 : index
    %388 = vector.load %arg10[%c12_315, %c2_316, %c0_317] : memref<20x20x128xf32, #tpu.memory_space<vmem>>, vector<8x16x128xf32>
    %c4_318 = arith.constant 4 : index
    %c2_319 = arith.constant 2 : index
    %c0_320 = arith.constant 0 : index
    %389 = vector.load %arg2[%c4_318, %c2_319, %c0_320] : memref<5x5x128xf32, #tpu.memory_space<vmem>>, vector<1x1x128xf32>
    %390 = vector.shape_cast %389 : vector<1x1x128xf32> to vector<128xf32>
    %391 = vector.shape_cast %390 : vector<128xf32> to vector<1x1x128xf32>
    %392 = vector.broadcast %391 : vector<1x1x128xf32> to vector<8x16x128xf32>
    %393 = arith.mulf %388, %392 : vector<8x16x128xf32>
    %394 = arith.addf %387, %393 : vector<8x16x128xf32>
    %c12_321 = arith.constant 12 : index
    %c3_322 = arith.constant 3 : index
    %c0_323 = arith.constant 0 : index
    %395 = vector.load %arg10[%c12_321, %c3_322, %c0_323] : memref<20x20x128xf32, #tpu.memory_space<vmem>>, vector<8x16x128xf32>
    %c4_324 = arith.constant 4 : index
    %c3_325 = arith.constant 3 : index
    %c0_326 = arith.constant 0 : index
    %396 = vector.load %arg2[%c4_324, %c3_325, %c0_326] : memref<5x5x128xf32, #tpu.memory_space<vmem>>, vector<1x1x128xf32>
    %397 = vector.shape_cast %396 : vector<1x1x128xf32> to vector<128xf32>
    %398 = vector.shape_cast %397 : vector<128xf32> to vector<1x1x128xf32>
    %399 = vector.broadcast %398 : vector<1x1x128xf32> to vector<8x16x128xf32>
    %400 = arith.mulf %395, %399 : vector<8x16x128xf32>
    %401 = arith.addf %394, %400 : vector<8x16x128xf32>
    %c12_327 = arith.constant 12 : index
    %c4_328 = arith.constant 4 : index
    %c0_329 = arith.constant 0 : index
    %402 = vector.load %arg10[%c12_327, %c4_328, %c0_329] : memref<20x20x128xf32, #tpu.memory_space<vmem>>, vector<8x16x128xf32>
    %c4_330 = arith.constant 4 : index
    %c4_331 = arith.constant 4 : index
    %c0_332 = arith.constant 0 : index
    %403 = vector.load %arg2[%c4_330, %c4_331, %c0_332] : memref<5x5x128xf32, #tpu.memory_space<vmem>>, vector<1x1x128xf32>
    %404 = vector.shape_cast %403 : vector<1x1x128xf32> to vector<128xf32>
    %405 = vector.shape_cast %404 : vector<128xf32> to vector<1x1x128xf32>
    %406 = vector.broadcast %405 : vector<1x1x128xf32> to vector<8x16x128xf32>
    %407 = arith.mulf %402, %406 : vector<8x16x128xf32>
    %408 = arith.addf %401, %407 : vector<8x16x128xf32>
    %cst_333 = arith.constant 5.000000e-01 : f32
    %409 = vector.broadcast %cst_333 : f32 to vector<8x16x128xf32>
    %410 = arith.mulf %409, %408 : vector<8x16x128xf32>
    %cst_334 = arith.constant 0.707106769 : f32
    %411 = vector.broadcast %cst_334 : f32 to vector<8x16x128xf32>
    %412 = arith.mulf %408, %411 : vector<8x16x128xf32>
    %413 = math.erf %412 : vector<8x16x128xf32>
    %cst_335 = arith.constant 1.000000e+00 : f32
    %414 = vector.broadcast %cst_335 : f32 to vector<8x16x128xf32>
    %415 = arith.addf %414, %413 : vector<8x16x128xf32>
    %416 = arith.mulf %410, %415 : vector<8x16x128xf32>
    %c8_336 = arith.constant 8 : index
    %c0_337 = arith.constant 0 : index
    %c0_338 = arith.constant 0 : index
    %417 = vector.load %arg11[%c8_336, %c0_337, %c0_338] : memref<16x16x128xf32, #tpu.memory_space<vmem>>, vector<8x16x128xf32>
    tpu.vector_store %arg11[%c8_336, %c0_337, %c0_338], %416 {strides = array<i32>} : memref<16x16x128xf32, #tpu.memory_space<vmem>>, vector<8x16x128xf32>,
    %418 = vector.shape_cast %416 : vector<8x16x128xf32> to vector<1x8x16x128xf32>
    %cst_339 = arith.constant dense<0.000000e+00> : vector<1xf32>
    %419 = vector.multi_reduction <add>, %418, %cst_339 [1, 2, 3] : vector<1x8x16x128xf32> to vector<1xf32>
    %420 = vector.shape_cast %419 : vector<1xf32> to vector<1x1x1x1xf32>
    %421 = vector.extract %420[0, 0, 0, 0] : f32 from vector<1x1x1x1xf32>
    %422 = arith.addf %228, %421 : f32
    %423 = arith.mulf %416, %416 : vector<8x16x128xf32>
    %424 = vector.shape_cast %423 : vector<8x16x128xf32> to vector<1x8x16x128xf32>
    %cst_340 = arith.constant dense<0.000000e+00> : vector<1xf32>
    %425 = vector.multi_reduction <add>, %424, %cst_340 [1, 2, 3] : vector<1x8x16x128xf32> to vector<1xf32>
    %426 = vector.shape_cast %425 : vector<1xf32> to vector<1x1x1x1xf32>
    %427 = vector.extract %426[0, 0, 0, 0] : f32 from vector<1x1x1x1xf32>
    %428 = arith.addf %234, %427 : f32
    %cst_341 = arith.constant 4.8828125E-4 : f32
    %429 = arith.mulf %422, %cst_341 : f32
    %cst_342 = arith.constant 4.8828125E-4 : f32
    %430 = arith.mulf %428, %cst_342 : f32
    %431 = arith.mulf %429, %429 : f32
    %432 = arith.subf %430, %431 : f32
    %cst_343 = arith.constant 0.000000e+00 : f32
    %433 = arith.maximumf %432, %cst_343 : f32
    %cst_344 = arith.constant 9.99999974E-6 : f32
    %434 = arith.addf %433, %cst_344 : f32
    %435 = math.rsqrt %434 : f32
    %c0_345 = arith.constant 0 : index
    %c0_346 = arith.constant 0 : index
    %436 = vector.load %arg3[%c0_345, %c0_346] : memref<128x128xbf16, #tpu.memory_space<vmem>>, vector<128x128xbf16>
    %c0_347 = arith.constant 0 : index
    %c0_348 = arith.constant 0 : index
    %c0_349 = arith.constant 0 : index
    %437 = vector.load %arg11[%c0_347, %c0_348, %c0_349] : memref<16x16x128xf32, #tpu.memory_space<vmem>>, vector<8x16x128xf32>
    %438 = vector.broadcast %429 : f32 to vector<8x16x128xf32>
    %439 = arith.subf %437, %438 : vector<8x16x128xf32>
    %440 = vector.broadcast %435 : f32 to vector<8x16x128xf32>
    %441 = arith.mulf %439, %440 : vector<8x16x128xf32>
    %c0_350 = arith.constant 0 : index
    %c0_351 = arith.constant 0 : index
    %c0_352 = arith.constant 0 : index
    %442 = vector.load %arg7[%c0_350, %c0_351, %c0_352] : memref<1x1x128xf32, #tpu.memory_space<vmem>>, vector<1x1x128xf32>
    %443 = vector.shape_cast %442 : vector<1x1x128xf32> to vector<128xf32>
    %444 = vector.shape_cast %443 : vector<128xf32> to vector<1x1x128xf32>
    %445 = vector.broadcast %444 : vector<1x1x128xf32> to vector<8x16x128xf32>
    %446 = arith.mulf %441, %445 : vector<8x16x128xf32>
    %c0_353 = arith.constant 0 : index
    %c0_354 = arith.constant 0 : index
    %c0_355 = arith.constant 0 : index
    %447 = vector.load %arg8[%c0_353, %c0_354, %c0_355] : memref<1x1x128xf32, #tpu.memory_space<vmem>>, vector<1x1x128xf32>
    %448 = vector.shape_cast %447 : vector<1x1x128xf32> to vector<128xf32>
    %449 = vector.shape_cast %448 : vector<128xf32> to vector<1x1x128xf32>
    %450 = vector.broadcast %449 : vector<1x1x128xf32> to vector<8x16x128xf32>
    %451 = arith.addf %446, %450 : vector<8x16x128xf32>
    %c0_356 = arith.constant 0 : index
    %c0_357 = arith.constant 0 : index
    %c0_358 = arith.constant 0 : index
    %c0_359 = arith.constant 0 : index
    %452 = vector.load %arg1[%c0_356, %c0_357, %c0_358, %c0_359] : memref<1x16x16x128xf32, #tpu.memory_space<vmem>>, vector<1x8x16x128xf32>
    %453 = vector.shape_cast %452 : vector<1x8x16x128xf32> to vector<8x16x128xf32>
    %454 = arith.addf %453, %451 : vector<8x16x128xf32>
    %455 = vector.shape_cast %454 : vector<8x16x128xf32> to vector<128x128xf32>
    %456 = arith.truncf %455 : vector<128x128xf32> to vector<128x128xbf16>
    %cst_360 = arith.constant dense<0.000000e+00> : vector<128x128xf32>
    %457 = tpu.matmul %456, %436, %cst_360 {dimension_numbers = #tpu.dot_dimension_numbers<[1], [0], [0], [1], [0, 0, 1, 1], [], []>} : vector<128x128xbf16>, vector<128x128xbf16>, vector<128x128xf32> -> vector<128x128xf32>
    %c0_361 = arith.constant 0 : index
    %c0_362 = arith.constant 0 : index
    %458 = vector.load %arg4[%c0_361, %c0_362] : memref<1x128xf32, #tpu.memory_space<vmem>>, vector<1x128xf32>
    %459 = vector.broadcast %458 : vector<1x128xf32> to vector<128x128xf32>
    %460 = arith.addf %457, %459 : vector<128x128xf32>
    %cst_363 = arith.constant 5.000000e-01 : f32
    %461 = vector.broadcast %cst_363 : f32 to vector<128x128xf32>
    %462 = arith.mulf %461, %460 : vector<128x128xf32>
    %cst_364 = arith.constant 0.707106769 : f32
    %463 = vector.broadcast %cst_364 : f32 to vector<128x128xf32>
    %464 = arith.mulf %460, %463 : vector<128x128xf32>
    %465 = math.erf %464 : vector<128x128xf32>
    %cst_365 = arith.constant 1.000000e+00 : f32
    %466 = vector.broadcast %cst_365 : f32 to vector<128x128xf32>
    %467 = arith.addf %466, %465 : vector<128x128xf32>
    %468 = arith.mulf %462, %467 : vector<128x128xf32>
    %469 = vector.shape_cast %468 : vector<128x128xf32> to vector<8x16x128xf32>
    %c0_366 = arith.constant 0 : index
    %c0_367 = arith.constant 0 : index
    %c0_368 = arith.constant 0 : index
    %c0_369 = arith.constant 0 : index
    %470 = vector.load %arg9[%c0_366, %c0_367, %c0_368, %c0_369] : memref<1x16x16x128xf32, #tpu.memory_space<vmem>>, vector<1x8x16x128xf32>
    %471 = vector.shape_cast %470 : vector<1x8x16x128xf32> to vector<8x16x128xf32>
    %472 = vector.shape_cast %469 : vector<8x16x128xf32> to vector<1x8x16x128xf32>
    tpu.vector_store %arg9[%c0_366, %c0_367, %c0_368, %c0_369], %472 {strides = array<i32>} : memref<1x16x16x128xf32, #tpu.memory_space<vmem>>, vector<1x8x16x128xf32>,
    %c8_370 = arith.constant 8 : index
    %c0_371 = arith.constant 0 : index
    %c0_372 = arith.constant 0 : index
    %473 = vector.load %arg11[%c8_370, %c0_371, %c0_372] : memref<16x16x128xf32, #tpu.memory_space<vmem>>, vector<8x16x128xf32>
    %474 = vector.broadcast %429 : f32 to vector<8x16x128xf32>
    %475 = arith.subf %473, %474 : vector<8x16x128xf32>
    %476 = vector.broadcast %435 : f32 to vector<8x16x128xf32>
    %477 = arith.mulf %475, %476 : vector<8x16x128xf32>
    %c0_373 = arith.constant 0 : index
    %c0_374 = arith.constant 0 : index
    %c0_375 = arith.constant 0 : index
    %478 = vector.load %arg7[%c0_373, %c0_374, %c0_375] : memref<1x1x128xf32, #tpu.memory_space<vmem>>, vector<1x1x128xf32>
    %479 = vector.shape_cast %478 : vector<1x1x128xf32> to vector<128xf32>
    %480 = vector.shape_cast %479 : vector<128xf32> to vector<1x1x128xf32>
    %481 = vector.broadcast %480 : vector<1x1x128xf32> to vector<8x16x128xf32>
    %482 = arith.mulf %477, %481 : vector<8x16x128xf32>
    %c0_376 = arith.constant 0 : index
    %c0_377 = arith.constant 0 : index
    %c0_378 = arith.constant 0 : index
    %483 = vector.load %arg8[%c0_376, %c0_377, %c0_378] : memref<1x1x128xf32, #tpu.memory_space<vmem>>, vector<1x1x128xf32>
    %484 = vector.shape_cast %483 : vector<1x1x128xf32> to vector<128xf32>
    %485 = vector.shape_cast %484 : vector<128xf32> to vector<1x1x128xf32>
    %486 = vector.broadcast %485 : vector<1x1x128xf32> to vector<8x16x128xf32>
    %487 = arith.addf %482, %486 : vector<8x16x128xf32>
    %c0_379 = arith.constant 0 : index
    %c8_380 = arith.constant 8 : index
    %c0_381 = arith.constant 0 : index
    %c0_382 = arith.constant 0 : index
    %488 = vector.load %arg1[%c0_379, %c8_380, %c0_381, %c0_382] : memref<1x16x16x128xf32, #tpu.memory_space<vmem>>, vector<1x8x16x128xf32>
    %489 = vector.shape_cast %488 : vector<1x8x16x128xf32> to vector<8x16x128xf32>
    %490 = arith.addf %489, %487 : vector<8x16x128xf32>
    %491 = vector.shape_cast %490 : vector<8x16x128xf32> to vector<128x128xf32>
    %492 = arith.truncf %491 : vector<128x128xf32> to vector<128x128xbf16>
    %cst_383 = arith.constant dense<0.000000e+00> : vector<128x128xf32>
    %493 = tpu.matmul %492, %436, %cst_383 {dimension_numbers = #tpu.dot_dimension_numbers<[1], [0], [0], [1], [0, 0, 1, 1], [], []>} : vector<128x128xbf16>, vector<128x128xbf16>, vector<128x128xf32> -> vector<128x128xf32>
    %c0_384 = arith.constant 0 : index
    %c0_385 = arith.constant 0 : index
    %494 = vector.load %arg4[%c0_384, %c0_385] : memref<1x128xf32, #tpu.memory_space<vmem>>, vector<1x128xf32>
    %495 = vector.broadcast %494 : vector<1x128xf32> to vector<128x128xf32>
    %496 = arith.addf %493, %495 : vector<128x128xf32>
    %cst_386 = arith.constant 5.000000e-01 : f32
    %497 = vector.broadcast %cst_386 : f32 to vector<128x128xf32>
    %498 = arith.mulf %497, %496 : vector<128x128xf32>
    %cst_387 = arith.constant 0.707106769 : f32
    %499 = vector.broadcast %cst_387 : f32 to vector<128x128xf32>
    %500 = arith.mulf %496, %499 : vector<128x128xf32>
    %501 = math.erf %500 : vector<128x128xf32>
    %cst_388 = arith.constant 1.000000e+00 : f32
    %502 = vector.broadcast %cst_388 : f32 to vector<128x128xf32>
    %503 = arith.addf %502, %501 : vector<128x128xf32>
    %504 = arith.mulf %498, %503 : vector<128x128xf32>
    %505 = vector.shape_cast %504 : vector<128x128xf32> to vector<8x16x128xf32>
    %c0_389 = arith.constant 0 : index
    %c8_390 = arith.constant 8 : index
    %c0_391 = arith.constant 0 : index
    %c0_392 = arith.constant 0 : index
    %506 = vector.load %arg9[%c0_389, %c8_390, %c0_391, %c0_392] : memref<1x16x16x128xf32, #tpu.memory_space<vmem>>, vector<1x8x16x128xf32>
    %507 = vector.shape_cast %506 : vector<1x8x16x128xf32> to vector<8x16x128xf32>
    %508 = vector.shape_cast %505 : vector<8x16x128xf32> to vector<1x8x16x128xf32>
    tpu.vector_store %arg9[%c0_389, %c8_390, %c0_391, %c0_392], %508 {strides = array<i32>} : memref<1x16x16x128xf32, #tpu.memory_space<vmem>>, vector<1x8x16x128xf32>,
    return
  }
  func.func @transform_0(%arg0: i32) -> (i32, i32, i32, i32) {
    %c0_i32 = arith.constant 0 : i32
    %c0_i32_0 = arith.constant 0 : i32
    %c0_i32_1 = arith.constant 0 : i32
    %c0_i32_2 = arith.constant 0 : i32
    return %arg0, %c0_i32, %c0_i32_0, %c0_i32_1 : i32, i32, i32, i32
  }
  func.func @transform_1(%arg0: i32) -> (i32, i32, i32) {
    %c0_i32 = arith.constant 0 : i32
    %c0_i32_0 = arith.constant 0 : i32
    %c0_i32_1 = arith.constant 0 : i32
    %c0_i32_2 = arith.constant 0 : i32
    return %c0_i32, %c0_i32_0, %c0_i32_1 : i32, i32, i32
  }
  func.func @transform_2(%arg0: i32) -> (i32, i32) {
    %c0_i32 = arith.constant 0 : i32
    %c0_i32_0 = arith.constant 0 : i32
    %c0_i32_1 = arith.constant 0 : i32
    return %c0_i32, %c0_i32_0 : i32, i32
  }
  func.func @transform_3(%arg0: i32) -> (i32, i32) {
    %c0_i32 = arith.constant 0 : i32
    %c0_i32_0 = arith.constant 0 : i32
    %c0_i32_1 = arith.constant 0 : i32
    return %c0_i32, %c0_i32_0 : i32, i32
  }
  func.func @transform_4(%arg0: i32) -> (i32, i32, i32) {
    %c0_i32 = arith.constant 0 : i32
    %c0_i32_0 = arith.constant 0 : i32
    %c0_i32_1 = arith.constant 0 : i32
    %c0_i32_2 = arith.constant 0 : i32
    return %c0_i32, %c0_i32_0, %c0_i32_1 : i32, i32, i32
  }
  func.func @transform_5(%arg0: i32) -> (i32, i32, i32) {
    %c0_i32 = arith.constant 0 : i32
    %c0_i32_0 = arith.constant 0 : i32
    %c0_i32_1 = arith.constant 0 : i32
    %c0_i32_2 = arith.constant 0 : i32
    return %c0_i32, %c0_i32_0, %c0_i32_1 : i32, i32, i32
  }
  func.func @transform_6(%arg0: i32) -> (i32, i32, i32) {
    %c0_i32 = arith.constant 0 : i32
    %c0_i32_0 = arith.constant 0 : i32
    %c0_i32_1 = arith.constant 0 : i32
    %c0_i32_2 = arith.constant 0 : i32
    return %c0_i32, %c0_i32_0, %c0_i32_1 : i32, i32, i32
  }
  func.func @transform_7(%arg0: i32) -> (i32, i32, i32) {
    %c0_i32 = arith.constant 0 : i32
    %c0_i32_0 = arith.constant 0 : i32
    %c0_i32_1 = arith.constant 0 : i32
    %c0_i32_2 = arith.constant 0 : i32
    return %c0_i32, %c0_i32_0, %c0_i32_1 : i32, i32, i32
  }
  func.func @transform_8(%arg0: i32) -> (i32, i32, i32, i32) {
    %c0_i32 = arith.constant 0 : i32
    %c0_i32_0 = arith.constant 0 : i32
    %c0_i32_1 = arith.constant 0 : i32
    %c0_i32_2 = arith.constant 0 : i32
    return %arg0, %c0_i32, %c0_i32_0, %c0_i32_1 : i32, i32, i32, i32
  }
}

</mosaic_0001>

<llo_original>
// kernel: tpu_custom_call.1
$region0: #{tpu_custom_call.1}
  #allocation0 [shape = 'u32[]', space=smem, size = 0x4, offset = 0x4, fixed_abs, tag = 'smem constant byte address 0x4 - core index']
  #allocation1 [shape = 'u32[144,128]{1,0:T(1,128)}', space=vmem, size = 0x12000, scoped, tag = 'internal scratch']
  #allocation2 [shape = 'f32[20,20,128]{2,1,0:T(8,128)}', space=vmem, size = 0x3c000, scoped, tag = 'scratch operand']
  #allocation3 [shape = 'f32[16,16,128]{2,1,0:T(8,128)}', space=vmem, size = 0x20000, scoped, tag = 'scratch operand']
  %s0 = inlined_call_operand.hbm [shape: f32[2,16,16,128], index: 0, kind: input, shape index: {}]
  %s1 = inlined_call_operand.hbm [shape: f32[5,5,128], index: 1, kind: input, shape index: {}]
  %s2 = inlined_call_operand.hbm [shape: bf16[128,128], index: 2, kind: input, shape index: {}]
  %s3 = inlined_call_operand.vmem [shape: f32[1,128], index: 3, kind: input, shape index: {}]
  %s4 = inlined_call_operand.vmem [shape: f32[1,1,128], index: 4, kind: input, shape index: {}]
  %s5 = inlined_call_operand.vmem [shape: f32[1,1,128], index: 5, kind: input, shape index: {}]
  %s6 = inlined_call_operand.vmem [shape: f32[1,1,128], index: 6, kind: input, shape index: {}]
  %s7 = inlined_call_operand.vmem [shape: f32[1,1,128], index: 7, kind: input, shape index: {}]
  %s8 = inlined_call_operand.hbm [shape: f32[2,16,16,128], index: 8, kind: output, shape index: {}]
  %s9 = sld [smem:[#allocation0]]
  $region77: #{tpu_custom_call.1} parent=0
    _
  %s11 = ssub.s32 1, %s9
  %s12 = scalar_select 0, %s11, %s9
  $region1: #{tpu_custom_call.1} parent=0
    #allocation4 [shape = 'u8[262144]{0}', space=vmem, size = 0x40000, scoped, tag = 'input window, operand 0']
    #allocation5 [shape = 's32[2]{0}', space=sflag, size = 0x8, scoped, tag = 'scoped memory for tpu_custom_call.1']
    #allocation6 [shape = 's32[2]{0}', space=sflag, size = 0x8, scoped, tag = 'scoped memory for tpu_custom_call.1']
    #allocation7 [shape = 'u8[20480]{0}', space=vmem, size = 0x5000, scoped, tag = 'input window, operand 1, single buffered']
    #allocation8 [shape = 's32[1]{0}', space=sflag, size = 0x4, scoped, tag = 'scoped memory for tpu_custom_call.1']
    #allocation9 [shape = 'u8[32768]{0}', space=vmem, size = 0x8000, scoped, tag = 'input window, operand 2, single buffered']
    #allocation10 [shape = 'u8[262144]{0}', space=vmem, size = 0x40000, scoped, tag = 'output window, operand 0']
    %13 = vsyncpa [#allocation5], 0
    %s14 = scalar_lea.sflag [#allocation5], 1
    %15 = vsyncpa %s14, 0
    %16 = vsyncpa [#allocation8], 0
    %17 = vsyncpa [#allocation6], 0
    %s18 = scalar_lea.sflag [#allocation6], 1
    %19 = vsyncpa %s18, 0
    loop: start=0, step=1, limit=4
    $region2: #{tpu_custom_call.1} parent=1 // loop_pre_header
      _
    $region3: #{tpu_custom_call.1} parent=1 // loop_header
      %s21 = sphi 0, %s25
      %p22 = scmp.ge.s32.totalorder %s21, 4
      %s31 = sphi 0, %s33
      %s34 = sphi 0, %s31
      %s35 = sphi 0, %s34
      %s51 = sphi 0, %s35
      %s55 = sphi 0, %s55
      %s57 = sphi 0, %s55
      %s58 = sphi 0, %s57
      %s72 = sphi 0, %s58
      %s76 = sphi 0, %s76
      %s78 = sphi 0, %s76
      %s79 = sphi 0, %s78
      %s93 = sphi 0, %s79
      %s97 = sphi 0, %s97
      %s99 = sphi 0, %s97
      %s100 = sphi 0, %s99
      %s114 = sphi 0, %s100
      %s118 = sphi 0, %s118
      %s120 = sphi 0, %s118
      %s121 = sphi 0, %s120
      %s135 = sphi 0, %s121
      %s139 = sphi 0, %s139
      %s141 = sphi 0, %s139
      %s142 = sphi 0, %s141
      %s156 = sphi 0, %s142
      %s160 = sphi 0, %s160
      %s162 = sphi 0, %s160
      %s163 = sphi 0, %s162
      %s177 = sphi 0, %s163
      %s181 = sphi 0, %s181
      %s183 = sphi 0, %s181
      %s184 = sphi 0, %s183
      %s198 = sphi 0, %s184
      %s204 = sphi 0, %s206
      %s207 = sphi 0, %s204
      %s208 = sphi 0, %s207
      %s224 = sphi 0, %s208
    $region4: #{tpu_custom_call.1} parent=1 // loop_header_branch
      %24 = sbr.rel (%p22) target = $region8
    $region5: #{tpu_custom_call.1} parent=1 // loop_body
      %s26 = ssub.s32 %s21, 1
      %s27 = ssub.s32 %s21, 2
      %s28 = sadd.s32 %s21, 1
      %s29 = ssub.s32 %s21, %s28
      %p30 = scmp.eq.s32.totalorder %s29, 0
      %s32 = sadd.s32 %s31, 1
      %s33 = scalar_select %p30, %s31, %s32
      %p36 = pneg %p30
      %p37 = scmp.eq.s32.totalorder %s21, 1
      %p38 = por %p36, %p37
      %p39 = scmp.ne.s32.totalorder %s31, %s34
      %p40 = scmp.eq.s32.totalorder %s21, 0
      %p41 = por %p39, %p40
      %p42 = scmp.ne.s32.totalorder %s31, %s34
      %p43 = scmp.eq.s32.totalorder %s26, 1
      %p44 = por %p42, %p43
      %p45 = scmp.ne.s32.totalorder %s34, %s35
      %p46 = scmp.eq.s32.totalorder %s26, 0
      %p47 = por %p45, %p46
      %p48 = scmp.ne.s32.totalorder %s34, %s35
      %p49 = scmp.eq.s32.totalorder %s27, 1
      %p50 = por %p48, %p49
      %p52 = scmp.ne.s32.totalorder %s35, %s51
      %p53 = scmp.eq.s32.totalorder %s27, 0
      %p54 = por %p52, %p53
      %s56 = sadd.s32 %s55, 1
      %p59 = scmp.eq.s32.totalorder %s21, 1
      %p60 = scmp.ne.s32.totalorder %s55, %s57
      %p61 = scmp.eq.s32.totalorder %s21, 0
      %p62 = por %p60, %p61
      %p63 = scmp.ne.s32.totalorder %s55, %s57
      %p64 = scmp.eq.s32.totalorder %s26, 1
      %p65 = por %p63, %p64
      %p66 = scmp.ne.s32.totalorder %s57, %s58
      %p67 = scmp.eq.s32.totalorder %s26, 0
      %p68 = por %p66, %p67
      %p69 = scmp.ne.s32.totalorder %s57, %s58
      %p70 = scmp.eq.s32.totalorder %s27, 1
      %p71 = por %p69, %p70
      %p73 = scmp.ne.s32.totalorder %s58, %s72
      %p74 = scmp.eq.s32.totalorder %s27, 0
      %p75 = por %p73, %p74
      %s77 = sadd.s32 %s76, 1
      %p80 = scmp.eq.s32.totalorder %s21, 1
      %p81 = scmp.ne.s32.totalorder %s76, %s78
      %p82 = scmp.eq.s32.totalorder %s21, 0
      %p83 = por %p81, %p82
      %p84 = scmp.ne.s32.totalorder %s76, %s78
      %p85 = scmp.eq.s32.totalorder %s26, 1
      %p86 = por %p84, %p85
      %p87 = scmp.ne.s32.totalorder %s78, %s79
      %p88 = scmp.eq.s32.totalorder %s26, 0
      %p89 = por %p87, %p88
      %p90 = scmp.ne.s32.totalorder %s78, %s79
      %p91 = scmp.eq.s32.totalorder %s27, 1
      %p92 = por %p90, %p91
      %p94 = scmp.ne.s32.totalorder %s79, %s93
      %p95 = scmp.eq.s32.totalorder %s27, 0
      %p96 = por %p94, %p95
      %s98 = sadd.s32 %s97, 1
      %p101 = scmp.eq.s32.totalorder %s21, 1
      %p102 = scmp.ne.s32.totalorder %s97, %s99
      %p103 = scmp.eq.s32.totalorder %s21, 0
      %p104 = por %p102, %p103
      %p105 = scmp.ne.s32.totalorder %s97, %s99
      %p106 = scmp.eq.s32.totalorder %s26, 1
      %p107 = por %p105, %p106
      %p108 = scmp.ne.s32.totalorder %s99, %s100
      %p109 = scmp.eq.s32.totalorder %s26, 0
      %p110 = por %p108, %p109
      %p111 = scmp.ne.s32.totalorder %s99, %s100
      %p112 = scmp.eq.s32.totalorder %s27, 1
      %p113 = por %p111, %p112
      %p115 = scmp.ne.s32.totalorder %s100, %s114
      %p116 = scmp.eq.s32.totalorder %s27, 0
      %p117 = por %p115, %p116
      %s119 = sadd.s32 %s118, 1
      %p122 = scmp.eq.s32.totalorder %s21, 1
      %p123 = scmp.ne.s32.totalorder %s118, %s120
      %p124 = scmp.eq.s32.totalorder %s21, 0
      %p125 = por %p123, %p124
      %p126 = scmp.ne.s32.totalorder %s118, %s120
      %p127 = scmp.eq.s32.totalorder %s26, 1
      %p128 = por %p126, %p127
      %p129 = scmp.ne.s32.totalorder %s120, %s121
      %p130 = scmp.eq.s32.totalorder %s26, 0
      %p131 = por %p129, %p130
      %p132 = scmp.ne.s32.totalorder %s120, %s121
      %p133 = scmp.eq.s32.totalorder %s27, 1
      %p134 = por %p132, %p133
      %p136 = scmp.ne.s32.totalorder %s121, %s135
      %p137 = scmp.eq.s32.totalorder %s27, 0
      %p138 = por %p136, %p137
      %s140 = sadd.s32 %s139, 1
      %p143 = scmp.eq.s32.totalorder %s21, 1
      %p144 = scmp.ne.s32.totalorder %s139, %s141
      %p145 = scmp.eq.s32.totalorder %s21, 0
      %p146 = por %p144, %p145
      %p147 = scmp.ne.s32.totalorder %s139, %s141
      %p148 = scmp.eq.s32.totalorder %s26, 1
      %p149 = por %p147, %p148
      %p150 = scmp.ne.s32.totalorder %s141, %s142
      %p151 = scmp.eq.s32.totalorder %s26, 0
      %p152 = por %p150, %p151
      %p153 = scmp.ne.s32.totalorder %s141, %s142
      %p154 = scmp.eq.s32.totalorder %s27, 1
      %p155 = por %p153, %p154
      %p157 = scmp.ne.s32.totalorder %s142, %s156
      %p158 = scmp.eq.s32.totalorder %s27, 0
      %p159 = por %p157, %p158
      %s161 = sadd.s32 %s160, 1
      %p164 = scmp.eq.s32.totalorder %s21, 1
      %p165 = scmp.ne.s32.totalorder %s160, %s162
      %p166 = scmp.eq.s32.totalorder %s21, 0
      %p167 = por %p165, %p166
      %p168 = scmp.ne.s32.totalorder %s160, %s162
      %p169 = scmp.eq.s32.totalorder %s26, 1
      %p170 = por %p168, %p169
      %p171 = scmp.ne.s32.totalorder %s162, %s163
      %p172 = scmp.eq.s32.totalorder %s26, 0
      %p173 = por %p171, %p172
      %p174 = scmp.ne.s32.totalorder %s162, %s163
      %p175 = scmp.eq.s32.totalorder %s27, 1
      %p176 = por %p174, %p175
      %p178 = scmp.ne.s32.totalorder %s163, %s177
      %p179 = scmp.eq.s32.totalorder %s27, 0
      %p180 = por %p178, %p179
      %s182 = sadd.s32 %s181, 1
      %p185 = scmp.eq.s32.totalorder %s21, 1
      %p186 = scmp.ne.s32.totalorder %s181, %s183
      %p187 = scmp.eq.s32.totalorder %s21, 0
      %p188 = por %p186, %p187
      %p189 = scmp.ne.s32.totalorder %s181, %s183
      %p190 = scmp.eq.s32.totalorder %s26, 1
      %p191 = por %p189, %p190
      %p192 = scmp.ne.s32.totalorder %s183, %s184
      %p193 = scmp.eq.s32.totalorder %s26, 0
      %p194 = por %p192, %p193
      %p195 = scmp.ne.s32.totalorder %s183, %s184
      %p196 = scmp.eq.s32.totalorder %s27, 1
      %p197 = por %p195, %p196
      %p199 = scmp.ne.s32.totalorder %s184, %s198
      %p200 = scmp.eq.s32.totalorder %s27, 0
      %p201 = por %p199, %p200
      %s202 = ssub.s32 %s21, %s28
      %p203 = scmp.eq.s32.totalorder %s202, 0
      %s205 = sadd.s32 %s204, 1
      %s206 = scalar_select %p203, %s204, %s205
      %p209 = pneg %p203
      %p210 = scmp.eq.s32.totalorder %s21, 1
      %p211 = por %p209, %p210
      %p212 = scmp.ne.s32.totalorder %s204, %s207
      %p213 = scmp.eq.s32.totalorder %s21, 0
      %p214 = por %p212, %p213
      %p215 = scmp.ne.s32.totalorder %s204, %s207
      %p216 = scmp.eq.s32.totalorder %s26, 1
      %p217 = por %p215, %p216
      %p218 = scmp.ne.s32.totalorder %s207, %s208
      %p219 = scmp.eq.s32.totalorder %s26, 0
      %p220 = por %p218, %p219
      %p221 = scmp.ne.s32.totalorder %s207, %s208
      %p222 = scmp.eq.s32.totalorder %s27, 1
      %p223 = por %p221, %p222
      %p225 = scmp.ne.s32.totalorder %s208, %s224
      %p226 = scmp.eq.s32.totalorder %s27, 0
      %p227 = por %p225, %p226
      %p228 = scmp.le.s32.totalorder 1, %s21
      %p229 = scmp.lt.s32.totalorder %s21, 3
      %p230 = pnand %p228, %p229
      %p231 = pneg %p230
      // Predicated region
      $region9: #{tpu_custom_call.1} parent=5 // pred_check
        _
      $region10: #{tpu_custom_call.1} parent=5 // pred_check_branch
        %233 = sbr.rel (%p230) target = $region12
      $region11: #{tpu_custom_call.1} parent=5 // pred_region
        %s234 = ssub.s32 %s21, 1
        // Predicated region
        $region13: #{tpu_custom_call.1} parent=11 // pred_check
          %p235 = pneg %p68
        $region14: #{tpu_custom_call.1} parent=11 // pred_check_branch
          %237 = sbr.rel (%p235) target = $region16
        $region15: #{tpu_custom_call.1} parent=11 // pred_region
          %s239 = ssub.s32 640, 640
          %240 = vsyncadd [#allocation8], %s239
          %s241 = sshll.u32 [#allocation7], 4
          %s242 = int_to_ptr.vmem [resolvable:$true] %s241
          %247 = dma.hbm_to_vmem [thread:$0]  %s1, 640, %s242, [#allocation8], 128, 128, 8
        $region16: #{tpu_custom_call.1} parent=11 // pred_fallthru
          _
        // Predicated region
        $region17: #{tpu_custom_call.1} parent=11 // pred_check
          %p248 = pneg %p89
        $region18: #{tpu_custom_call.1} parent=11 // pred_check_branch
          %250 = sbr.rel (%p248) target = $region20
        $region19: #{tpu_custom_call.1} parent=11 // pred_region
          %s252 = ssub.s32 1024, 1024
          %253 = vsyncadd [#allocation8], %s252
          %s254 = sshll.u32 [#allocation9], 4
          %s255 = int_to_ptr.vmem [resolvable:$true] %s254
          %260 = dma.hbm_to_vmem [thread:$0]  %s2, 1024, %s255, [#allocation8], 64, 64, 4
        $region20: #{tpu_custom_call.1} parent=11 // pred_fallthru
          _
        // Predicated region
        $region21: #{tpu_custom_call.1} parent=11 // pred_check
          %p261 = pneg %p110
        $region22: #{tpu_custom_call.1} parent=11 // pred_check_branch
          %263 = sbr.rel (%p261) target = $region24
        $region23: #{tpu_custom_call.1} parent=11 // pred_region
          _
        $region24: #{tpu_custom_call.1} parent=11 // pred_fallthru
          _
        // Predicated region
        $region25: #{tpu_custom_call.1} parent=11 // pred_check
          %p264 = pneg %p131
        $region26: #{tpu_custom_call.1} parent=11 // pred_check_branch
          %266 = sbr.rel (%p264) target = $region28
        $region27: #{tpu_custom_call.1} parent=11 // pred_region
          _
        $region28: #{tpu_custom_call.1} parent=11 // pred_fallthru
          _
        // Predicated region
        $region29: #{tpu_custom_call.1} parent=11 // pred_check
          %p267 = pneg %p152
        $region30: #{tpu_custom_call.1} parent=11 // pred_check_branch
          %269 = sbr.rel (%p267) target = $region32
        $region31: #{tpu_custom_call.1} parent=11 // pred_region
          _
        $region32: #{tpu_custom_call.1} parent=11 // pred_fallthru
          _
        // Predicated region
        $region33: #{tpu_custom_call.1} parent=11 // pred_check
          %p270 = pneg %p173
        $region34: #{tpu_custom_call.1} parent=11 // pred_check_branch
          %272 = sbr.rel (%p270) target = $region36
        $region35: #{tpu_custom_call.1} parent=11 // pred_region
          _
        $region36: #{tpu_custom_call.1} parent=11 // pred_fallthru
          _
        // Predicated region
        $region37: #{tpu_custom_call.1} parent=11 // pred_check
          %p273 = pneg %p194
        $region38: #{tpu_custom_call.1} parent=11 // pred_check_branch
          %275 = sbr.rel (%p273) target = $region40
        $region39: #{tpu_custom_call.1} parent=11 // pred_region
          _
        $region40: #{tpu_custom_call.1} parent=11 // pred_fallthru
          _
      $region12: #{tpu_custom_call.1} parent=5 // pred_fallthru
        _
      %p276 = scmp.lt.s32.totalorder %s21, 2
      // Predicated region
      $region41: #{tpu_custom_call.1} parent=5 // pred_check
        %p277 = pneg %p276
      $region42: #{tpu_custom_call.1} parent=5 // pred_check_branch
        %279 = sbr.rel (%p277) target = $region44
      $region43: #{tpu_custom_call.1} parent=5 // pred_region
        // Predicated region
        $region45: #{tpu_custom_call.1} parent=43 // pred_check
          %p280 = pneg %p41
        $region46: #{tpu_custom_call.1} parent=43 // pred_check_branch
          %282 = sbr.rel (%p280) target = $region48
        $region47: #{tpu_custom_call.1} parent=43 // pred_region
          %s283 = sand.u32 %s31, 1
          %s284 = scalar_lea.sflag [#allocation5], %s283
          %s285 = sand.u32 %s31, 1
          %s286 = smul.addr %s285, 256
          %s287 = scalar_lea.vmem [#allocation4], %s286
          %s289 = ssub.s32 4096, 4096
          %290 = vsyncadd %s284, %s289
          %s291 = smul.addr %s21, 32
          %s292 = smul.addr %s291, 128
          %s293 = scalar_lea.hbm %s0, %s292
          %s294 = sshll.u32 %s287, 4
          %s295 = int_to_ptr.vmem [resolvable:$true] %s294
          %300 = dma.hbm_to_vmem [thread:$0]  %s293, 4096, %s295, %s284, 128, 128, 8
        $region48: #{tpu_custom_call.1} parent=43 // pred_fallthru
          _
      $region44: #{tpu_custom_call.1} parent=5 // pred_fallthru
        _
      %p301 = scmp.le.s32.totalorder 1, %s21
      %p302 = scmp.lt.s32.totalorder %s21, 3
      %p303 = pnand %p301, %p302
      %p304 = pneg %p303
      // Predicated region
      $region49: #{tpu_custom_call.1} parent=5 // pred_check
        _
      $region50: #{tpu_custom_call.1} parent=5 // pred_check_branch
        %306 = sbr.rel (%p303) target = $region52
      $region51: #{tpu_custom_call.1} parent=5 // pred_region
        %s307 = ssub.s32 %s21, 1
        %s308 = sand.u32 %s34, 1
        %s309 = scalar_lea.sflag [#allocation5], %s308
        %s310 = sand.u32 %s34, 1
        %s311 = smul.addr %s310, 256
        %s312 = scalar_lea.vmem [#allocation4], %s311
        // Predicated region
        $region53: #{tpu_custom_call.1} parent=51 // pred_check
          %p313 = pneg %p47
        $region54: #{tpu_custom_call.1} parent=51 // pred_check_branch
          %315 = sbr.rel (%p313) target = $region56
        $region55: #{tpu_custom_call.1} parent=51 // pred_region
          %316 = dma.done %s309, 4096
        $region56: #{tpu_custom_call.1} parent=51 // pred_fallthru
          _
        // Predicated region
        $region57: #{tpu_custom_call.1} parent=51 // pred_check
          %p317 = pneg %p68
        $region58: #{tpu_custom_call.1} parent=51 // pred_check_branch
          %319 = sbr.rel (%p317) target = $region60
        $region59: #{tpu_custom_call.1} parent=51 // pred_region
          %320 = dma.done [#allocation8], 640
        $region60: #{tpu_custom_call.1} parent=51 // pred_fallthru
          _
        // Predicated region
        $region61: #{tpu_custom_call.1} parent=51 // pred_check
          %p321 = pneg %p89
        $region62: #{tpu_custom_call.1} parent=51 // pred_check_branch
          %323 = sbr.rel (%p321) target = $region64
        $region63: #{tpu_custom_call.1} parent=51 // pred_region
          %324 = dma.done [#allocation8], 1024
        $region64: #{tpu_custom_call.1} parent=51 // pred_fallthru
          _
        %s325 = sand.u32 %s34, 1
        %s326 = scalar_lea.sflag [#allocation5], %s325
        %s327 = sand.u32 %s34, 1
        %s328 = smul.addr %s327, 256
        %s329 = scalar_lea.vmem [#allocation4], %s328
        %p330 = pneg %p47
        %p331 = pneg %p44
        %p332 = pneg %p68
        %p333 = pneg %p65
        %p334 = pneg %p89
        %p335 = pneg %p86
        %p336 = pneg %p110
        %p337 = pneg %p107
        %p338 = pneg %p131
        %p339 = pneg %p128
        %p340 = pneg %p152
        %p341 = pneg %p149
        %p342 = pneg %p173
        %p343 = pneg %p170
        %p344 = pneg %p194
        %p345 = pneg %p191
        %p346 = pneg %p220
        %p347 = pneg %p217
        %s348 = sand.u32 %s207, 1
        %s349 = scalar_lea.sflag [#allocation6], %s348
        %s350 = sand.u32 %s207, 1
        %s351 = smul.addr %s350, 256
        %s352 = scalar_lea.vmem [#allocation10], %s351
        %354 = vst [vmem:[#allocation2] sm:$0xff] 0.0
        %355 = vst [vmem:[#allocation2 + $0x8] sm:$0xff] 0.0
        %356 = vst [vmem:[#allocation2 + $0x10] sm:$0xf] 0.0
        %357 = vst [vmem:[#allocation2 + $0x18] sm:$0xff] 0.0
        %358 = vst [vmem:[#allocation2 + $0x20] sm:$0xff] 0.0
        %359 = vst [vmem:[#allocation2 + $0x28] sm:$0xf] 0.0
        %s360 = scalar_lea.vmem [#allocation2], 432
        %361 = vst [vmem:[%s360] sm:$0xff] 0.0
        %362 = vst [vmem:[%s360 + $0x8] sm:$0xff] 0.0
        %363 = vst [vmem:[%s360 + $0x10] sm:$0xf] 0.0
        %364 = vst [vmem:[%s360 + $0x18] sm:$0xff] 0.0
        %365 = vst [vmem:[%s360 + $0x20] sm:$0xff] 0.0
        %366 = vst [vmem:[%s360 + $0x28] sm:$0xf] 0.0
        %s367 = scalar_lea.vmem [#allocation2], 48
        %368 = vst [vmem:[%s367] sm:$0x3] 0.0
        %369 = vst [vmem:[%s367 + $0x18] sm:$0x3] 0.0
        %370 = vst [vmem:[%s367 + $0x30] sm:$0x3] 0.0
        %371 = vst [vmem:[%s367 + $0x48] sm:$0x3] 0.0
        %372 = vst [vmem:[%s367 + $0x60] sm:$0x3] 0.0
        %373 = vst [vmem:[%s367 + $0x78] sm:$0x3] 0.0
        %374 = vst [vmem:[%s367 + $0x90] sm:$0x3] 0.0
        %375 = vst [vmem:[%s367 + $0xa8] sm:$0x3] 0.0
        %376 = vst [vmem:[%s367 + $0xc0] sm:$0x3] 0.0
        %377 = vst [vmem:[%s367 + $0xd8] sm:$0x3] 0.0
        %378 = vst [vmem:[%s367 + $0xf0] sm:$0x3] 0.0
        %379 = vst [vmem:[%s367 + $0x108] sm:$0x3] 0.0
        %380 = vst [vmem:[%s367 + $0x120] sm:$0x3] 0.0
        %381 = vst [vmem:[%s367 + $0x138] sm:$0x3] 0.0
        %382 = vst [vmem:[%s367 + $0x150] sm:$0x3] 0.0
        %383 = vst [vmem:[%s367 + $0x168] sm:$0x3] 0.0
        %384 = vst [vmem:[%s367 + $0x12] sm:$0x3] 0.0
        %385 = vst [vmem:[%s367 + $0x2a] sm:$0x3] 0.0
        %386 = vst [vmem:[%s367 + $0x42] sm:$0x3] 0.0
        %387 = vst [vmem:[%s367 + $0x5a] sm:$0x3] 0.0
        %388 = vst [vmem:[%s367 + $0x72] sm:$0x3] 0.0
        %389 = vst [vmem:[%s367 + $0x8a] sm:$0x3] 0.0
        %390 = vst [vmem:[%s367 + $0xa2] sm:$0x3] 0.0
        %391 = vst [vmem:[%s367 + $0xba] sm:$0x3] 0.0
        %392 = vst [vmem:[%s367 + $0xd2] sm:$0x3] 0.0
        %393 = vst [vmem:[%s367 + $0xea] sm:$0x3] 0.0
        %394 = vst [vmem:[%s367 + $0x102] sm:$0x3] 0.0
        %395 = vst [vmem:[%s367 + $0x11a] sm:$0x3] 0.0
        %396 = vst [vmem:[%s367 + $0x132] sm:$0x3] 0.0
        %397 = vst [vmem:[%s367 + $0x14a] sm:$0x3] 0.0
        %398 = vst [vmem:[%s367 + $0x162] sm:$0x3] 0.0
        %399 = vst [vmem:[%s367 + $0x17a] sm:$0x3] 0.0
        %v400 = vld [vmem:[%s312] sm:$0xff]
        %v401 = vld [vmem:[%s312 + $0x8] sm:$0xff]
        %v402 = vld [vmem:[%s312 + $0x10] sm:$0xff]
        %v403 = vld [vmem:[%s312 + $0x18] sm:$0xff]
        %v404 = vld [vmem:[%s312 + $0x20] sm:$0xff]
        %v405 = vld [vmem:[%s312 + $0x28] sm:$0xff]
        %v406 = vld [vmem:[%s312 + $0x30] sm:$0xff]
        %v407 = vld [vmem:[%s312 + $0x38] sm:$0xff]
        %v408 = vld [vmem:[%s312 + $0x40] sm:$0xff]
        %v409 = vld [vmem:[%s312 + $0x48] sm:$0xff]
        %v410 = vld [vmem:[%s312 + $0x50] sm:$0xff]
        %v411 = vld [vmem:[%s312 + $0x58] sm:$0xff]
        %v412 = vld [vmem:[%s312 + $0x60] sm:$0xff]
        %v413 = vld [vmem:[%s312 + $0x68] sm:$0xff]
        %v414 = vld [vmem:[%s312 + $0x70] sm:$0xff]
        %v415 = vld [vmem:[%s312 + $0x78] sm:$0xff]
        %v416 = vld [vmem:[%s312 + $0x80] sm:$0xff]
        %v417 = vld [vmem:[%s312 + $0x88] sm:$0xff]
        %v418 = vld [vmem:[%s312 + $0x90] sm:$0xff]
        %v419 = vld [vmem:[%s312 + $0x98] sm:$0xff]
        %v420 = vld [vmem:[%s312 + $0xa0] sm:$0xff]
        %v421 = vld [vmem:[%s312 + $0xa8] sm:$0xff]
        %v422 = vld [vmem:[%s312 + $0xb0] sm:$0xff]
        %v423 = vld [vmem:[%s312 + $0xb8] sm:$0xff]
        %v424 = vld [vmem:[%s312 + $0xc0] sm:$0xff]
        %v425 = vld [vmem:[%s312 + $0xc8] sm:$0xff]
        %v426 = vld [vmem:[%s312 + $0xd0] sm:$0xff]
        %v427 = vld [vmem:[%s312 + $0xd8] sm:$0xff]
        %v428 = vld [vmem:[%s312 + $0xe0] sm:$0xff]
        %v429 = vld [vmem:[%s312 + $0xe8] sm:$0xff]
        %v430 = vld [vmem:[%s312 + $0xf0] sm:$0xff]
        %v431 = vld [vmem:[%s312 + $0xf8] sm:$0xff]
        %v432 = vadd.f32 %v400, %v401
        %v433 = vadd.f32 %v432, %v402
        %v434 = vadd.f32 %v433, %v403
        %v435 = vadd.f32 %v434, %v404
        %v436 = vadd.f32 %v435, %v405
        %v437 = vadd.f32 %v436, %v406
        %v438 = vadd.f32 %v437, %v407
        %v439 = vadd.f32 %v438, %v408
        %v440 = vadd.f32 %v439, %v409
        %v441 = vadd.f32 %v440, %v410
        %v442 = vadd.f32 %v441, %v411
        %v443 = vadd.f32 %v442, %v412
        %v444 = vadd.f32 %v443, %v413
        %v445 = vadd.f32 %v444, %v414
        %v446 = vadd.f32 %v445, %v415
        %v447 = vadd.f32 %v446, %v416
        %v448 = vadd.f32 %v447, %v417
        %v449 = vadd.f32 %v448, %v418
        %v450 = vadd.f32 %v449, %v419
        %v451 = vadd.f32 %v450, %v420
        %v452 = vadd.f32 %v451, %v421
        %v453 = vadd.f32 %v452, %v422
        %v454 = vadd.f32 %v453, %v423
        %v455 = vadd.f32 %v454, %v424
        %v456 = vadd.f32 %v455, %v425
        %v457 = vadd.f32 %v456, %v426
        %v458 = vadd.f32 %v457, %v427
        %v459 = vadd.f32 %v458, %v428
        %v460 = vadd.f32 %v459, %v429
        %v461 = vadd.f32 %v460, %v430
        %v462 = vadd.f32 %v461, %v431
        %463 = vadd.xlane.f32.xlu0 %v462
        %v464 = vpop.xlane.xlu0 %463
        %v465 = vrot.slane %v464, 4
        %v466 = vadd.f32 %v464, %v465
        %v467 = vrot.slane %v466, 2
        %v468 = vadd.f32 %v466, %v467
        %v469 = vrot.slane %v468, 1
        %v470 = vadd.f32 %v468, %v469
        %s471 = vtos %v470
        %v472 = vmul.f32 %v400, %v400
        %v473 = vmul.f32 %v401, %v401
        %v474 = vmul.f32 %v402, %v402
        %v475 = vmul.f32 %v403, %v403
        %v476 = vmul.f32 %v404, %v404
        %v477 = vmul.f32 %v405, %v405
        %v478 = vmul.f32 %v406, %v406
        %v479 = vmul.f32 %v407, %v407
        %v480 = vmul.f32 %v408, %v408
        %v481 = vmul.f32 %v409, %v409
        %v482 = vmul.f32 %v410, %v410
        %v483 = vmul.f32 %v411, %v411
        %v484 = vmul.f32 %v412, %v412
        %v485 = vmul.f32 %v413, %v413
        %v486 = vmul.f32 %v414, %v414
        %v487 = vmul.f32 %v415, %v415
        %v488 = vmul.f32 %v416, %v416
        %v489 = vmul.f32 %v417, %v417
        %v490 = vmul.f32 %v418, %v418
        %v491 = vmul.f32 %v419, %v419
        %v492 = vmul.f32 %v420, %v420
        %v493 = vmul.f32 %v421, %v421
        %v494 = vmul.f32 %v422, %v422
        %v495 = vmul.f32 %v423, %v423
        %v496 = vmul.f32 %v424, %v424
        %v497 = vmul.f32 %v425, %v425
        %v498 = vmul.f32 %v426, %v426
        %v499 = vmul.f32 %v427, %v427
        %v500 = vmul.f32 %v428, %v428
        %v501 = vmul.f32 %v429, %v429
        %v502 = vmul.f32 %v430, %v430
        %v503 = vmul.f32 %v431, %v431
        %v504 = vadd.f32 %v472, %v473
        %v505 = vadd.f32 %v504, %v474
        %v506 = vadd.f32 %v505, %v475
        %v507 = vadd.f32 %v506, %v476
        %v508 = vadd.f32 %v507, %v477
        %v509 = vadd.f32 %v508, %v478
        %v510 = vadd.f32 %v509, %v479
        %v511 = vadd.f32 %v510, %v480
        %v512 = vadd.f32 %v511, %v481
        %v513 = vadd.f32 %v512, %v482
        %v514 = vadd.f32 %v513, %v483
        %v515 = vadd.f32 %v514, %v484
        %v516 = vadd.f32 %v515, %v485
        %v517 = vadd.f32 %v516, %v486
        %v518 = vadd.f32 %v517, %v487
        %v519 = vadd.f32 %v518, %v488
        %v520 = vadd.f32 %v519, %v489
        %v521 = vadd.f32 %v520, %v490
        %v522 = vadd.f32 %v521, %v491
        %v523 = vadd.f32 %v522, %v492
        %v524 = vadd.f32 %v523, %v493
        %v525 = vadd.f32 %v524, %v494
        %v526 = vadd.f32 %v525, %v495
        %v527 = vadd.f32 %v526, %v496
        %v528 = vadd.f32 %v527, %v497
        %v529 = vadd.f32 %v528, %v498
        %v530 = vadd.f32 %v529, %v499
        %v531 = vadd.f32 %v530, %v500
        %v532 = vadd.f32 %v531, %v501
        %v533 = vadd.f32 %v532, %v502
        %v534 = vadd.f32 %v533, %v503
        %535 = vadd.xlane.f32.xlu0 %v534
        %v536 = vpop.xlane.xlu0 %535
        %v537 = vrot.slane %v536, 4
        %v538 = vadd.f32 %v536, %v537
        %v539 = vrot.slane %v538, 2
        %v540 = vadd.f32 %v538, %v539
        %v541 = vrot.slane %v540, 1
        %v542 = vadd.f32 %v540, %v541
        %s543 = vtos %v542
        %s544 = smul.f32 %s471, 0.00048828125
        %s545 = smul.f32 %s543, 0.00048828125
        %s546 = smul.f32 %s544, %s544
        %s547 = ssub.f32 %s545, %s546
        %s548 = smax.f32 %s547, 0.0
        %s549 = sadd.f32 %s548, 1e-05
        %v550 = vstv %s549
        %v551 = vrsqrt.pop %v550
        %s552 = vtos %v551
        %v553 = vstv %s544
        %v554 = vsub.f32 %v400, %v553
        %v555 = vsub.f32 %v401, %v553
        %v556 = vsub.f32 %v402, %v553
        %v557 = vsub.f32 %v403, %v553
        %v558 = vsub.f32 %v404, %v553
        %v559 = vsub.f32 %v405, %v553
        %v560 = vsub.f32 %v406, %v553
        %v561 = vsub.f32 %v407, %v553
        %v562 = vsub.f32 %v408, %v553
        %v563 = vsub.f32 %v409, %v553
        %v564 = vsub.f32 %v410, %v553
        %v565 = vsub.f32 %v411, %v553
        %v566 = vsub.f32 %v412, %v553
        %v567 = vsub.f32 %v413, %v553
        %v568 = vsub.f32 %v414, %v553
        %v569 = vsub.f32 %v415, %v553
        %v570 = vsub.f32 %v416, %v553
        %v571 = vsub.f32 %v417, %v553
        %v572 = vsub.f32 %v418, %v553
        %v573 = vsub.f32 %v419, %v553
        %v574 = vsub.f32 %v420, %v553
        %v575 = vsub.f32 %v421, %v553
        %v576 = vsub.f32 %v422, %v553
        %v577 = vsub.f32 %v423, %v553
        %v578 = vsub.f32 %v424, %v553
        %v579 = vsub.f32 %v425, %v553
        %v580 = vsub.f32 %v426, %v553
        %v581 = vsub.f32 %v427, %v553
        %v582 = vsub.f32 %v428, %v553
        %v583 = vsub.f32 %v429, %v553
        %v584 = vsub.f32 %v430, %v553
        %v585 = vsub.f32 %v431, %v553
        %v586 = vstv %s552
        %v587 = vmul.f32 %v554, %v586
        %v588 = vmul.f32 %v555, %v586
        %v589 = vmul.f32 %v556, %v586
        %v590 = vmul.f32 %v557, %v586
        %v591 = vmul.f32 %v558, %v586
        %v592 = vmul.f32 %v559, %v586
        %v593 = vmul.f32 %v560, %v586
        %v594 = vmul.f32 %v561, %v586
        %v595 = vmul.f32 %v562, %v586
        %v596 = vmul.f32 %v563, %v586
        %v597 = vmul.f32 %v564, %v586
        %v598 = vmul.f32 %v565, %v586
        %v599 = vmul.f32 %v566, %v586
        %v600 = vmul.f32 %v567, %v586
        %v601 = vmul.f32 %v568, %v586
        %v602 = vmul.f32 %v569, %v586
        %v603 = vmul.f32 %v570, %v586
        %v604 = vmul.f32 %v571, %v586
        %v605 = vmul.f32 %v572, %v586
        %v606 = vmul.f32 %v573, %v586
        %v607 = vmul.f32 %v574, %v586
        %v608 = vmul.f32 %v575, %v586
        %v609 = vmul.f32 %v576, %v586
        %v610 = vmul.f32 %v577, %v586
        %v611 = vmul.f32 %v578, %v586
        %v612 = vmul.f32 %v579, %v586
        %v613 = vmul.f32 %v580, %v586
        %v614 = vmul.f32 %v581, %v586
        %v615 = vmul.f32 %v582, %v586
        %v616 = vmul.f32 %v583, %v586
        %v617 = vmul.f32 %v584, %v586
        %v618 = vmul.f32 %v585, %v586
        %v619 = vld [vmem:[%s4] sm:$0x1]
        %v621 = vlaneseq
        %v622 = vshrl.u32 %v621, 7
        %v623 = vsub.s32 0, %v622
        %v624 = vrot.slane %v619, %v623
        %v626 = vmul.f32 %v587, %v624
        %v627 = vmul.f32 %v588, %v624
        %v628 = vmul.f32 %v589, %v624
        %v629 = vmul.f32 %v590, %v624
        %v630 = vmul.f32 %v591, %v624
        %v631 = vmul.f32 %v592, %v624
        %v632 = vmul.f32 %v593, %v624
        %v633 = vmul.f32 %v594, %v624
        %v634 = vmul.f32 %v595, %v624
        %v635 = vmul.f32 %v596, %v624
        %v636 = vmul.f32 %v597, %v624
        %v637 = vmul.f32 %v598, %v624
        %v638 = vmul.f32 %v599, %v624
        %v639 = vmul.f32 %v600, %v624
        %v640 = vmul.f32 %v601, %v624
        %v641 = vmul.f32 %v602, %v624
        %v642 = vmul.f32 %v603, %v624
        %v643 = vmul.f32 %v604, %v624
        %v644 = vmul.f32 %v605, %v624
        %v645 = vmul.f32 %v606, %v624
        %v646 = vmul.f32 %v607, %v624
        %v647 = vmul.f32 %v608, %v624
        %v648 = vmul.f32 %v609, %v624
        %v649 = vmul.f32 %v610, %v624
        %v650 = vmul.f32 %v611, %v624
        %v651 = vmul.f32 %v612, %v624
        %v652 = vmul.f32 %v613, %v624
        %v653 = vmul.f32 %v614, %v624
        %v654 = vmul.f32 %v615, %v624
        %v655 = vmul.f32 %v616, %v624
        %v656 = vmul.f32 %v617, %v624
        %v657 = vmul.f32 %v618, %v624
        %v658 = vld [vmem:[%s5] sm:$0x1]
        %v660 = vlaneseq
        %v661 = vshrl.u32 %v660, 7
        %v662 = vsub.s32 0, %v661
        %v663 = vrot.slane %v658, %v662
        %v665 = vadd.f32 %v626, %v663
        %v666 = vadd.f32 %v627, %v663
        %v667 = vadd.f32 %v628, %v663
        %v668 = vadd.f32 %v629, %v663
        %v669 = vadd.f32 %v630, %v663
        %v670 = vadd.f32 %v631, %v663
        %v671 = vadd.f32 %v632, %v663
        %v672 = vadd.f32 %v633, %v663
        %v673 = vadd.f32 %v634, %v663
        %v674 = vadd.f32 %v635, %v663
        %v675 = vadd.f32 %v636, %v663
        %v676 = vadd.f32 %v637, %v663
        %v677 = vadd.f32 %v638, %v663
        %v678 = vadd.f32 %v639, %v663
        %v679 = vadd.f32 %v640, %v663
        %v680 = vadd.f32 %v641, %v663
        %v681 = vadd.f32 %v642, %v663
        %v682 = vadd.f32 %v643, %v663
        %v683 = vadd.f32 %v644, %v663
        %v684 = vadd.f32 %v645, %v663
        %v685 = vadd.f32 %v646, %v663
        %v686 = vadd.f32 %v647, %v663
        %v687 = vadd.f32 %v648, %v663
        %v688 = vadd.f32 %v649, %v663
        %v689 = vadd.f32 %v650, %v663
        %v690 = vadd.f32 %v651, %v663
        %v691 = vadd.f32 %v652, %v663
        %v692 = vadd.f32 %v653, %v663
        %v693 = vadd.f32 %v654, %v663
        %v694 = vadd.f32 %v655, %v663
        %v695 = vadd.f32 %v656, %v663
        %v696 = vadd.f32 %v657, %v663
        %697 = vst [vmem:[%s367 + $0x2] sm:$0xff] %v665
        %698 = vst [vmem:[%s367 + $0xa] sm:$0xff] %v666
        %699 = vst [vmem:[%s367 + $0x1a] sm:$0xff] %v667
        %700 = vst [vmem:[%s367 + $0x22] sm:$0xff] %v668
        %701 = vst [vmem:[%s367 + $0x32] sm:$0xff] %v669
        %702 = vst [vmem:[%s367 + $0x3a] sm:$0xff] %v670
        %703 = vst [vmem:[%s367 + $0x4a] sm:$0xff] %v671
        %704 = vst [vmem:[%s367 + $0x52] sm:$0xff] %v672
        %705 = vst [vmem:[%s367 + $0x62] sm:$0xff] %v673
        %706 = vst [vmem:[%s367 + $0x6a] sm:$0xff] %v674
        %707 = vst [vmem:[%s367 + $0x7a] sm:$0xff] %v675
        %708 = vst [vmem:[%s367 + $0x82] sm:$0xff] %v676
        %709 = vst [vmem:[%s367 + $0x92] sm:$0xff] %v677
        %710 = vst [vmem:[%s367 + $0x9a] sm:$0xff] %v678
        %711 = vst [vmem:[%s367 + $0xaa] sm:$0xff] %v679
        %712 = vst [vmem:[%s367 + $0xb2] sm:$0xff] %v680
        %713 = vst [vmem:[%s367 + $0xc2] sm:$0xff] %v681
        %714 = vst [vmem:[%s367 + $0xca] sm:$0xff] %v682
        %715 = vst [vmem:[%s367 + $0xda] sm:$0xff] %v683
        %716 = vst [vmem:[%s367 + $0xe2] sm:$0xff] %v684
        %717 = vst [vmem:[%s367 + $0xf2] sm:$0xff] %v685
        %718 = vst [vmem:[%s367 + $0xfa] sm:$0xff] %v686
        %719 = vst [vmem:[%s367 + $0x10a] sm:$0xff] %v687
        %720 = vst [vmem:[%s367 + $0x112] sm:$0xff] %v688
        %721 = vst [vmem:[%s367 + $0x122] sm:$0xff] %v689
        %722 = vst [vmem:[%s367 + $0x12a] sm:$0xff] %v690
        %723 = vst [vmem:[%s367 + $0x13a] sm:$0xff] %v691
        %724 = vst [vmem:[%s367 + $0x142] sm:$0xff] %v692
        %725 = vst [vmem:[%s367 + $0x152] sm:$0xff] %v693
        %726 = vst [vmem:[%s367 + $0x15a] sm:$0xff] %v694
        %727 = vst [vmem:[%s367 + $0x16a] sm:$0xff] %v695
        %728 = vst [vmem:[%s367 + $0x172] sm:$0xff] %v696
        %v729 = vld [vmem:[#allocation2] sm:$0xff]
        %v730 = vld [vmem:[#allocation2 + $0x8] sm:$0xff]
        %v731 = vld [vmem:[#allocation2 + $0x18] sm:$0xff]
        %v732 = vld [vmem:[#allocation2 + $0x20] sm:$0xff]
        %v733 = vld [vmem:[#allocation2 + $0x30] sm:$0xff]
        %v734 = vld [vmem:[#allocation2 + $0x38] sm:$0xff]
        %v735 = vld [vmem:[#allocation2 + $0x48] sm:$0xff]
        %v736 = vld [vmem:[#allocation2 + $0x50] sm:$0xff]
        %v737 = vld [vmem:[#allocation2 + $0x60] sm:$0xff]
        %v738 = vld [vmem:[#allocation2 + $0x68] sm:$0xff]
        %v739 = vld [vmem:[#allocation2 + $0x78] sm:$0xff]
        %v740 = vld [vmem:[#allocation2 + $0x80] sm:$0xff]
        %v741 = vld [vmem:[#allocation2 + $0x90] sm:$0xff]
        %v742 = vld [vmem:[#allocation2 + $0x98] sm:$0xff]
        %v743 = vld [vmem:[#allocation2 + $0xa8] sm:$0xff]
        %v744 = vld [vmem:[#allocation2 + $0xb0] sm:$0xff]
        %v745 = vld [vmem:[#allocation7] sm:$0x1]
        %v746 = vlaneseq
        %v747 = vshrl.u32 %v746, 7
        %v748 = vsub.s32 0, %v747
        %v749 = vrot.slane %v745, %v748
        %v750 = vmul.f32 %v729, %v749
        %v751 = vmul.f32 %v730, %v749
        %v752 = vmul.f32 %v731, %v749
        %v753 = vmul.f32 %v732, %v749
        %v754 = vmul.f32 %v733, %v749
        %v755 = vmul.f32 %v734, %v749
        %v756 = vmul.f32 %v735, %v749
        %v757 = vmul.f32 %v736, %v749
        %v758 = vmul.f32 %v737, %v749
        %v759 = vmul.f32 %v738, %v749
        %v760 = vmul.f32 %v739, %v749
        %v761 = vmul.f32 %v740, %v749
        %v762 = vmul.f32 %v741, %v749
        %v763 = vmul.f32 %v742, %v749
        %v764 = vmul.f32 %v743, %v749
        %v765 = vmul.f32 %v744, %v749
        %v766 = vld [vmem:[#allocation2 + $0x1] sm:$0xff]
        %v767 = vld [vmem:[#allocation2 + $0x9] sm:$0xff]
        %v768 = vld [vmem:[#allocation2 + $0x19] sm:$0xff]
        %v769 = vld [vmem:[#allocation2 + $0x21] sm:$0xff]
        %v770 = vld [vmem:[#allocation2 + $0x31] sm:$0xff]
        %v771 = vld [vmem:[#allocation2 + $0x39] sm:$0xff]
        %v772 = vld [vmem:[#allocation2 + $0x49] sm:$0xff]
        %v773 = vld [vmem:[#allocation2 + $0x51] sm:$0xff]
        %v774 = vld [vmem:[#allocation2 + $0x61] sm:$0xff]
        %v775 = vld [vmem:[#allocation2 + $0x69] sm:$0xff]
        %v776 = vld [vmem:[#allocation2 + $0x79] sm:$0xff]
        %v777 = vld [vmem:[#allocation2 + $0x81] sm:$0xff]
        %v778 = vld [vmem:[#allocation2 + $0x91] sm:$0xff]
        %v779 = vld [vmem:[#allocation2 + $0x99] sm:$0xff]
        %v780 = vld [vmem:[#allocation2 + $0xa9] sm:$0xff]
        %v781 = vld [vmem:[#allocation2 + $0xb1] sm:$0xff]
        %v782 = vld [vmem:[#allocation7 + $0x1] sm:$0x1]
        %v783 = vlaneseq
        %v784 = vshrl.u32 %v783, 7
        %v785 = vsub.s32 0, %v784
        %v786 = vrot.slane %v782, %v785
        %v787 = vmul.f32 %v766, %v786
        %v788 = vmul.f32 %v767, %v786
        %v789 = vmul.f32 %v768, %v786
        %v790 = vmul.f32 %v769, %v786
        %v791 = vmul.f32 %v770, %v786
        %v792 = vmul.f32 %v771, %v786
        %v793 = vmul.f32 %v772, %v786
        %v794 = vmul.f32 %v773, %v786
        %v795 = vmul.f32 %v774, %v786
        %v796 = vmul.f32 %v775, %v786
        %v797 = vmul.f32 %v776, %v786
        %v798 = vmul.f32 %v777, %v786
        %v799 = vmul.f32 %v778, %v786
        %v800 = vmul.f32 %v779, %v786
        %v801 = vmul.f32 %v780, %v786
        %v802 = vmul.f32 %v781, %v786
        %v803 = vadd.f32 %v750, %v787
        %v804 = vadd.f32 %v751, %v788
        %v805 = vadd.f32 %v752, %v789
        %v806 = vadd.f32 %v753, %v790
        %v807 = vadd.f32 %v754, %v791
        %v808 = vadd.f32 %v755, %v792
        %v809 = vadd.f32 %v756, %v793
        %v810 = vadd.f32 %v757, %v794
        %v811 = vadd.f32 %v758, %v795
        %v812 = vadd.f32 %v759, %v796
        %v813 = vadd.f32 %v760, %v797
        %v814 = vadd.f32 %v761, %v798
        %v815 = vadd.f32 %v762, %v799
        %v816 = vadd.f32 %v763, %v800
        %v817 = vadd.f32 %v764, %v801
        %v818 = vadd.f32 %v765, %v802
        %v819 = vld [vmem:[#allocation2 + $0x2] sm:$0xff]
        %v820 = vld [vmem:[#allocation2 + $0xa] sm:$0xff]
        %v821 = vld [vmem:[#allocation2 + $0x1a] sm:$0xff]
        %v822 = vld [vmem:[#allocation2 + $0x22] sm:$0xff]
        %v823 = vld [vmem:[#allocation2 + $0x32] sm:$0xff]
        %v824 = vld [vmem:[#allocation2 + $0x3a] sm:$0xff]
        %v825 = vld [vmem:[#allocation2 + $0x4a] sm:$0xff]
        %v826 = vld [vmem:[#allocation2 + $0x52] sm:$0xff]
        %v827 = vld [vmem:[#allocation2 + $0x62] sm:$0xff]
        %v828 = vld [vmem:[#allocation2 + $0x6a] sm:$0xff]
        %v829 = vld [vmem:[#allocation2 + $0x7a] sm:$0xff]
        %v830 = vld [vmem:[#allocation2 + $0x82] sm:$0xff]
        %v831 = vld [vmem:[#allocation2 + $0x92] sm:$0xff]
        %v832 = vld [vmem:[#allocation2 + $0x9a] sm:$0xff]
        %v833 = vld [vmem:[#allocation2 + $0xaa] sm:$0xff]
        %v834 = vld [vmem:[#allocation2 + $0xb2] sm:$0xff]
        %v835 = vld [vmem:[#allocation7 + $0x2] sm:$0x1]
        %v836 = vlaneseq
        %v837 = vshrl.u32 %v836, 7
        %v838 = vsub.s32 0, %v837
        %v839 = vrot.slane %v835, %v838
        %v840 = vmul.f32 %v819, %v839
        %v841 = vmul.f32 %v820, %v839
        %v842 = vmul.f32 %v821, %v839
        %v843 = vmul.f32 %v822, %v839
        %v844 = vmul.f32 %v823, %v839
        %v845 = vmul.f32 %v824, %v839
        %v846 = vmul.f32 %v825, %v839
        %v847 = vmul.f32 %v826, %v839
        %v848 = vmul.f32 %v827, %v839
        %v849 = vmul.f32 %v828, %v839
        %v850 = vmul.f32 %v829, %v839
        %v851 = vmul.f32 %v830, %v839
        %v852 = vmul.f32 %v831, %v839
        %v853 = vmul.f32 %v832, %v839
        %v854 = vmul.f32 %v833, %v839
        %v855 = vmul.f32 %v834, %v839
        %v856 = vadd.f32 %v803, %v840
        %v857 = vadd.f32 %v804, %v841
        %v858 = vadd.f32 %v805, %v842
        %v859 = vadd.f32 %v806, %v843
        %v860 = vadd.f32 %v807, %v844
        %v861 = vadd.f32 %v808, %v845
        %v862 = vadd.f32 %v809, %v846
        %v863 = vadd.f32 %v810, %v847
        %v864 = vadd.f32 %v811, %v848
        %v865 = vadd.f32 %v812, %v849
        %v866 = vadd.f32 %v813, %v850
        %v867 = vadd.f32 %v814, %v851
        %v868 = vadd.f32 %v815, %v852
        %v869 = vadd.f32 %v816, %v853
        %v870 = vadd.f32 %v817, %v854
        %v871 = vadd.f32 %v818, %v855
        %v872 = vld [vmem:[#allocation2 + $0x3] sm:$0xff]
        %v873 = vld [vmem:[#allocation2 + $0xb] sm:$0xff]
        %v874 = vld [vmem:[#allocation2 + $0x1b] sm:$0xff]
        %v875 = vld [vmem:[#allocation2 + $0x23] sm:$0xff]
        %v876 = vld [vmem:[#allocation2 + $0x33] sm:$0xff]
        %v877 = vld [vmem:[#allocation2 + $0x3b] sm:$0xff]
        %v878 = vld [vmem:[#allocation2 + $0x4b] sm:$0xff]
        %v879 = vld [vmem:[#allocation2 + $0x53] sm:$0xff]
        %v880 = vld [vmem:[#allocation2 + $0x63] sm:$0xff]
        %v881 = vld [vmem:[#allocation2 + $0x6b] sm:$0xff]
        %v882 = vld [vmem:[#allocation2 + $0x7b] sm:$0xff]
        %v883 = vld [vmem:[#allocation2 + $0x83] sm:$0xff]
        %v884 = vld [vmem:[#allocation2 + $0x93] sm:$0xff]
        %v885 = vld [vmem:[#allocation2 + $0x9b] sm:$0xff]
        %v886 = vld [vmem:[#allocation2 + $0xab] sm:$0xff]
        %v887 = vld [vmem:[#allocation2 + $0xb3] sm:$0xff]
        %v888 = vld [vmem:[#allocation7 + $0x3] sm:$0x1]
        %v889 = vlaneseq
        %v890 = vshrl.u32 %v889, 7
        %v891 = vsub.s32 0, %v890
        %v892 = vrot.slane %v888, %v891
        %v893 = vmul.f32 %v872, %v892
        %v894 = vmul.f32 %v873, %v892
        %v895 = vmul.f32 %v874, %v892
        %v896 = vmul.f32 %v875, %v892
        %v897 = vmul.f32 %v876, %v892
        %v898 = vmul.f32 %v877, %v892
        %v899 = vmul.f32 %v878, %v892
        %v900 = vmul.f32 %v879, %v892
        %v901 = vmul.f32 %v880, %v892
        %v902 = vmul.f32 %v881, %v892
        %v903 = vmul.f32 %v882, %v892
        %v904 = vmul.f32 %v883, %v892
        %v905 = vmul.f32 %v884, %v892
        %v906 = vmul.f32 %v885, %v892
        %v907 = vmul.f32 %v886, %v892
        %v908 = vmul.f32 %v887, %v892
        %v909 = vadd.f32 %v856, %v893
        %v910 = vadd.f32 %v857, %v894
        %v911 = vadd.f32 %v858, %v895
        %v912 = vadd.f32 %v859, %v896
        %v913 = vadd.f32 %v860, %v897
        %v914 = vadd.f32 %v861, %v898
        %v915 = vadd.f32 %v862, %v899
        %v916 = vadd.f32 %v863, %v900
        %v917 = vadd.f32 %v864, %v901
        %v918 = vadd.f32 %v865, %v902
        %v919 = vadd.f32 %v866, %v903
        %v920 = vadd.f32 %v867, %v904
        %v921 = vadd.f32 %v868, %v905
        %v922 = vadd.f32 %v869, %v906
        %v923 = vadd.f32 %v870, %v907
        %v924 = vadd.f32 %v871, %v908
        %v925 = vld [vmem:[#allocation2 + $0x4] sm:$0xff]
        %v926 = vld [vmem:[#allocation2 + $0xc] sm:$0xff]
        %v927 = vld [vmem:[#allocation2 + $0x1c] sm:$0xff]
        %v928 = vld [vmem:[#allocation2 + $0x24] sm:$0xff]
        %v929 = vld [vmem:[#allocation2 + $0x34] sm:$0xff]
        %v930 = vld [vmem:[#allocation2 + $0x3c] sm:$0xff]
        %v931 = vld [vmem:[#allocation2 + $0x4c] sm:$0xff]
        %v932 = vld [vmem:[#allocation2 + $0x54] sm:$0xff]
        %v933 = vld [vmem:[#allocation2 + $0x64] sm:$0xff]
        %v934 = vld [vmem:[#allocation2 + $0x6c] sm:$0xff]
        %v935 = vld [vmem:[#allocation2 + $0x7c] sm:$0xff]
        %v936 = vld [vmem:[#allocation2 + $0x84] sm:$0xff]
        %v937 = vld [vmem:[#allocation2 + $0x94] sm:$0xff]
        %v938 = vld [vmem:[#allocation2 + $0x9c] sm:$0xff]
        %v939 = vld [vmem:[#allocation2 + $0xac] sm:$0xff]
        %v940 = vld [vmem:[#allocation2 + $0xb4] sm:$0xff]
        %v941 = vld [vmem:[#allocation7 + $0x4] sm:$0x1]
        %v942 = vlaneseq
        %v943 = vshrl.u32 %v942, 7
        %v944 = vsub.s32 0, %v943
        %v945 = vrot.slane %v941, %v944
        %v946 = vmul.f32 %v925, %v945
        %v947 = vmul.f32 %v926, %v945
        %v948 = vmul.f32 %v927, %v945
        %v949 = vmul.f32 %v928, %v945
        %v950 = vmul.f32 %v929, %v945
        %v951 = vmul.f32 %v930, %v945
        %v952 = vmul.f32 %v931, %v945
        %v953 = vmul.f32 %v932, %v945
        %v954 = vmul.f32 %v933, %v945
        %v955 = vmul.f32 %v934, %v945
        %v956 = vmul.f32 %v935, %v945
        %v957 = vmul.f32 %v936, %v945
        %v958 = vmul.f32 %v937, %v945
        %v959 = vmul.f32 %v938, %v945
        %v960 = vmul.f32 %v939, %v945
        %v961 = vmul.f32 %v940, %v945
        %v962 = vadd.f32 %v909, %v946
        %v963 = vadd.f32 %v910, %v947
        %v964 = vadd.f32 %v911, %v948
        %v965 = vadd.f32 %v912, %v949
        %v966 = vadd.f32 %v913, %v950
        %v967 = vadd.f32 %v914, %v951
        %v968 = vadd.f32 %v915, %v952
        %v969 = vadd.f32 %v916, %v953
        %v970 = vadd.f32 %v917, %v954
        %v971 = vadd.f32 %v918, %v955
        %v972 = vadd.f32 %v919, %v956
        %v973 = vadd.f32 %v920, %v957
        %v974 = vadd.f32 %v921, %v958
        %v975 = vadd.f32 %v922, %v959
        %v976 = vadd.f32 %v923, %v960
        %v977 = vadd.f32 %v924, %v961
        %s978 = scalar_lea.vmem [#allocation2], 24
        %v979 = vld [vmem:[%s978] sm:$0xff]
        %v980 = vld [vmem:[%s978 + $0x8] sm:$0xff]
        %v981 = vld [vmem:[%s978 + $0x18] sm:$0xff]
        %v982 = vld [vmem:[%s978 + $0x20] sm:$0xff]
        %v983 = vld [vmem:[%s978 + $0x30] sm:$0xff]
        %v984 = vld [vmem:[%s978 + $0x38] sm:$0xff]
        %v985 = vld [vmem:[%s978 + $0x48] sm:$0xff]
        %v986 = vld [vmem:[%s978 + $0x50] sm:$0xff]
        %v987 = vld [vmem:[%s978 + $0x60] sm:$0xff]
        %v988 = vld [vmem:[%s978 + $0x68] sm:$0xff]
        %v989 = vld [vmem:[%s978 + $0x78] sm:$0xff]
        %v990 = vld [vmem:[%s978 + $0x80] sm:$0xff]
        %v991 = vld [vmem:[%s978 + $0x90] sm:$0xff]
        %v992 = vld [vmem:[%s978 + $0x98] sm:$0xff]
        %v993 = vld [vmem:[%s978 + $0xa8] sm:$0xff]
        %v994 = vld [vmem:[%s978 + $0xb0] sm:$0xff]
        %s995 = scalar_lea.vmem [#allocation7], 8
        %v996 = vld [vmem:[%s995] sm:$0x1]
        %v997 = vlaneseq
        %v998 = vshrl.u32 %v997, 7
        %v999 = vsub.s32 0, %v998
        %v1000 = vrot.slane %v996, %v999
        %v1001 = vmul.f32 %v979, %v1000
        %v1002 = vmul.f32 %v980, %v1000
        %v1003 = vmul.f32 %v981, %v1000
        %v1004 = vmul.f32 %v982, %v1000
        %v1005 = vmul.f32 %v983, %v1000
        %v1006 = vmul.f32 %v984, %v1000
        %v1007 = vmul.f32 %v985, %v1000
        %v1008 = vmul.f32 %v986, %v1000
        %v1009 = vmul.f32 %v987, %v1000
        %v1010 = vmul.f32 %v988, %v1000
        %v1011 = vmul.f32 %v989, %v1000
        %v1012 = vmul.f32 %v990, %v1000
        %v1013 = vmul.f32 %v991, %v1000
        %v1014 = vmul.f32 %v992, %v1000
        %v1015 = vmul.f32 %v993, %v1000
        %v1016 = vmul.f32 %v994, %v1000
        %v1017 = vadd.f32 %v962, %v1001
        %v1018 = vadd.f32 %v963, %v1002
        %v1019 = vadd.f32 %v964, %v1003
        %v1020 = vadd.f32 %v965, %v1004
        %v1021 = vadd.f32 %v966, %v1005
        %v1022 = vadd.f32 %v967, %v1006
        %v1023 = vadd.f32 %v968, %v1007
        %v1024 = vadd.f32 %v969, %v1008
        %v1025 = vadd.f32 %v970, %v1009
        %v1026 = vadd.f32 %v971, %v1010
        %v1027 = vadd.f32 %v972, %v1011
        %v1028 = vadd.f32 %v973, %v1012
        %v1029 = vadd.f32 %v974, %v1013
        %v1030 = vadd.f32 %v975, %v1014
        %v1031 = vadd.f32 %v976, %v1015
        %v1032 = vadd.f32 %v977, %v1016
        %v1033 = vld [vmem:[%s978 + $0x1] sm:$0xff]
        %v1034 = vld [vmem:[%s978 + $0x9] sm:$0xff]
        %v1035 = vld [vmem:[%s978 + $0x19] sm:$0xff]
        %v1036 = vld [vmem:[%s978 + $0x21] sm:$0xff]
        %v1037 = vld [vmem:[%s978 + $0x31] sm:$0xff]
        %v1038 = vld [vmem:[%s978 + $0x39] sm:$0xff]
        %v1039 = vld [vmem:[%s978 + $0x49] sm:$0xff]
        %v1040 = vld [vmem:[%s978 + $0x51] sm:$0xff]
        %v1041 = vld [vmem:[%s978 + $0x61] sm:$0xff]
        %v1042 = vld [vmem:[%s978 + $0x69] sm:$0xff]
        %v1043 = vld [vmem:[%s978 + $0x79] sm:$0xff]
        %v1044 = vld [vmem:[%s978 + $0x81] sm:$0xff]
        %v1045 = vld [vmem:[%s978 + $0x91] sm:$0xff]
        %v1046 = vld [vmem:[%s978 + $0x99] sm:$0xff]
        %v1047 = vld [vmem:[%s978 + $0xa9] sm:$0xff]
        %v1048 = vld [vmem:[%s978 + $0xb1] sm:$0xff]
        %v1049 = vld [vmem:[%s995 + $0x1] sm:$0x1]
        %v1050 = vlaneseq
        %v1051 = vshrl.u32 %v1050, 7
        %v1052 = vsub.s32 0, %v1051
        %v1053 = vrot.slane %v1049, %v1052
        %v1054 = vmul.f32 %v1033, %v1053
        %v1055 = vmul.f32 %v1034, %v1053
        %v1056 = vmul.f32 %v1035, %v1053
        %v1057 = vmul.f32 %v1036, %v1053
        %v1058 = vmul.f32 %v1037, %v1053
        %v1059 = vmul.f32 %v1038, %v1053
        %v1060 = vmul.f32 %v1039, %v1053
        %v1061 = vmul.f32 %v1040, %v1053
        %v1062 = vmul.f32 %v1041, %v1053
        %v1063 = vmul.f32 %v1042, %v1053
        %v1064 = vmul.f32 %v1043, %v1053
        %v1065 = vmul.f32 %v1044, %v1053
        %v1066 = vmul.f32 %v1045, %v1053
        %v1067 = vmul.f32 %v1046, %v1053
        %v1068 = vmul.f32 %v1047, %v1053
        %v1069 = vmul.f32 %v1048, %v1053
        %v1070 = vadd.f32 %v1017, %v1054
        %v1071 = vadd.f32 %v1018, %v1055
        %v1072 = vadd.f32 %v1019, %v1056
        %v1073 = vadd.f32 %v1020, %v1057
        %v1074 = vadd.f32 %v1021, %v1058
        %v1075 = vadd.f32 %v1022, %v1059
        %v1076 = vadd.f32 %v1023, %v1060
        %v1077 = vadd.f32 %v1024, %v1061
        %v1078 = vadd.f32 %v1025, %v1062
        %v1079 = vadd.f32 %v1026, %v1063
        %v1080 = vadd.f32 %v1027, %v1064
        %v1081 = vadd.f32 %v1028, %v1065
        %v1082 = vadd.f32 %v1029, %v1066
        %v1083 = vadd.f32 %v1030, %v1067
        %v1084 = vadd.f32 %v1031, %v1068
        %v1085 = vadd.f32 %v1032, %v1069
        %v1086 = vld [vmem:[%s978 + $0x2] sm:$0xff]
        %v1087 = vld [vmem:[%s978 + $0xa] sm:$0xff]
        %v1088 = vld [vmem:[%s978 + $0x1a] sm:$0xff]
        %v1089 = vld [vmem:[%s978 + $0x22] sm:$0xff]
        %v1090 = vld [vmem:[%s978 + $0x32] sm:$0xff]
        %v1091 = vld [vmem:[%s978 + $0x3a] sm:$0xff]
        %v1092 = vld [vmem:[%s978 + $0x4a] sm:$0xff]
        %v1093 = vld [vmem:[%s978 + $0x52] sm:$0xff]
        %v1094 = vld [vmem:[%s978 + $0x62] sm:$0xff]
        %v1095 = vld [vmem:[%s978 + $0x6a] sm:$0xff]
        %v1096 = vld [vmem:[%s978 + $0x7a] sm:$0xff]
        %v1097 = vld [vmem:[%s978 + $0x82] sm:$0xff]
        %v1098 = vld [vmem:[%s978 + $0x92] sm:$0xff]
        %v1099 = vld [vmem:[%s978 + $0x9a] sm:$0xff]
        %v1100 = vld [vmem:[%s978 + $0xaa] sm:$0xff]
        %v1101 = vld [vmem:[%s978 + $0xb2] sm:$0xff]
        %v1102 = vld [vmem:[%s995 + $0x2] sm:$0x1]
        %v1103 = vlaneseq
        %v1104 = vshrl.u32 %v1103, 7
        %v1105 = vsub.s32 0, %v1104
        %v1106 = vrot.slane %v1102, %v1105
        %v1107 = vmul.f32 %v1086, %v1106
        %v1108 = vmul.f32 %v1087, %v1106
        %v1109 = vmul.f32 %v1088, %v1106
        %v1110 = vmul.f32 %v1089, %v1106
        %v1111 = vmul.f32 %v1090, %v1106
        %v1112 = vmul.f32 %v1091, %v1106
        %v1113 = vmul.f32 %v1092, %v1106
        %v1114 = vmul.f32 %v1093, %v1106
        %v1115 = vmul.f32 %v1094, %v1106
        %v1116 = vmul.f32 %v1095, %v1106
        %v1117 = vmul.f32 %v1096, %v1106
        %v1118 = vmul.f32 %v1097, %v1106
        %v1119 = vmul.f32 %v1098, %v1106
        %v1120 = vmul.f32 %v1099, %v1106
        %v1121 = vmul.f32 %v1100, %v1106
        %v1122 = vmul.f32 %v1101, %v1106
        %v1123 = vadd.f32 %v1070, %v1107
        %v1124 = vadd.f32 %v1071, %v1108
        %v1125 = vadd.f32 %v1072, %v1109
        %v1126 = vadd.f32 %v1073, %v1110
        %v1127 = vadd.f32 %v1074, %v1111
        %v1128 = vadd.f32 %v1075, %v1112
        %v1129 = vadd.f32 %v1076, %v1113
        %v1130 = vadd.f32 %v1077, %v1114
        %v1131 = vadd.f32 %v1078, %v1115
        %v1132 = vadd.f32 %v1079, %v1116
        %v1133 = vadd.f32 %v1080, %v1117
        %v1134 = vadd.f32 %v1081, %v1118
        %v1135 = vadd.f32 %v1082, %v1119
        %v1136 = vadd.f32 %v1083, %v1120
        %v1137 = vadd.f32 %v1084, %v1121
        %v1138 = vadd.f32 %v1085, %v1122
        %v1139 = vld [vmem:[%s978 + $0x3] sm:$0xff]
        %v1140 = vld [vmem:[%s978 + $0xb] sm:$0xff]
        %v1141 = vld [vmem:[%s978 + $0x1b] sm:$0xff]
        %v1142 = vld [vmem:[%s978 + $0x23] sm:$0xff]
        %v1143 = vld [vmem:[%s978 + $0x33] sm:$0xff]
        %v1144 = vld [vmem:[%s978 + $0x3b] sm:$0xff]
        %v1145 = vld [vmem:[%s978 + $0x4b] sm:$0xff]
        %v1146 = vld [vmem:[%s978 + $0x53] sm:$0xff]
        %v1147 = vld [vmem:[%s978 + $0x63] sm:$0xff]
        %v1148 = vld [vmem:[%s978 + $0x6b] sm:$0xff]
        %v1149 = vld [vmem:[%s978 + $0x7b] sm:$0xff]
        %v1150 = vld [vmem:[%s978 + $0x83] sm:$0xff]
        %v1151 = vld [vmem:[%s978 + $0x93] sm:$0xff]
        %v1152 = vld [vmem:[%s978 + $0x9b] sm:$0xff]
        %v1153 = vld [vmem:[%s978 + $0xab] sm:$0xff]
        %v1154 = vld [vmem:[%s978 + $0xb3] sm:$0xff]
        %v1155 = vld [vmem:[%s995 + $0x3] sm:$0x1]
        %v1156 = vlaneseq
        %v1157 = vshrl.u32 %v1156, 7
        %v1158 = vsub.s32 0, %v1157
        %v1159 = vrot.slane %v1155, %v1158
        %v1160 = vmul.f32 %v1139, %v1159
        %v1161 = vmul.f32 %v1140, %v1159
        %v1162 = vmul.f32 %v1141, %v1159
        %v1163 = vmul.f32 %v1142, %v1159
        %v1164 = vmul.f32 %v1143, %v1159
        %v1165 = vmul.f32 %v1144, %v1159
        %v1166 = vmul.f32 %v1145, %v1159
        %v1167 = vmul.f32 %v1146, %v1159
        %v1168 = vmul.f32 %v1147, %v1159
        %v1169 = vmul.f32 %v1148, %v1159
        %v1170 = vmul.f32 %v1149, %v1159
        %v1171 = vmul.f32 %v1150, %v1159
        %v1172 = vmul.f32 %v1151, %v1159
        %v1173 = vmul.f32 %v1152, %v1159
        %v1174 = vmul.f32 %v1153, %v1159
        %v1175 = vmul.f32 %v1154, %v1159
        %v1176 = vadd.f32 %v1123, %v1160
        %v1177 = vadd.f32 %v1124, %v1161
        %v1178 = vadd.f32 %v1125, %v1162
        %v1179 = vadd.f32 %v1126, %v1163
        %v1180 = vadd.f32 %v1127, %v1164
        %v1181 = vadd.f32 %v1128, %v1165
        %v1182 = vadd.f32 %v1129, %v1166
        %v1183 = vadd.f32 %v1130, %v1167
        %v1184 = vadd.f32 %v1131, %v1168
        %v1185 = vadd.f32 %v1132, %v1169
        %v1186 = vadd.f32 %v1133, %v1170
        %v1187 = vadd.f32 %v1134, %v1171
        %v1188 = vadd.f32 %v1135, %v1172
        %v1189 = vadd.f32 %v1136, %v1173
        %v1190 = vadd.f32 %v1137, %v1174
        %v1191 = vadd.f32 %v1138, %v1175
        %v1192 = vld [vmem:[%s978 + $0x4] sm:$0xff]
        %v1193 = vld [vmem:[%s978 + $0xc] sm:$0xff]
        %v1194 = vld [vmem:[%s978 + $0x1c] sm:$0xff]
        %v1195 = vld [vmem:[%s978 + $0x24] sm:$0xff]
        %v1196 = vld [vmem:[%s978 + $0x34] sm:$0xff]
        %v1197 = vld [vmem:[%s978 + $0x3c] sm:$0xff]
        %v1198 = vld [vmem:[%s978 + $0x4c] sm:$0xff]
        %v1199 = vld [vmem:[%s978 + $0x54] sm:$0xff]
        %v1200 = vld [vmem:[%s978 + $0x64] sm:$0xff]
        %v1201 = vld [vmem:[%s978 + $0x6c] sm:$0xff]
        %v1202 = vld [vmem:[%s978 + $0x7c] sm:$0xff]
        %v1203 = vld [vmem:[%s978 + $0x84] sm:$0xff]
        %v1204 = vld [vmem:[%s978 + $0x94] sm:$0xff]
        %v1205 = vld [vmem:[%s978 + $0x9c] sm:$0xff]
        %v1206 = vld [vmem:[%s978 + $0xac] sm:$0xff]
        %v1207 = vld [vmem:[%s978 + $0xb4] sm:$0xff]
        %v1208 = vld [vmem:[%s995 + $0x4] sm:$0x1]
        %v1209 = vlaneseq
        %v1210 = vshrl.u32 %v1209, 7
        %v1211 = vsub.s32 0, %v1210
        %v1212 = vrot.slane %v1208, %v1211
        %v1213 = vmul.f32 %v1192, %v1212
        %v1214 = vmul.f32 %v1193, %v1212
        %v1215 = vmul.f32 %v1194, %v1212
        %v1216 = vmul.f32 %v1195, %v1212
        %v1217 = vmul.f32 %v1196, %v1212
        %v1218 = vmul.f32 %v1197, %v1212
        %v1219 = vmul.f32 %v1198, %v1212
        %v1220 = vmul.f32 %v1199, %v1212
        %v1221 = vmul.f32 %v1200, %v1212
        %v1222 = vmul.f32 %v1201, %v1212
        %v1223 = vmul.f32 %v1202, %v1212
        %v1224 = vmul.f32 %v1203, %v1212
        %v1225 = vmul.f32 %v1204, %v1212
        %v1226 = vmul.f32 %v1205, %v1212
        %v1227 = vmul.f32 %v1206, %v1212
        %v1228 = vmul.f32 %v1207, %v1212
        %v1229 = vadd.f32 %v1176, %v1213
        %v1230 = vadd.f32 %v1177, %v1214
        %v1231 = vadd.f32 %v1178, %v1215
        %v1232 = vadd.f32 %v1179, %v1216
        %v1233 = vadd.f32 %v1180, %v1217
        %v1234 = vadd.f32 %v1181, %v1218
        %v1235 = vadd.f32 %v1182, %v1219
        %v1236 = vadd.f32 %v1183, %v1220
        %v1237 = vadd.f32 %v1184, %v1221
        %v1238 = vadd.f32 %v1185, %v1222
        %v1239 = vadd.f32 %v1186, %v1223
        %v1240 = vadd.f32 %v1187, %v1224
        %v1241 = vadd.f32 %v1188, %v1225
        %v1242 = vadd.f32 %v1189, %v1226
        %v1243 = vadd.f32 %v1190, %v1227
        %v1244 = vadd.f32 %v1191, %v1228
        %v1245 = vld [vmem:[%s367] sm:$0xff]
        %v1246 = vld [vmem:[%s367 + $0x8] sm:$0xff]
        %v1247 = vld [vmem:[%s367 + $0x18] sm:$0xff]
        %v1248 = vld [vmem:[%s367 + $0x20] sm:$0xff]
        %v1249 = vld [vmem:[%s367 + $0x30] sm:$0xff]
        %v1250 = vld [vmem:[%s367 + $0x38] sm:$0xff]
        %v1251 = vld [vmem:[%s367 + $0x48] sm:$0xff]
        %v1252 = vld [vmem:[%s367 + $0x50] sm:$0xff]
        %v1253 = vld [vmem:[%s367 + $0x60] sm:$0xff]
        %v1254 = vld [vmem:[%s367 + $0x68] sm:$0xff]
        %v1255 = vld [vmem:[%s367 + $0x78] sm:$0xff]
        %v1256 = vld [vmem:[%s367 + $0x80] sm:$0xff]
        %v1257 = vld [vmem:[%s367 + $0x90] sm:$0xff]
        %v1258 = vld [vmem:[%s367 + $0x98] sm:$0xff]
        %v1259 = vld [vmem:[%s367 + $0xa8] sm:$0xff]
        %v1260 = vld [vmem:[%s367 + $0xb0] sm:$0xff]
        %s1261 = scalar_lea.vmem [#allocation7], 16
        %v1262 = vld [vmem:[%s1261] sm:$0x1]
        %v1263 = vlaneseq
        %v1264 = vshrl.u32 %v1263, 7
        %v1265 = vsub.s32 0, %v1264
        %v1266 = vrot.slane %v1262, %v1265
        %v1267 = vmul.f32 %v1245, %v1266
        %v1268 = vmul.f32 %v1246, %v1266
        %v1269 = vmul.f32 %v1247, %v1266
        %v1270 = vmul.f32 %v1248, %v1266
        %v1271 = vmul.f32 %v1249, %v1266
        %v1272 = vmul.f32 %v1250, %v1266
        %v1273 = vmul.f32 %v1251, %v1266
        %v1274 = vmul.f32 %v1252, %v1266
        %v1275 = vmul.f32 %v1253, %v1266
        %v1276 = vmul.f32 %v1254, %v1266
        %v1277 = vmul.f32 %v1255, %v1266
        %v1278 = vmul.f32 %v1256, %v1266
        %v1279 = vmul.f32 %v1257, %v1266
        %v1280 = vmul.f32 %v1258, %v1266
        %v1281 = vmul.f32 %v1259, %v1266
        %v1282 = vmul.f32 %v1260, %v1266
        %v1283 = vadd.f32 %v1229, %v1267
        %v1284 = vadd.f32 %v1230, %v1268
        %v1285 = vadd.f32 %v1231, %v1269
        %v1286 = vadd.f32 %v1232, %v1270
        %v1287 = vadd.f32 %v1233, %v1271
        %v1288 = vadd.f32 %v1234, %v1272
        %v1289 = vadd.f32 %v1235, %v1273
        %v1290 = vadd.f32 %v1236, %v1274
        %v1291 = vadd.f32 %v1237, %v1275
        %v1292 = vadd.f32 %v1238, %v1276
        %v1293 = vadd.f32 %v1239, %v1277
        %v1294 = vadd.f32 %v1240, %v1278
        %v1295 = vadd.f32 %v1241, %v1279
        %v1296 = vadd.f32 %v1242, %v1280
        %v1297 = vadd.f32 %v1243, %v1281
        %v1298 = vadd.f32 %v1244, %v1282
        %v1299 = vld [vmem:[%s367 + $0x1] sm:$0xff]
        %v1300 = vld [vmem:[%s367 + $0x9] sm:$0xff]
        %v1301 = vld [vmem:[%s367 + $0x19] sm:$0xff]
        %v1302 = vld [vmem:[%s367 + $0x21] sm:$0xff]
        %v1303 = vld [vmem:[%s367 + $0x31] sm:$0xff]
        %v1304 = vld [vmem:[%s367 + $0x39] sm:$0xff]
        %v1305 = vld [vmem:[%s367 + $0x49] sm:$0xff]
        %v1306 = vld [vmem:[%s367 + $0x51] sm:$0xff]
        %v1307 = vld [vmem:[%s367 + $0x61] sm:$0xff]
        %v1308 = vld [vmem:[%s367 + $0x69] sm:$0xff]
        %v1309 = vld [vmem:[%s367 + $0x79] sm:$0xff]
        %v1310 = vld [vmem:[%s367 + $0x81] sm:$0xff]
        %v1311 = vld [vmem:[%s367 + $0x91] sm:$0xff]
        %v1312 = vld [vmem:[%s367 + $0x99] sm:$0xff]
        %v1313 = vld [vmem:[%s367 + $0xa9] sm:$0xff]
        %v1314 = vld [vmem:[%s367 + $0xb1] sm:$0xff]
        %v1315 = vld [vmem:[%s1261 + $0x1] sm:$0x1]
        %v1316 = vlaneseq
        %v1317 = vshrl.u32 %v1316, 7
        %v1318 = vsub.s32 0, %v1317
        %v1319 = vrot.slane %v1315, %v1318
        %v1320 = vmul.f32 %v1299, %v1319
        %v1321 = vmul.f32 %v1300, %v1319
        %v1322 = vmul.f32 %v1301, %v1319
        %v1323 = vmul.f32 %v1302, %v1319
        %v1324 = vmul.f32 %v1303, %v1319
        %v1325 = vmul.f32 %v1304, %v1319
        %v1326 = vmul.f32 %v1305, %v1319
        %v1327 = vmul.f32 %v1306, %v1319
        %v1328 = vmul.f32 %v1307, %v1319
        %v1329 = vmul.f32 %v1308, %v1319
        %v1330 = vmul.f32 %v1309, %v1319
        %v1331 = vmul.f32 %v1310, %v1319
        %v1332 = vmul.f32 %v1311, %v1319
        %v1333 = vmul.f32 %v1312, %v1319
        %v1334 = vmul.f32 %v1313, %v1319
        %v1335 = vmul.f32 %v1314, %v1319
        %v1336 = vadd.f32 %v1283, %v1320
        %v1337 = vadd.f32 %v1284, %v1321
        %v1338 = vadd.f32 %v1285, %v1322
        %v1339 = vadd.f32 %v1286, %v1323
        %v1340 = vadd.f32 %v1287, %v1324
        %v1341 = vadd.f32 %v1288, %v1325
        %v1342 = vadd.f32 %v1289, %v1326
        %v1343 = vadd.f32 %v1290, %v1327
        %v1344 = vadd.f32 %v1291, %v1328
        %v1345 = vadd.f32 %v1292, %v1329
        %v1346 = vadd.f32 %v1293, %v1330
        %v1347 = vadd.f32 %v1294, %v1331
        %v1348 = vadd.f32 %v1295, %v1332
        %v1349 = vadd.f32 %v1296, %v1333
        %v1350 = vadd.f32 %v1297, %v1334
        %v1351 = vadd.f32 %v1298, %v1335
        %v1352 = vld [vmem:[%s367 + $0x2] sm:$0xff]
        %v1353 = vld [vmem:[%s367 + $0xa] sm:$0xff]
        %v1354 = vld [vmem:[%s367 + $0x1a] sm:$0xff]
        %v1355 = vld [vmem:[%s367 + $0x22] sm:$0xff]
        %v1356 = vld [vmem:[%s367 + $0x32] sm:$0xff]
        %v1357 = vld [vmem:[%s367 + $0x3a] sm:$0xff]
        %v1358 = vld [vmem:[%s367 + $0x4a] sm:$0xff]
        %v1359 = vld [vmem:[%s367 + $0x52] sm:$0xff]
        %v1360 = vld [vmem:[%s367 + $0x62] sm:$0xff]
        %v1361 = vld [vmem:[%s367 + $0x6a] sm:$0xff]
        %v1362 = vld [vmem:[%s367 + $0x7a] sm:$0xff]
        %v1363 = vld [vmem:[%s367 + $0x82] sm:$0xff]
        %v1364 = vld [vmem:[%s367 + $0x92] sm:$0xff]
        %v1365 = vld [vmem:[%s367 + $0x9a] sm:$0xff]
        %v1366 = vld [vmem:[%s367 + $0xaa] sm:$0xff]
        %v1367 = vld [vmem:[%s367 + $0xb2] sm:$0xff]
        %v1368 = vld [vmem:[%s1261 + $0x2] sm:$0x1]
        %v1369 = vlaneseq
        %v1370 = vshrl.u32 %v1369, 7
        %v1371 = vsub.s32 0, %v1370
        %v1372 = vrot.slane %v1368, %v1371
        %v1373 = vmul.f32 %v1352, %v1372
        %v1374 = vmul.f32 %v1353, %v1372
        %v1375 = vmul.f32 %v1354, %v1372
        %v1376 = vmul.f32 %v1355, %v1372
        %v1377 = vmul.f32 %v1356, %v1372
        %v1378 = vmul.f32 %v1357, %v1372
        %v1379 = vmul.f32 %v1358, %v1372
        %v1380 = vmul.f32 %v1359, %v1372
        %v1381 = vmul.f32 %v1360, %v1372
        %v1382 = vmul.f32 %v1361, %v1372
        %v1383 = vmul.f32 %v1362, %v1372
        %v1384 = vmul.f32 %v1363, %v1372
        %v1385 = vmul.f32 %v1364, %v1372
        %v1386 = vmul.f32 %v1365, %v1372
        %v1387 = vmul.f32 %v1366, %v1372
        %v1388 = vmul.f32 %v1367, %v1372
        %v1389 = vadd.f32 %v1336, %v1373
        %v1390 = vadd.f32 %v1337, %v1374
        %v1391 = vadd.f32 %v1338, %v1375
        %v1392 = vadd.f32 %v1339, %v1376
        %v1393 = vadd.f32 %v1340, %v1377
        %v1394 = vadd.f32 %v1341, %v1378
        %v1395 = vadd.f32 %v1342, %v1379
        %v1396 = vadd.f32 %v1343, %v1380
        %v1397 = vadd.f32 %v1344, %v1381
        %v1398 = vadd.f32 %v1345, %v1382
        %v1399 = vadd.f32 %v1346, %v1383
        %v1400 = vadd.f32 %v1347, %v1384
        %v1401 = vadd.f32 %v1348, %v1385
        %v1402 = vadd.f32 %v1349, %v1386
        %v1403 = vadd.f32 %v1350, %v1387
        %v1404 = vadd.f32 %v1351, %v1388
        %v1405 = vld [vmem:[%s367 + $0x3] sm:$0xff]
        %v1406 = vld [vmem:[%s367 + $0xb] sm:$0xff]
        %v1407 = vld [vmem:[%s367 + $0x1b] sm:$0xff]
        %v1408 = vld [vmem:[%s367 + $0x23] sm:$0xff]
        %v1409 = vld [vmem:[%s367 + $0x33] sm:$0xff]
        %v1410 = vld [vmem:[%s367 + $0x3b] sm:$0xff]
        %v1411 = vld [vmem:[%s367 + $0x4b] sm:$0xff]
        %v1412 = vld [vmem:[%s367 + $0x53] sm:$0xff]
        %v1413 = vld [vmem:[%s367 + $0x63] sm:$0xff]
        %v1414 = vld [vmem:[%s367 + $0x6b] sm:$0xff]
        %v1415 = vld [vmem:[%s367 + $0x7b] sm:$0xff]
        %v1416 = vld [vmem:[%s367 + $0x83] sm:$0xff]
        %v1417 = vld [vmem:[%s367 + $0x93] sm:$0xff]
        %v1418 = vld [vmem:[%s367 + $0x9b] sm:$0xff]
        %v1419 = vld [vmem:[%s367 + $0xab] sm:$0xff]
        %v1420 = vld [vmem:[%s367 + $0xb3] sm:$0xff]
        %v1421 = vld [vmem:[%s1261 + $0x3] sm:$0x1]
        %v1422 = vlaneseq
        %v1423 = vshrl.u32 %v1422, 7
        %v1424 = vsub.s32 0, %v1423
        %v1425 = vrot.slane %v1421, %v1424
        %v1426 = vmul.f32 %v1405, %v1425
        %v1427 = vmul.f32 %v1406, %v1425
        %v1428 = vmul.f32 %v1407, %v1425
        %v1429 = vmul.f32 %v1408, %v1425
        %v1430 = vmul.f32 %v1409, %v1425
        %v1431 = vmul.f32 %v1410, %v1425
        %v1432 = vmul.f32 %v1411, %v1425
        %v1433 = vmul.f32 %v1412, %v1425
        %v1434 = vmul.f32 %v1413, %v1425
        %v1435 = vmul.f32 %v1414, %v1425
        %v1436 = vmul.f32 %v1415, %v1425
        %v1437 = vmul.f32 %v1416, %v1425
        %v1438 = vmul.f32 %v1417, %v1425
        %v1439 = vmul.f32 %v1418, %v1425
        %v1440 = vmul.f32 %v1419, %v1425
        %v1441 = vmul.f32 %v1420, %v1425
        %v1442 = vadd.f32 %v1389, %v1426
        %v1443 = vadd.f32 %v1390, %v1427
        %v1444 = vadd.f32 %v1391, %v1428
        %v1445 = vadd.f32 %v1392, %v1429
        %v1446 = vadd.f32 %v1393, %v1430
        %v1447 = vadd.f32 %v1394, %v1431
        %v1448 = vadd.f32 %v1395, %v1432
        %v1449 = vadd.f32 %v1396, %v1433
        %v1450 = vadd.f32 %v1397, %v1434
        %v1451 = vadd.f32 %v1398, %v1435
        %v1452 = vadd.f32 %v1399, %v1436
        %v1453 = vadd.f32 %v1400, %v1437
        %v1454 = vadd.f32 %v1401, %v1438
        %v1455 = vadd.f32 %v1402, %v1439
        %v1456 = vadd.f32 %v1403, %v1440
        %v1457 = vadd.f32 %v1404, %v1441
        %v1458 = vld [vmem:[%s367 + $0x4] sm:$0xff]
        %v1459 = vld [vmem:[%s367 + $0xc] sm:$0xff]
        %v1460 = vld [vmem:[%s367 + $0x1c] sm:$0xff]
        %v1461 = vld [vmem:[%s367 + $0x24] sm:$0xff]
        %v1462 = vld [vmem:[%s367 + $0x34] sm:$0xff]
        %v1463 = vld [vmem:[%s367 + $0x3c] sm:$0xff]
        %v1464 = vld [vmem:[%s367 + $0x4c] sm:$0xff]
        %v1465 = vld [vmem:[%s367 + $0x54] sm:$0xff]
        %v1466 = vld [vmem:[%s367 + $0x64] sm:$0xff]
        %v1467 = vld [vmem:[%s367 + $0x6c] sm:$0xff]
        %v1468 = vld [vmem:[%s367 + $0x7c] sm:$0xff]
        %v1469 = vld [vmem:[%s367 + $0x84] sm:$0xff]
        %v1470 = vld [vmem:[%s367 + $0x94] sm:$0xff]
        %v1471 = vld [vmem:[%s367 + $0x9c] sm:$0xff]
        %v1472 = vld [vmem:[%s367 + $0xac] sm:$0xff]
        %v1473 = vld [vmem:[%s367 + $0xb4] sm:$0xff]
        %v1474 = vld [vmem:[%s1261 + $0x4] sm:$0x1]
        %v1475 = vlaneseq
        %v1476 = vshrl.u32 %v1475, 7
        %v1477 = vsub.s32 0, %v1476
        %v1478 = vrot.slane %v1474, %v1477
        %v1479 = vmul.f32 %v1458, %v1478
        %v1480 = vmul.f32 %v1459, %v1478
        %v1481 = vmul.f32 %v1460, %v1478
        %v1482 = vmul.f32 %v1461, %v1478
        %v1483 = vmul.f32 %v1462, %v1478
        %v1484 = vmul.f32 %v1463, %v1478
        %v1485 = vmul.f32 %v1464, %v1478
        %v1486 = vmul.f32 %v1465, %v1478
        %v1487 = vmul.f32 %v1466, %v1478
        %v1488 = vmul.f32 %v1467, %v1478
        %v1489 = vmul.f32 %v1468, %v1478
        %v1490 = vmul.f32 %v1469, %v1478
        %v1491 = vmul.f32 %v1470, %v1478
        %v1492 = vmul.f32 %v1471, %v1478
        %v1493 = vmul.f32 %v1472, %v1478
        %v1494 = vmul.f32 %v1473, %v1478
        %v1495 = vadd.f32 %v1442, %v1479
        %v1496 = vadd.f32 %v1443, %v1480
        %v1497 = vadd.f32 %v1444, %v1481
        %v1498 = vadd.f32 %v1445, %v1482
        %v1499 = vadd.f32 %v1446, %v1483
        %v1500 = vadd.f32 %v1447, %v1484
        %v1501 = vadd.f32 %v1448, %v1485
        %v1502 = vadd.f32 %v1449, %v1486
        %v1503 = vadd.f32 %v1450, %v1487
        %v1504 = vadd.f32 %v1451, %v1488
        %v1505 = vadd.f32 %v1452, %v1489
        %v1506 = vadd.f32 %v1453, %v1490
        %v1507 = vadd.f32 %v1454, %v1491
        %v1508 = vadd.f32 %v1455, %v1492
        %v1509 = vadd.f32 %v1456, %v1493
        %v1510 = vadd.f32 %v1457, %v1494
        %s1511 = scalar_lea.vmem [#allocation2], 72
        %v1512 = vld [vmem:[%s1511] sm:$0xff]
        %v1513 = vld [vmem:[%s1511 + $0x8] sm:$0xff]
        %v1514 = vld [vmem:[%s1511 + $0x18] sm:$0xff]
        %v1515 = vld [vmem:[%s1511 + $0x20] sm:$0xff]
        %v1516 = vld [vmem:[%s1511 + $0x30] sm:$0xff]
        %v1517 = vld [vmem:[%s1511 + $0x38] sm:$0xff]
        %v1518 = vld [vmem:[%s1511 + $0x48] sm:$0xff]
        %v1519 = vld [vmem:[%s1511 + $0x50] sm:$0xff]
        %v1520 = vld [vmem:[%s1511 + $0x60] sm:$0xff]
        %v1521 = vld [vmem:[%s1511 + $0x68] sm:$0xff]
        %v1522 = vld [vmem:[%s1511 + $0x78] sm:$0xff]
        %v1523 = vld [vmem:[%s1511 + $0x80] sm:$0xff]
        %v1524 = vld [vmem:[%s1511 + $0x90] sm:$0xff]
        %v1525 = vld [vmem:[%s1511 + $0x98] sm:$0xff]
        %v1526 = vld [vmem:[%s1511 + $0xa8] sm:$0xff]
        %v1527 = vld [vmem:[%s1511 + $0xb0] sm:$0xff]
        %s1528 = scalar_lea.vmem [#allocation7], 24
        %v1529 = vld [vmem:[%s1528] sm:$0x1]
        %v1530 = vlaneseq
        %v1531 = vshrl.u32 %v1530, 7
        %v1532 = vsub.s32 0, %v1531
        %v1533 = vrot.slane %v1529, %v1532
        %v1534 = vmul.f32 %v1512, %v1533
        %v1535 = vmul.f32 %v1513, %v1533
        %v1536 = vmul.f32 %v1514, %v1533
        %v1537 = vmul.f32 %v1515, %v1533
        %v1538 = vmul.f32 %v1516, %v1533
        %v1539 = vmul.f32 %v1517, %v1533
        %v1540 = vmul.f32 %v1518, %v1533
        %v1541 = vmul.f32 %v1519, %v1533
        %v1542 = vmul.f32 %v1520, %v1533
        %v1543 = vmul.f32 %v1521, %v1533
        %v1544 = vmul.f32 %v1522, %v1533
        %v1545 = vmul.f32 %v1523, %v1533
        %v1546 = vmul.f32 %v1524, %v1533
        %v1547 = vmul.f32 %v1525, %v1533
        %v1548 = vmul.f32 %v1526, %v1533
        %v1549 = vmul.f32 %v1527, %v1533
        %v1550 = vadd.f32 %v1495, %v1534
        %v1551 = vadd.f32 %v1496, %v1535
        %v1552 = vadd.f32 %v1497, %v1536
        %v1553 = vadd.f32 %v1498, %v1537
        %v1554 = vadd.f32 %v1499, %v1538
        %v1555 = vadd.f32 %v1500, %v1539
        %v1556 = vadd.f32 %v1501, %v1540
        %v1557 = vadd.f32 %v1502, %v1541
        %v1558 = vadd.f32 %v1503, %v1542
        %v1559 = vadd.f32 %v1504, %v1543
        %v1560 = vadd.f32 %v1505, %v1544
        %v1561 = vadd.f32 %v1506, %v1545
        %v1562 = vadd.f32 %v1507, %v1546
        %v1563 = vadd.f32 %v1508, %v1547
        %v1564 = vadd.f32 %v1509, %v1548
        %v1565 = vadd.f32 %v1510, %v1549
        %v1566 = vld [vmem:[%s1511 + $0x1] sm:$0xff]
        %v1567 = vld [vmem:[%s1511 + $0x9] sm:$0xff]
        %v1568 = vld [vmem:[%s1511 + $0x19] sm:$0xff]
        %v1569 = vld [vmem:[%s1511 + $0x21] sm:$0xff]
        %v1570 = vld [vmem:[%s1511 + $0x31] sm:$0xff]
        %v1571 = vld [vmem:[%s1511 + $0x39] sm:$0xff]
        %v1572 = vld [vmem:[%s1511 + $0x49] sm:$0xff]
        %v1573 = vld [vmem:[%s1511 + $0x51] sm:$0xff]
        %v1574 = vld [vmem:[%s1511 + $0x61] sm:$0xff]
        %v1575 = vld [vmem:[%s1511 + $0x69] sm:$0xff]
        %v1576 = vld [vmem:[%s1511 + $0x79] sm:$0xff]
        %v1577 = vld [vmem:[%s1511 + $0x81] sm:$0xff]
        %v1578 = vld [vmem:[%s1511 + $0x91] sm:$0xff]
        %v1579 = vld [vmem:[%s1511 + $0x99] sm:$0xff]
        %v1580 = vld [vmem:[%s1511 + $0xa9] sm:$0xff]
        %v1581 = vld [vmem:[%s1511 + $0xb1] sm:$0xff]
        %v1582 = vld [vmem:[%s1528 + $0x1] sm:$0x1]
        %v1583 = vlaneseq
        %v1584 = vshrl.u32 %v1583, 7
        %v1585 = vsub.s32 0, %v1584
        %v1586 = vrot.slane %v1582, %v1585
        %v1587 = vmul.f32 %v1566, %v1586
        %v1588 = vmul.f32 %v1567, %v1586
        %v1589 = vmul.f32 %v1568, %v1586
        %v1590 = vmul.f32 %v1569, %v1586
        %v1591 = vmul.f32 %v1570, %v1586
        %v1592 = vmul.f32 %v1571, %v1586
        %v1593 = vmul.f32 %v1572, %v1586
        %v1594 = vmul.f32 %v1573, %v1586
        %v1595 = vmul.f32 %v1574, %v1586
        %v1596 = vmul.f32 %v1575, %v1586
        %v1597 = vmul.f32 %v1576, %v1586
        %v1598 = vmul.f32 %v1577, %v1586
        %v1599 = vmul.f32 %v1578, %v1586
        %v1600 = vmul.f32 %v1579, %v1586
        %v1601 = vmul.f32 %v1580, %v1586
        %v1602 = vmul.f32 %v1581, %v1586
        %v1603 = vadd.f32 %v1550, %v1587
        %v1604 = vadd.f32 %v1551, %v1588
        %v1605 = vadd.f32 %v1552, %v1589
        %v1606 = vadd.f32 %v1553, %v1590
        %v1607 = vadd.f32 %v1554, %v1591
        %v1608 = vadd.f32 %v1555, %v1592
        %v1609 = vadd.f32 %v1556, %v1593
        %v1610 = vadd.f32 %v1557, %v1594
        %v1611 = vadd.f32 %v1558, %v1595
        %v1612 = vadd.f32 %v1559, %v1596
        %v1613 = vadd.f32 %v1560, %v1597
        %v1614 = vadd.f32 %v1561, %v1598
        %v1615 = vadd.f32 %v1562, %v1599
        %v1616 = vadd.f32 %v1563, %v1600
        %v1617 = vadd.f32 %v1564, %v1601
        %v1618 = vadd.f32 %v1565, %v1602
        %v1619 = vld [vmem:[%s1511 + $0x2] sm:$0xff]
        %v1620 = vld [vmem:[%s1511 + $0xa] sm:$0xff]
        %v1621 = vld [vmem:[%s1511 + $0x1a] sm:$0xff]
        %v1622 = vld [vmem:[%s1511 + $0x22] sm:$0xff]
        %v1623 = vld [vmem:[%s1511 + $0x32] sm:$0xff]
        %v1624 = vld [vmem:[%s1511 + $0x3a] sm:$0xff]
        %v1625 = vld [vmem:[%s1511 + $0x4a] sm:$0xff]
        %v1626 = vld [vmem:[%s1511 + $0x52] sm:$0xff]
        %v1627 = vld [vmem:[%s1511 + $0x62] sm:$0xff]
        %v1628 = vld [vmem:[%s1511 + $0x6a] sm:$0xff]
        %v1629 = vld [vmem:[%s1511 + $0x7a] sm:$0xff]
        %v1630 = vld [vmem:[%s1511 + $0x82] sm:$0xff]
        %v1631 = vld [vmem:[%s1511 + $0x92] sm:$0xff]
        %v1632 = vld [vmem:[%s1511 + $0x9a] sm:$0xff]
        %v1633 = vld [vmem:[%s1511 + $0xaa] sm:$0xff]
        %v1634 = vld [vmem:[%s1511 + $0xb2] sm:$0xff]
        %v1635 = vld [vmem:[%s1528 + $0x2] sm:$0x1]
        %v1636 = vlaneseq
        %v1637 = vshrl.u32 %v1636, 7
        %v1638 = vsub.s32 0, %v1637
        %v1639 = vrot.slane %v1635, %v1638
        %v1640 = vmul.f32 %v1619, %v1639
        %v1641 = vmul.f32 %v1620, %v1639
        %v1642 = vmul.f32 %v1621, %v1639
        %v1643 = vmul.f32 %v1622, %v1639
        %v1644 = vmul.f32 %v1623, %v1639
        %v1645 = vmul.f32 %v1624, %v1639
        %v1646 = vmul.f32 %v1625, %v1639
        %v1647 = vmul.f32 %v1626, %v1639
        %v1648 = vmul.f32 %v1627, %v1639
        %v1649 = vmul.f32 %v1628, %v1639
        %v1650 = vmul.f32 %v1629, %v1639
        %v1651 = vmul.f32 %v1630, %v1639
        %v1652 = vmul.f32 %v1631, %v1639
        %v1653 = vmul.f32 %v1632, %v1639
        %v1654 = vmul.f32 %v1633, %v1639
        %v1655 = vmul.f32 %v1634, %v1639
        %v1656 = vadd.f32 %v1603, %v1640
        %v1657 = vadd.f32 %v1604, %v1641
        %v1658 = vadd.f32 %v1605, %v1642
        %v1659 = vadd.f32 %v1606, %v1643
        %v1660 = vadd.f32 %v1607, %v1644
        %v1661 = vadd.f32 %v1608, %v1645
        %v1662 = vadd.f32 %v1609, %v1646
        %v1663 = vadd.f32 %v1610, %v1647
        %v1664 = vadd.f32 %v1611, %v1648
        %v1665 = vadd.f32 %v1612, %v1649
        %v1666 = vadd.f32 %v1613, %v1650
        %v1667 = vadd.f32 %v1614, %v1651
        %v1668 = vadd.f32 %v1615, %v1652
        %v1669 = vadd.f32 %v1616, %v1653
        %v1670 = vadd.f32 %v1617, %v1654
        %v1671 = vadd.f32 %v1618, %v1655
        %v1672 = vld [vmem:[%s1511 + $0x3] sm:$0xff]
        %v1673 = vld [vmem:[%s1511 + $0xb] sm:$0xff]
        %v1674 = vld [vmem:[%s1511 + $0x1b] sm:$0xff]
        %v1675 = vld [vmem:[%s1511 + $0x23] sm:$0xff]
        %v1676 = vld [vmem:[%s1511 + $0x33] sm:$0xff]
        %v1677 = vld [vmem:[%s1511 + $0x3b] sm:$0xff]
        %v1678 = vld [vmem:[%s1511 + $0x4b] sm:$0xff]
        %v1679 = vld [vmem:[%s1511 + $0x53] sm:$0xff]
        %v1680 = vld [vmem:[%s1511 + $0x63] sm:$0xff]
        %v1681 = vld [vmem:[%s1511 + $0x6b] sm:$0xff]
        %v1682 = vld [vmem:[%s1511 + $0x7b] sm:$0xff]
        %v1683 = vld [vmem:[%s1511 + $0x83] sm:$0xff]
        %v1684 = vld [vmem:[%s1511 + $0x93] sm:$0xff]
        %v1685 = vld [vmem:[%s1511 + $0x9b] sm:$0xff]
        %v1686 = vld [vmem:[%s1511 + $0xab] sm:$0xff]
        %v1687 = vld [vmem:[%s1511 + $0xb3] sm:$0xff]
        %v1688 = vld [vmem:[%s1528 + $0x3] sm:$0x1]
        %v1689 = vlaneseq
        %v1690 = vshrl.u32 %v1689, 7
        %v1691 = vsub.s32 0, %v1690
        %v1692 = vrot.slane %v1688, %v1691
        %v1693 = vmul.f32 %v1672, %v1692
        %v1694 = vmul.f32 %v1673, %v1692
        %v1695 = vmul.f32 %v1674, %v1692
        %v1696 = vmul.f32 %v1675, %v1692
        %v1697 = vmul.f32 %v1676, %v1692
        %v1698 = vmul.f32 %v1677, %v1692
        %v1699 = vmul.f32 %v1678, %v1692
        %v1700 = vmul.f32 %v1679, %v1692
        %v1701 = vmul.f32 %v1680, %v1692
        %v1702 = vmul.f32 %v1681, %v1692
        %v1703 = vmul.f32 %v1682, %v1692
        %v1704 = vmul.f32 %v1683, %v1692
        %v1705 = vmul.f32 %v1684, %v1692
        %v1706 = vmul.f32 %v1685, %v1692
        %v1707 = vmul.f32 %v1686, %v1692
        %v1708 = vmul.f32 %v1687, %v1692
        %v1709 = vadd.f32 %v1656, %v1693
        %v1710 = vadd.f32 %v1657, %v1694
        %v1711 = vadd.f32 %v1658, %v1695
        %v1712 = vadd.f32 %v1659, %v1696
        %v1713 = vadd.f32 %v1660, %v1697
        %v1714 = vadd.f32 %v1661, %v1698
        %v1715 = vadd.f32 %v1662, %v1699
        %v1716 = vadd.f32 %v1663, %v1700
        %v1717 = vadd.f32 %v1664, %v1701
        %v1718 = vadd.f32 %v1665, %v1702
        %v1719 = vadd.f32 %v1666, %v1703
        %v1720 = vadd.f32 %v1667, %v1704
        %v1721 = vadd.f32 %v1668, %v1705
        %v1722 = vadd.f32 %v1669, %v1706
        %v1723 = vadd.f32 %v1670, %v1707
        %v1724 = vadd.f32 %v1671, %v1708
        %v1725 = vld [vmem:[%s1511 + $0x4] sm:$0xff]
        %v1726 = vld [vmem:[%s1511 + $0xc] sm:$0xff]
        %v1727 = vld [vmem:[%s1511 + $0x1c] sm:$0xff]
        %v1728 = vld [vmem:[%s1511 + $0x24] sm:$0xff]
        %v1729 = vld [vmem:[%s1511 + $0x34] sm:$0xff]
        %v1730 = vld [vmem:[%s1511 + $0x3c] sm:$0xff]
        %v1731 = vld [vmem:[%s1511 + $0x4c] sm:$0xff]
        %v1732 = vld [vmem:[%s1511 + $0x54] sm:$0xff]
        %v1733 = vld [vmem:[%s1511 + $0x64] sm:$0xff]
        %v1734 = vld [vmem:[%s1511 + $0x6c] sm:$0xff]
        %v1735 = vld [vmem:[%s1511 + $0x7c] sm:$0xff]
        %v1736 = vld [vmem:[%s1511 + $0x84] sm:$0xff]
        %v1737 = vld [vmem:[%s1511 + $0x94] sm:$0xff]
        %v1738 = vld [vmem:[%s1511 + $0x9c] sm:$0xff]
        %v1739 = vld [vmem:[%s1511 + $0xac] sm:$0xff]
        %v1740 = vld [vmem:[%s1511 + $0xb4] sm:$0xff]
        %v1741 = vld [vmem:[%s1528 + $0x4] sm:$0x1]
        %v1742 = vlaneseq
        %v1743 = vshrl.u32 %v1742, 7
        %v1744 = vsub.s32 0, %v1743
        %v1745 = vrot.slane %v1741, %v1744
        %v1746 = vmul.f32 %v1725, %v1745
        %v1747 = vmul.f32 %v1726, %v1745
        %v1748 = vmul.f32 %v1727, %v1745
        %v1749 = vmul.f32 %v1728, %v1745
        %v1750 = vmul.f32 %v1729, %v1745
        %v1751 = vmul.f32 %v1730, %v1745
        %v1752 = vmul.f32 %v1731, %v1745
        %v1753 = vmul.f32 %v1732, %v1745
        %v1754 = vmul.f32 %v1733, %v1745
        %v1755 = vmul.f32 %v1734, %v1745
        %v1756 = vmul.f32 %v1735, %v1745
        %v1757 = vmul.f32 %v1736, %v1745
        %v1758 = vmul.f32 %v1737, %v1745
        %v1759 = vmul.f32 %v1738, %v1745
        %v1760 = vmul.f32 %v1739, %v1745
        %v1761 = vmul.f32 %v1740, %v1745
        %v1762 = vadd.f32 %v1709, %v1746
        %v1763 = vadd.f32 %v1710, %v1747
        %v1764 = vadd.f32 %v1711, %v1748
        %v1765 = vadd.f32 %v1712, %v1749
        %v1766 = vadd.f32 %v1713, %v1750
        %v1767 = vadd.f32 %v1714, %v1751
        %v1768 = vadd.f32 %v1715, %v1752
        %v1769 = vadd.f32 %v1716, %v1753
        %v1770 = vadd.f32 %v1717, %v1754
        %v1771 = vadd.f32 %v1718, %v1755
        %v1772 = vadd.f32 %v1719, %v1756
        %v1773 = vadd.f32 %v1720, %v1757
        %v1774 = vadd.f32 %v1721, %v1758
        %v1775 = vadd.f32 %v1722, %v1759
        %v1776 = vadd.f32 %v1723, %v1760
        %v1777 = vadd.f32 %v1724, %v1761
        %s1778 = scalar_lea.vmem [#allocation2], 96
        %v1779 = vld [vmem:[%s1778] sm:$0xff]
        %v1780 = vld [vmem:[%s1778 + $0x8] sm:$0xff]
        %v1781 = vld [vmem:[%s1778 + $0x18] sm:$0xff]
        %v1782 = vld [vmem:[%s1778 + $0x20] sm:$0xff]
        %v1783 = vld [vmem:[%s1778 + $0x30] sm:$0xff]
        %v1784 = vld [vmem:[%s1778 + $0x38] sm:$0xff]
        %v1785 = vld [vmem:[%s1778 + $0x48] sm:$0xff]
        %v1786 = vld [vmem:[%s1778 + $0x50] sm:$0xff]
        %v1787 = vld [vmem:[%s1778 + $0x60] sm:$0xff]
        %v1788 = vld [vmem:[%s1778 + $0x68] sm:$0xff]
        %v1789 = vld [vmem:[%s1778 + $0x78] sm:$0xff]
        %v1790 = vld [vmem:[%s1778 + $0x80] sm:$0xff]
        %v1791 = vld [vmem:[%s1778 + $0x90] sm:$0xff]
        %v1792 = vld [vmem:[%s1778 + $0x98] sm:$0xff]
        %v1793 = vld [vmem:[%s1778 + $0xa8] sm:$0xff]
        %v1794 = vld [vmem:[%s1778 + $0xb0] sm:$0xff]
        %s1795 = scalar_lea.vmem [#allocation7], 32
        %v1796 = vld [vmem:[%s1795] sm:$0x1]
        %v1797 = vlaneseq
        %v1798 = vshrl.u32 %v1797, 7
        %v1799 = vsub.s32 0, %v1798
        %v1800 = vrot.slane %v1796, %v1799
        %v1801 = vmul.f32 %v1779, %v1800
        %v1802 = vmul.f32 %v1780, %v1800
        %v1803 = vmul.f32 %v1781, %v1800
        %v1804 = vmul.f32 %v1782, %v1800
        %v1805 = vmul.f32 %v1783, %v1800
        %v1806 = vmul.f32 %v1784, %v1800
        %v1807 = vmul.f32 %v1785, %v1800
        %v1808 = vmul.f32 %v1786, %v1800
        %v1809 = vmul.f32 %v1787, %v1800
        %v1810 = vmul.f32 %v1788, %v1800
        %v1811 = vmul.f32 %v1789, %v1800
        %v1812 = vmul.f32 %v1790, %v1800
        %v1813 = vmul.f32 %v1791, %v1800
        %v1814 = vmul.f32 %v1792, %v1800
        %v1815 = vmul.f32 %v1793, %v1800
        %v1816 = vmul.f32 %v1794, %v1800
        %v1817 = vadd.f32 %v1762, %v1801
        %v1818 = vadd.f32 %v1763, %v1802
        %v1819 = vadd.f32 %v1764, %v1803
        %v1820 = vadd.f32 %v1765, %v1804
        %v1821 = vadd.f32 %v1766, %v1805
        %v1822 = vadd.f32 %v1767, %v1806
        %v1823 = vadd.f32 %v1768, %v1807
        %v1824 = vadd.f32 %v1769, %v1808
        %v1825 = vadd.f32 %v1770, %v1809
        %v1826 = vadd.f32 %v1771, %v1810
        %v1827 = vadd.f32 %v1772, %v1811
        %v1828 = vadd.f32 %v1773, %v1812
        %v1829 = vadd.f32 %v1774, %v1813
        %v1830 = vadd.f32 %v1775, %v1814
        %v1831 = vadd.f32 %v1776, %v1815
        %v1832 = vadd.f32 %v1777, %v1816
        %v1833 = vld [vmem:[%s1778 + $0x1] sm:$0xff]
        %v1834 = vld [vmem:[%s1778 + $0x9] sm:$0xff]
        %v1835 = vld [vmem:[%s1778 + $0x19] sm:$0xff]
        %v1836 = vld [vmem:[%s1778 + $0x21] sm:$0xff]
        %v1837 = vld [vmem:[%s1778 + $0x31] sm:$0xff]
        %v1838 = vld [vmem:[%s1778 + $0x39] sm:$0xff]
        %v1839 = vld [vmem:[%s1778 + $0x49] sm:$0xff]
        %v1840 = vld [vmem:[%s1778 + $0x51] sm:$0xff]
        %v1841 = vld [vmem:[%s1778 + $0x61] sm:$0xff]
        %v1842 = vld [vmem:[%s1778 + $0x69] sm:$0xff]
        %v1843 = vld [vmem:[%s1778 + $0x79] sm:$0xff]
        %v1844 = vld [vmem:[%s1778 + $0x81] sm:$0xff]
        %v1845 = vld [vmem:[%s1778 + $0x91] sm:$0xff]
        %v1846 = vld [vmem:[%s1778 + $0x99] sm:$0xff]
        %v1847 = vld [vmem:[%s1778 + $0xa9] sm:$0xff]
        %v1848 = vld [vmem:[%s1778 + $0xb1] sm:$0xff]
        %v1849 = vld [vmem:[%s1795 + $0x1] sm:$0x1]
        %v1850 = vlaneseq
        %v1851 = vshrl.u32 %v1850, 7
        %v1852 = vsub.s32 0, %v1851
        %v1853 = vrot.slane %v1849, %v1852
        %v1854 = vmul.f32 %v1833, %v1853
        %v1855 = vmul.f32 %v1834, %v1853
        %v1856 = vmul.f32 %v1835, %v1853
        %v1857 = vmul.f32 %v1836, %v1853
        %v1858 = vmul.f32 %v1837, %v1853
        %v1859 = vmul.f32 %v1838, %v1853
        %v1860 = vmul.f32 %v1839, %v1853
        %v1861 = vmul.f32 %v1840, %v1853
        %v1862 = vmul.f32 %v1841, %v1853
        %v1863 = vmul.f32 %v1842, %v1853
        %v1864 = vmul.f32 %v1843, %v1853
        %v1865 = vmul.f32 %v1844, %v1853
        %v1866 = vmul.f32 %v1845, %v1853
        %v1867 = vmul.f32 %v1846, %v1853
        %v1868 = vmul.f32 %v1847, %v1853
        %v1869 = vmul.f32 %v1848, %v1853
        %v1870 = vadd.f32 %v1817, %v1854
        %v1871 = vadd.f32 %v1818, %v1855
        %v1872 = vadd.f32 %v1819, %v1856
        %v1873 = vadd.f32 %v1820, %v1857
        %v1874 = vadd.f32 %v1821, %v1858
        %v1875 = vadd.f32 %v1822, %v1859
        %v1876 = vadd.f32 %v1823, %v1860
        %v1877 = vadd.f32 %v1824, %v1861
        %v1878 = vadd.f32 %v1825, %v1862
        %v1879 = vadd.f32 %v1826, %v1863
        %v1880 = vadd.f32 %v1827, %v1864
        %v1881 = vadd.f32 %v1828, %v1865
        %v1882 = vadd.f32 %v1829, %v1866
        %v1883 = vadd.f32 %v1830, %v1867
        %v1884 = vadd.f32 %v1831, %v1868
        %v1885 = vadd.f32 %v1832, %v1869
        %v1886 = vld [vmem:[%s1778 + $0x2] sm:$0xff]
        %v1887 = vld [vmem:[%s1778 + $0xa] sm:$0xff]
        %v1888 = vld [vmem:[%s1778 + $0x1a] sm:$0xff]
        %v1889 = vld [vmem:[%s1778 + $0x22] sm:$0xff]
        %v1890 = vld [vmem:[%s1778 + $0x32] sm:$0xff]
        %v1891 = vld [vmem:[%s1778 + $0x3a] sm:$0xff]
        %v1892 = vld [vmem:[%s1778 + $0x4a] sm:$0xff]
        %v1893 = vld [vmem:[%s1778 + $0x52] sm:$0xff]
        %v1894 = vld [vmem:[%s1778 + $0x62] sm:$0xff]
        %v1895 = vld [vmem:[%s1778 + $0x6a] sm:$0xff]
        %v1896 = vld [vmem:[%s1778 + $0x7a] sm:$0xff]
        %v1897 = vld [vmem:[%s1778 + $0x82] sm:$0xff]
        %v1898 = vld [vmem:[%s1778 + $0x92] sm:$0xff]
        %v1899 = vld [vmem:[%s1778 + $0x9a] sm:$0xff]
        %v1900 = vld [vmem:[%s1778 + $0xaa] sm:$0xff]
        %v1901 = vld [vmem:[%s1778 + $0xb2] sm:$0xff]
        %v1902 = vld [vmem:[%s1795 + $0x2] sm:$0x1]
        %v1903 = vlaneseq
        %v1904 = vshrl.u32 %v1903, 7
        %v1905 = vsub.s32 0, %v1904
        %v1906 = vrot.slane %v1902, %v1905
        %v1907 = vmul.f32 %v1886, %v1906
        %v1908 = vmul.f32 %v1887, %v1906
        %v1909 = vmul.f32 %v1888, %v1906
        %v1910 = vmul.f32 %v1889, %v1906
        %v1911 = vmul.f32 %v1890, %v1906
        %v1912 = vmul.f32 %v1891, %v1906
        %v1913 = vmul.f32 %v1892, %v1906
        %v1914 = vmul.f32 %v1893, %v1906
        %v1915 = vmul.f32 %v1894, %v1906
        %v1916 = vmul.f32 %v1895, %v1906
        %v1917 = vmul.f32 %v1896, %v1906
        %v1918 = vmul.f32 %v1897, %v1906
        %v1919 = vmul.f32 %v1898, %v1906
        %v1920 = vmul.f32 %v1899, %v1906
        %v1921 = vmul.f32 %v1900, %v1906
        %v1922 = vmul.f32 %v1901, %v1906
        %v1923 = vadd.f32 %v1870, %v1907
        %v1924 = vadd.f32 %v1871, %v1908
        %v1925 = vadd.f32 %v1872, %v1909
        %v1926 = vadd.f32 %v1873, %v1910
        %v1927 = vadd.f32 %v1874, %v1911
        %v1928 = vadd.f32 %v1875, %v1912
        %v1929 = vadd.f32 %v1876, %v1913
        %v1930 = vadd.f32 %v1877, %v1914
        %v1931 = vadd.f32 %v1878, %v1915
        %v1932 = vadd.f32 %v1879, %v1916
        %v1933 = vadd.f32 %v1880, %v1917
        %v1934 = vadd.f32 %v1881, %v1918
        %v1935 = vadd.f32 %v1882, %v1919
        %v1936 = vadd.f32 %v1883, %v1920
        %v1937 = vadd.f32 %v1884, %v1921
        %v1938 = vadd.f32 %v1885, %v1922
        %v1939 = vld [vmem:[%s1778 + $0x3] sm:$0xff]
        %v1940 = vld [vmem:[%s1778 + $0xb] sm:$0xff]
        %v1941 = vld [vmem:[%s1778 + $0x1b] sm:$0xff]
        %v1942 = vld [vmem:[%s1778 + $0x23] sm:$0xff]
        %v1943 = vld [vmem:[%s1778 + $0x33] sm:$0xff]
        %v1944 = vld [vmem:[%s1778 + $0x3b] sm:$0xff]
        %v1945 = vld [vmem:[%s1778 + $0x4b] sm:$0xff]
        %v1946 = vld [vmem:[%s1778 + $0x53] sm:$0xff]
        %v1947 = vld [vmem:[%s1778 + $0x63] sm:$0xff]
        %v1948 = vld [vmem:[%s1778 + $0x6b] sm:$0xff]
        %v1949 = vld [vmem:[%s1778 + $0x7b] sm:$0xff]
        %v1950 = vld [vmem:[%s1778 + $0x83] sm:$0xff]
        %v1951 = vld [vmem:[%s1778 + $0x93] sm:$0xff]
        %v1952 = vld [vmem:[%s1778 + $0x9b] sm:$0xff]
        %v1953 = vld [vmem:[%s1778 + $0xab] sm:$0xff]
        %v1954 = vld [vmem:[%s1778 + $0xb3] sm:$0xff]
        %v1955 = vld [vmem:[%s1795 + $0x3] sm:$0x1]
        %v1956 = vlaneseq
        %v1957 = vshrl.u32 %v1956, 7
        %v1958 = vsub.s32 0, %v1957
        %v1959 = vrot.slane %v1955, %v1958
        %v1960 = vmul.f32 %v1939, %v1959
        %v1961 = vmul.f32 %v1940, %v1959
        %v1962 = vmul.f32 %v1941, %v1959
        %v1963 = vmul.f32 %v1942, %v1959
        %v1964 = vmul.f32 %v1943, %v1959
        %v1965 = vmul.f32 %v1944, %v1959
        %v1966 = vmul.f32 %v1945, %v1959
        %v1967 = vmul.f32 %v1946, %v1959
        %v1968 = vmul.f32 %v1947, %v1959
        %v1969 = vmul.f32 %v1948, %v1959
        %v1970 = vmul.f32 %v1949, %v1959
        %v1971 = vmul.f32 %v1950, %v1959
        %v1972 = vmul.f32 %v1951, %v1959
        %v1973 = vmul.f32 %v1952, %v1959
        %v1974 = vmul.f32 %v1953, %v1959
        %v1975 = vmul.f32 %v1954, %v1959
        %v1976 = vadd.f32 %v1923, %v1960
        %v1977 = vadd.f32 %v1924, %v1961
        %v1978 = vadd.f32 %v1925, %v1962
        %v1979 = vadd.f32 %v1926, %v1963
        %v1980 = vadd.f32 %v1927, %v1964
        %v1981 = vadd.f32 %v1928, %v1965
        %v1982 = vadd.f32 %v1929, %v1966
        %v1983 = vadd.f32 %v1930, %v1967
        %v1984 = vadd.f32 %v1931, %v1968
        %v1985 = vadd.f32 %v1932, %v1969
        %v1986 = vadd.f32 %v1933, %v1970
        %v1987 = vadd.f32 %v1934, %v1971
        %v1988 = vadd.f32 %v1935, %v1972
        %v1989 = vadd.f32 %v1936, %v1973
        %v1990 = vadd.f32 %v1937, %v1974
        %v1991 = vadd.f32 %v1938, %v1975
        %v1992 = vld [vmem:[%s1778 + $0x4] sm:$0xff]
        %v1993 = vld [vmem:[%s1778 + $0xc] sm:$0xff]
        %v1994 = vld [vmem:[%s1778 + $0x1c] sm:$0xff]
        %v1995 = vld [vmem:[%s1778 + $0x24] sm:$0xff]
        %v1996 = vld [vmem:[%s1778 + $0x34] sm:$0xff]
        %v1997 = vld [vmem:[%s1778 + $0x3c] sm:$0xff]
        %v1998 = vld [vmem:[%s1778 + $0x4c] sm:$0xff]
        %v1999 = vld [vmem:[%s1778 + $0x54] sm:$0xff]
        %v2000 = vld [vmem:[%s1778 + $0x64] sm:$0xff]
        %v2001 = vld [vmem:[%s1778 + $0x6c] sm:$0xff]
        %v2002 = vld [vmem:[%s1778 + $0x7c] sm:$0xff]
        %v2003 = vld [vmem:[%s1778 + $0x84] sm:$0xff]
        %v2004 = vld [vmem:[%s1778 + $0x94] sm:$0xff]
        %v2005 = vld [vmem:[%s1778 + $0x9c] sm:$0xff]
        %v2006 = vld [vmem:[%s1778 + $0xac] sm:$0xff]
        %v2007 = vld [vmem:[%s1778 + $0xb4] sm:$0xff]
        %v2008 = vld [vmem:[%s1795 + $0x4] sm:$0x1]
        %v2009 = vlaneseq
        %v2010 = vshrl.u32 %v2009, 7
        %v2011 = vsub.s32 0, %v2010
        %v2012 = vrot.slane %v2008, %v2011
        %v2013 = vmul.f32 %v1992, %v2012
        %v2014 = vmul.f32 %v1993, %v2012
        %v2015 = vmul.f32 %v1994, %v2012
        %v2016 = vmul.f32 %v1995, %v2012
        %v2017 = vmul.f32 %v1996, %v2012
        %v2018 = vmul.f32 %v1997, %v2012
        %v2019 = vmul.f32 %v1998, %v2012
        %v2020 = vmul.f32 %v1999, %v2012
        %v2021 = vmul.f32 %v2000, %v2012
        %v2022 = vmul.f32 %v2001, %v2012
        %v2023 = vmul.f32 %v2002, %v2012
        %v2024 = vmul.f32 %v2003, %v2012
        %v2025 = vmul.f32 %v2004, %v2012
        %v2026 = vmul.f32 %v2005, %v2012
        %v2027 = vmul.f32 %v2006, %v2012
        %v2028 = vmul.f32 %v2007, %v2012
        %v2029 = vadd.f32 %v1976, %v2013
        %v2030 = vadd.f32 %v1977, %v2014
        %v2031 = vadd.f32 %v1978, %v2015
        %v2032 = vadd.f32 %v1979, %v2016
        %v2033 = vadd.f32 %v1980, %v2017
        %v2034 = vadd.f32 %v1981, %v2018
        %v2035 = vadd.f32 %v1982, %v2019
        %v2036 = vadd.f32 %v1983, %v2020
        %v2037 = vadd.f32 %v1984, %v2021
        %v2038 = vadd.f32 %v1985, %v2022
        %v2039 = vadd.f32 %v1986, %v2023
        %v2040 = vadd.f32 %v1987, %v2024
        %v2041 = vadd.f32 %v1988, %v2025
        %v2042 = vadd.f32 %v1989, %v2026
        %v2043 = vadd.f32 %v1990, %v2027
        %v2044 = vadd.f32 %v1991, %v2028
        %v2045 = vmul.f32 %v2029, 0.5
        %v2046 = vmul.f32 %v2030, 0.5
        %v2047 = vmul.f32 %v2031, 0.5
        %v2048 = vmul.f32 %v2032, 0.5
        %v2049 = vmul.f32 %v2033, 0.5
        %v2050 = vmul.f32 %v2034, 0.5
        %v2051 = vmul.f32 %v2035, 0.5
        %v2052 = vmul.f32 %v2036, 0.5
        %v2053 = vmul.f32 %v2037, 0.5
        %v2054 = vmul.f32 %v2038, 0.5
        %v2055 = vmul.f32 %v2039, 0.5
        %v2056 = vmul.f32 %v2040, 0.5
        %v2057 = vmul.f32 %v2041, 0.5
        %v2058 = vmul.f32 %v2042, 0.5
        %v2059 = vmul.f32 %v2043, 0.5
        %v2060 = vmul.f32 %v2044, 0.5
        %v2061 = vmul.f32 %v2029, 0.70710677
        %v2062 = vmul.f32 %v2030, 0.70710677
        %v2063 = vmul.f32 %v2031, 0.70710677
        %v2064 = vmul.f32 %v2032, 0.70710677
        %v2065 = vmul.f32 %v2033, 0.70710677
        %v2066 = vmul.f32 %v2034, 0.70710677
        %v2067 = vmul.f32 %v2035, 0.70710677
        %v2068 = vmul.f32 %v2036, 0.70710677
        %v2069 = vmul.f32 %v2037, 0.70710677
        %v2070 = vmul.f32 %v2038, 0.70710677
        %v2071 = vmul.f32 %v2039, 0.70710677
        %v2072 = vmul.f32 %v2040, 0.70710677
        %v2073 = vmul.f32 %v2041, 0.70710677
        %v2074 = vmul.f32 %v2042, 0.70710677
        %v2075 = vmul.f32 %v2043, 0.70710677
        %v2076 = vmul.f32 %v2044, 0.70710677
        %v2077 = verf.f32.pop %v2061
        %v2078 = verf.f32.pop %v2062
        %v2079 = verf.f32.pop %v2063
        %v2080 = verf.f32.pop %v2064
        %v2081 = verf.f32.pop %v2065
        %v2082 = verf.f32.pop %v2066
        %v2083 = verf.f32.pop %v2067
        %v2084 = verf.f32.pop %v2068
        %v2085 = verf.f32.pop %v2069
        %v2086 = verf.f32.pop %v2070
        %v2087 = verf.f32.pop %v2071
        %v2088 = verf.f32.pop %v2072
        %v2089 = verf.f32.pop %v2073
        %v2090 = verf.f32.pop %v2074
        %v2091 = verf.f32.pop %v2075
        %v2092 = verf.f32.pop %v2076
        %v2093 = vadd.f32 %v2077, 1.0
        %v2094 = vadd.f32 %v2078, 1.0
        %v2095 = vadd.f32 %v2079, 1.0
        %v2096 = vadd.f32 %v2080, 1.0
        %v2097 = vadd.f32 %v2081, 1.0
        %v2098 = vadd.f32 %v2082, 1.0
        %v2099 = vadd.f32 %v2083, 1.0
        %v2100 = vadd.f32 %v2084, 1.0
        %v2101 = vadd.f32 %v2085, 1.0
        %v2102 = vadd.f32 %v2086, 1.0
        %v2103 = vadd.f32 %v2087, 1.0
        %v2104 = vadd.f32 %v2088, 1.0
        %v2105 = vadd.f32 %v2089, 1.0
        %v2106 = vadd.f32 %v2090, 1.0
        %v2107 = vadd.f32 %v2091, 1.0
        %v2108 = vadd.f32 %v2092, 1.0
        %v2109 = vmul.f32 %v2045, %v2093
        %v2110 = vmul.f32 %v2046, %v2094
        %v2111 = vmul.f32 %v2047, %v2095
        %v2112 = vmul.f32 %v2048, %v2096
        %v2113 = vmul.f32 %v2049, %v2097
        %v2114 = vmul.f32 %v2050, %v2098
        %v2115 = vmul.f32 %v2051, %v2099
        %v2116 = vmul.f32 %v2052, %v2100
        %v2117 = vmul.f32 %v2053, %v2101
        %v2118 = vmul.f32 %v2054, %v2102
        %v2119 = vmul.f32 %v2055, %v2103
        %v2120 = vmul.f32 %v2056, %v2104
        %v2121 = vmul.f32 %v2057, %v2105
        %v2122 = vmul.f32 %v2058, %v2106
        %v2123 = vmul.f32 %v2059, %v2107
        %v2124 = vmul.f32 %v2060, %v2108
        %2125 = vst [vmem:[#allocation3] sm:$0xff] %v2109
        %2126 = vst [vmem:[#allocation3 + $0x8] sm:$0xff] %v2110
        %2127 = vst [vmem:[#allocation3 + $0x10] sm:$0xff] %v2111
        %2128 = vst [vmem:[#allocation3 + $0x18] sm:$0xff] %v2112
        %2129 = vst [vmem:[#allocation3 + $0x20] sm:$0xff] %v2113
        %2130 = vst [vmem:[#allocation3 + $0x28] sm:$0xff] %v2114
        %2131 = vst [vmem:[#allocation3 + $0x30] sm:$0xff] %v2115
        %2132 = vst [vmem:[#allocation3 + $0x38] sm:$0xff] %v2116
        %2133 = vst [vmem:[#allocation3 + $0x40] sm:$0xff] %v2117
        %2134 = vst [vmem:[#allocation3 + $0x48] sm:$0xff] %v2118
        %2135 = vst [vmem:[#allocation3 + $0x50] sm:$0xff] %v2119
        %2136 = vst [vmem:[#allocation3 + $0x58] sm:$0xff] %v2120
        %2137 = vst [vmem:[#allocation3 + $0x60] sm:$0xff] %v2121
        %2138 = vst [vmem:[#allocation3 + $0x68] sm:$0xff] %v2122
        %2139 = vst [vmem:[#allocation3 + $0x70] sm:$0xff] %v2123
        %2140 = vst [vmem:[#allocation3 + $0x78] sm:$0xff] %v2124
        %v2141 = vadd.f32 %v2109, %v2110
        %v2142 = vadd.f32 %v2141, %v2111
        %v2143 = vadd.f32 %v2142, %v2112
        %v2144 = vadd.f32 %v2143, %v2113
        %v2145 = vadd.f32 %v2144, %v2114
        %v2146 = vadd.f32 %v2145, %v2115
        %v2147 = vadd.f32 %v2146, %v2116
        %v2148 = vadd.f32 %v2147, %v2117
        %v2149 = vadd.f32 %v2148, %v2118
        %v2150 = vadd.f32 %v2149, %v2119
        %v2151 = vadd.f32 %v2150, %v2120
        %v2152 = vadd.f32 %v2151, %v2121
        %v2153 = vadd.f32 %v2152, %v2122
        %v2154 = vadd.f32 %v2153, %v2123
        %v2155 = vadd.f32 %v2154, %v2124
        %2156 = vadd.xlane.f32.xlu0 %v2155
        %v2157 = vpop.xlane.xlu0 %2156
        %v2158 = vrot.slane %v2157, 4
        %v2159 = vadd.f32 %v2157, %v2158
        %v2160 = vrot.slane %v2159, 2
        %v2161 = vadd.f32 %v2159, %v2160
        %v2162 = vrot.slane %v2161, 1
        %v2163 = vadd.f32 %v2161, %v2162
        %s2164 = vtos %v2163
        %s2165 = sadd.f32 %s2164, 0.0
        %v2166 = vmul.f32 %v2109, %v2109
        %v2167 = vmul.f32 %v2110, %v2110
        %v2168 = vmul.f32 %v2111, %v2111
        %v2169 = vmul.f32 %v2112, %v2112
        %v2170 = vmul.f32 %v2113, %v2113
        %v2171 = vmul.f32 %v2114, %v2114
        %v2172 = vmul.f32 %v2115, %v2115
        %v2173 = vmul.f32 %v2116, %v2116
        %v2174 = vmul.f32 %v2117, %v2117
        %v2175 = vmul.f32 %v2118, %v2118
        %v2176 = vmul.f32 %v2119, %v2119
        %v2177 = vmul.f32 %v2120, %v2120
        %v2178 = vmul.f32 %v2121, %v2121
        %v2179 = vmul.f32 %v2122, %v2122
        %v2180 = vmul.f32 %v2123, %v2123
        %v2181 = vmul.f32 %v2124, %v2124
        %v2182 = vadd.f32 %v2166, %v2167
        %v2183 = vadd.f32 %v2182, %v2168
        %v2184 = vadd.f32 %v2183, %v2169
        %v2185 = vadd.f32 %v2184, %v2170
        %v2186 = vadd.f32 %v2185, %v2171
        %v2187 = vadd.f32 %v2186, %v2172
        %v2188 = vadd.f32 %v2187, %v2173
        %v2189 = vadd.f32 %v2188, %v2174
        %v2190 = vadd.f32 %v2189, %v2175
        %v2191 = vadd.f32 %v2190, %v2176
        %v2192 = vadd.f32 %v2191, %v2177
        %v2193 = vadd.f32 %v2192, %v2178
        %v2194 = vadd.f32 %v2193, %v2179
        %v2195 = vadd.f32 %v2194, %v2180
        %v2196 = vadd.f32 %v2195, %v2181
        %2197 = vadd.xlane.f32.xlu0 %v2196
        %v2198 = vpop.xlane.xlu0 %2197
        %v2199 = vrot.slane %v2198, 4
        %v2200 = vadd.f32 %v2198, %v2199
        %v2201 = vrot.slane %v2200, 2
        %v2202 = vadd.f32 %v2200, %v2201
        %v2203 = vrot.slane %v2202, 1
        %v2204 = vadd.f32 %v2202, %v2203
        %s2205 = vtos %v2204
        %s2206 = sadd.f32 %s2205, 0.0
        %s2207 = scalar_lea.vmem [#allocation2], 192
        %v2208 = vld [vmem:[%s2207] sm:$0xff]
        %v2209 = vld [vmem:[%s2207 + $0x8] sm:$0xff]
        %v2210 = vld [vmem:[%s2207 + $0x18] sm:$0xff]
        %v2211 = vld [vmem:[%s2207 + $0x20] sm:$0xff]
        %v2212 = vld [vmem:[%s2207 + $0x30] sm:$0xff]
        %v2213 = vld [vmem:[%s2207 + $0x38] sm:$0xff]
        %v2214 = vld [vmem:[%s2207 + $0x48] sm:$0xff]
        %v2215 = vld [vmem:[%s2207 + $0x50] sm:$0xff]
        %v2216 = vld [vmem:[%s2207 + $0x60] sm:$0xff]
        %v2217 = vld [vmem:[%s2207 + $0x68] sm:$0xff]
        %v2218 = vld [vmem:[%s2207 + $0x78] sm:$0xff]
        %v2219 = vld [vmem:[%s2207 + $0x80] sm:$0xff]
        %v2220 = vld [vmem:[%s2207 + $0x90] sm:$0xff]
        %v2221 = vld [vmem:[%s2207 + $0x98] sm:$0xff]
        %v2222 = vld [vmem:[%s2207 + $0xa8] sm:$0xff]
        %v2223 = vld [vmem:[%s2207 + $0xb0] sm:$0xff]
        %v2224 = vld [vmem:[#allocation7] sm:$0x1]
        %v2225 = vlaneseq
        %v2226 = vshrl.u32 %v2225, 7
        %v2227 = vsub.s32 0, %v2226
        %v2228 = vrot.slane %v2224, %v2227
        %v2229 = vmul.f32 %v2208, %v2228
        %v2230 = vmul.f32 %v2209, %v2228
        %v2231 = vmul.f32 %v2210, %v2228
        %v2232 = vmul.f32 %v2211, %v2228
        %v2233 = vmul.f32 %v2212, %v2228
        %v2234 = vmul.f32 %v2213, %v2228
        %v2235 = vmul.f32 %v2214, %v2228
        %v2236 = vmul.f32 %v2215, %v2228
        %v2237 = vmul.f32 %v2216, %v2228
        %v2238 = vmul.f32 %v2217, %v2228
        %v2239 = vmul.f32 %v2218, %v2228
        %v2240 = vmul.f32 %v2219, %v2228
        %v2241 = vmul.f32 %v2220, %v2228
        %v2242 = vmul.f32 %v2221, %v2228
        %v2243 = vmul.f32 %v2222, %v2228
        %v2244 = vmul.f32 %v2223, %v2228
        %v2245 = vld [vmem:[%s2207 + $0x1] sm:$0xff]
        %v2246 = vld [vmem:[%s2207 + $0x9] sm:$0xff]
        %v2247 = vld [vmem:[%s2207 + $0x19] sm:$0xff]
        %v2248 = vld [vmem:[%s2207 + $0x21] sm:$0xff]
        %v2249 = vld [vmem:[%s2207 + $0x31] sm:$0xff]
        %v2250 = vld [vmem:[%s2207 + $0x39] sm:$0xff]
        %v2251 = vld [vmem:[%s2207 + $0x49] sm:$0xff]
        %v2252 = vld [vmem:[%s2207 + $0x51] sm:$0xff]
        %v2253 = vld [vmem:[%s2207 + $0x61] sm:$0xff]
        %v2254 = vld [vmem:[%s2207 + $0x69] sm:$0xff]
        %v2255 = vld [vmem:[%s2207 + $0x79] sm:$0xff]
        %v2256 = vld [vmem:[%s2207 + $0x81] sm:$0xff]
        %v2257 = vld [vmem:[%s2207 + $0x91] sm:$0xff]
        %v2258 = vld [vmem:[%s2207 + $0x99] sm:$0xff]
        %v2259 = vld [vmem:[%s2207 + $0xa9] sm:$0xff]
        %v2260 = vld [vmem:[%s2207 + $0xb1] sm:$0xff]
        %v2261 = vld [vmem:[#allocation7 + $0x1] sm:$0x1]
        %v2262 = vlaneseq
        %v2263 = vshrl.u32 %v2262, 7
        %v2264 = vsub.s32 0, %v2263
        %v2265 = vrot.slane %v2261, %v2264
        %v2266 = vmul.f32 %v2245, %v2265
        %v2267 = vmul.f32 %v2246, %v2265
        %v2268 = vmul.f32 %v2247, %v2265
        %v2269 = vmul.f32 %v2248, %v2265
        %v2270 = vmul.f32 %v2249, %v2265
        %v2271 = vmul.f32 %v2250, %v2265
        %v2272 = vmul.f32 %v2251, %v2265
        %v2273 = vmul.f32 %v2252, %v2265
        %v2274 = vmul.f32 %v2253, %v2265
        %v2275 = vmul.f32 %v2254, %v2265
        %v2276 = vmul.f32 %v2255, %v2265
        %v2277 = vmul.f32 %v2256, %v2265
        %v2278 = vmul.f32 %v2257, %v2265
        %v2279 = vmul.f32 %v2258, %v2265
        %v2280 = vmul.f32 %v2259, %v2265
        %v2281 = vmul.f32 %v2260, %v2265
        %v2282 = vadd.f32 %v2229, %v2266
        %v2283 = vadd.f32 %v2230, %v2267
        %v2284 = vadd.f32 %v2231, %v2268
        %v2285 = vadd.f32 %v2232, %v2269
        %v2286 = vadd.f32 %v2233, %v2270
        %v2287 = vadd.f32 %v2234, %v2271
        %v2288 = vadd.f32 %v2235, %v2272
        %v2289 = vadd.f32 %v2236, %v2273
        %v2290 = vadd.f32 %v2237, %v2274
        %v2291 = vadd.f32 %v2238, %v2275
        %v2292 = vadd.f32 %v2239, %v2276
        %v2293 = vadd.f32 %v2240, %v2277
        %v2294 = vadd.f32 %v2241, %v2278
        %v2295 = vadd.f32 %v2242, %v2279
        %v2296 = vadd.f32 %v2243, %v2280
        %v2297 = vadd.f32 %v2244, %v2281
        %v2298 = vld [vmem:[%s2207 + $0x2] sm:$0xff]
        %v2299 = vld [vmem:[%s2207 + $0xa] sm:$0xff]
        %v2300 = vld [vmem:[%s2207 + $0x1a] sm:$0xff]
        %v2301 = vld [vmem:[%s2207 + $0x22] sm:$0xff]
        %v2302 = vld [vmem:[%s2207 + $0x32] sm:$0xff]
        %v2303 = vld [vmem:[%s2207 + $0x3a] sm:$0xff]
        %v2304 = vld [vmem:[%s2207 + $0x4a] sm:$0xff]
        %v2305 = vld [vmem:[%s2207 + $0x52] sm:$0xff]
        %v2306 = vld [vmem:[%s2207 + $0x62] sm:$0xff]
        %v2307 = vld [vmem:[%s2207 + $0x6a] sm:$0xff]
        %v2308 = vld [vmem:[%s2207 + $0x7a] sm:$0xff]
        %v2309 = vld [vmem:[%s2207 + $0x82] sm:$0xff]
        %v2310 = vld [vmem:[%s2207 + $0x92] sm:$0xff]
        %v2311 = vld [vmem:[%s2207 + $0x9a] sm:$0xff]
        %v2312 = vld [vmem:[%s2207 + $0xaa] sm:$0xff]
        %v2313 = vld [vmem:[%s2207 + $0xb2] sm:$0xff]
        %v2314 = vld [vmem:[#allocation7 + $0x2] sm:$0x1]
        %v2315 = vlaneseq
        %v2316 = vshrl.u32 %v2315, 7
        %v2317 = vsub.s32 0, %v2316
        %v2318 = vrot.slane %v2314, %v2317
        %v2319 = vmul.f32 %v2298, %v2318
        %v2320 = vmul.f32 %v2299, %v2318
        %v2321 = vmul.f32 %v2300, %v2318
        %v2322 = vmul.f32 %v2301, %v2318
        %v2323 = vmul.f32 %v2302, %v2318
        %v2324 = vmul.f32 %v2303, %v2318
        %v2325 = vmul.f32 %v2304, %v2318
        %v2326 = vmul.f32 %v2305, %v2318
        %v2327 = vmul.f32 %v2306, %v2318
        %v2328 = vmul.f32 %v2307, %v2318
        %v2329 = vmul.f32 %v2308, %v2318
        %v2330 = vmul.f32 %v2309, %v2318
        %v2331 = vmul.f32 %v2310, %v2318
        %v2332 = vmul.f32 %v2311, %v2318
        %v2333 = vmul.f32 %v2312, %v2318
        %v2334 = vmul.f32 %v2313, %v2318
        %v2335 = vadd.f32 %v2282, %v2319
        %v2336 = vadd.f32 %v2283, %v2320
        %v2337 = vadd.f32 %v2284, %v2321
        %v2338 = vadd.f32 %v2285, %v2322
        %v2339 = vadd.f32 %v2286, %v2323
        %v2340 = vadd.f32 %v2287, %v2324
        %v2341 = vadd.f32 %v2288, %v2325
        %v2342 = vadd.f32 %v2289, %v2326
        %v2343 = vadd.f32 %v2290, %v2327
        %v2344 = vadd.f32 %v2291, %v2328
        %v2345 = vadd.f32 %v2292, %v2329
        %v2346 = vadd.f32 %v2293, %v2330
        %v2347 = vadd.f32 %v2294, %v2331
        %v2348 = vadd.f32 %v2295, %v2332
        %v2349 = vadd.f32 %v2296, %v2333
        %v2350 = vadd.f32 %v2297, %v2334
        %v2351 = vld [vmem:[%s2207 + $0x3] sm:$0xff]
        %v2352 = vld [vmem:[%s2207 + $0xb] sm:$0xff]
        %v2353 = vld [vmem:[%s2207 + $0x1b] sm:$0xff]
        %v2354 = vld [vmem:[%s2207 + $0x23] sm:$0xff]
        %v2355 = vld [vmem:[%s2207 + $0x33] sm:$0xff]
        %v2356 = vld [vmem:[%s2207 + $0x3b] sm:$0xff]
        %v2357 = vld [vmem:[%s2207 + $0x4b] sm:$0xff]
        %v2358 = vld [vmem:[%s2207 + $0x53] sm:$0xff]
        %v2359 = vld [vmem:[%s2207 + $0x63] sm:$0xff]
        %v2360 = vld [vmem:[%s2207 + $0x6b] sm:$0xff]
        %v2361 = vld [vmem:[%s2207 + $0x7b] sm:$0xff]
        %v2362 = vld [vmem:[%s2207 + $0x83] sm:$0xff]
        %v2363 = vld [vmem:[%s2207 + $0x93] sm:$0xff]
        %v2364 = vld [vmem:[%s2207 + $0x9b] sm:$0xff]
        %v2365 = vld [vmem:[%s2207 + $0xab] sm:$0xff]
        %v2366 = vld [vmem:[%s2207 + $0xb3] sm:$0xff]
        %v2367 = vld [vmem:[#allocation7 + $0x3] sm:$0x1]
        %v2368 = vlaneseq
        %v2369 = vshrl.u32 %v2368, 7
        %v2370 = vsub.s32 0, %v2369
        %v2371 = vrot.slane %v2367, %v2370
        %v2372 = vmul.f32 %v2351, %v2371
        %v2373 = vmul.f32 %v2352, %v2371
        %v2374 = vmul.f32 %v2353, %v2371
        %v2375 = vmul.f32 %v2354, %v2371
        %v2376 = vmul.f32 %v2355, %v2371
        %v2377 = vmul.f32 %v2356, %v2371
        %v2378 = vmul.f32 %v2357, %v2371
        %v2379 = vmul.f32 %v2358, %v2371
        %v2380 = vmul.f32 %v2359, %v2371
        %v2381 = vmul.f32 %v2360, %v2371
        %v2382 = vmul.f32 %v2361, %v2371
        %v2383 = vmul.f32 %v2362, %v2371
        %v2384 = vmul.f32 %v2363, %v2371
        %v2385 = vmul.f32 %v2364, %v2371
        %v2386 = vmul.f32 %v2365, %v2371
        %v2387 = vmul.f32 %v2366, %v2371
        %v2388 = vadd.f32 %v2335, %v2372
        %v2389 = vadd.f32 %v2336, %v2373
        %v2390 = vadd.f32 %v2337, %v2374
        %v2391 = vadd.f32 %v2338, %v2375
        %v2392 = vadd.f32 %v2339, %v2376
        %v2393 = vadd.f32 %v2340, %v2377
        %v2394 = vadd.f32 %v2341, %v2378
        %v2395 = vadd.f32 %v2342, %v2379
        %v2396 = vadd.f32 %v2343, %v2380
        %v2397 = vadd.f32 %v2344, %v2381
        %v2398 = vadd.f32 %v2345, %v2382
        %v2399 = vadd.f32 %v2346, %v2383
        %v2400 = vadd.f32 %v2347, %v2384
        %v2401 = vadd.f32 %v2348, %v2385
        %v2402 = vadd.f32 %v2349, %v2386
        %v2403 = vadd.f32 %v2350, %v2387
        %v2404 = vld [vmem:[%s2207 + $0x4] sm:$0xff]
        %v2405 = vld [vmem:[%s2207 + $0xc] sm:$0xff]
        %v2406 = vld [vmem:[%s2207 + $0x1c] sm:$0xff]
        %v2407 = vld [vmem:[%s2207 + $0x24] sm:$0xff]
        %v2408 = vld [vmem:[%s2207 + $0x34] sm:$0xff]
        %v2409 = vld [vmem:[%s2207 + $0x3c] sm:$0xff]
        %v2410 = vld [vmem:[%s2207 + $0x4c] sm:$0xff]
        %v2411 = vld [vmem:[%s2207 + $0x54] sm:$0xff]
        %v2412 = vld [vmem:[%s2207 + $0x64] sm:$0xff]
        %v2413 = vld [vmem:[%s2207 + $0x6c] sm:$0xff]
        %v2414 = vld [vmem:[%s2207 + $0x7c] sm:$0xff]
        %v2415 = vld [vmem:[%s2207 + $0x84] sm:$0xff]
        %v2416 = vld [vmem:[%s2207 + $0x94] sm:$0xff]
        %v2417 = vld [vmem:[%s2207 + $0x9c] sm:$0xff]
        %v2418 = vld [vmem:[%s2207 + $0xac] sm:$0xff]
        %v2419 = vld [vmem:[%s2207 + $0xb4] sm:$0xff]
        %v2420 = vld [vmem:[#allocation7 + $0x4] sm:$0x1]
        %v2421 = vlaneseq
        %v2422 = vshrl.u32 %v2421, 7
        %v2423 = vsub.s32 0, %v2422
        %v2424 = vrot.slane %v2420, %v2423
        %v2425 = vmul.f32 %v2404, %v2424
        %v2426 = vmul.f32 %v2405, %v2424
        %v2427 = vmul.f32 %v2406, %v2424
        %v2428 = vmul.f32 %v2407, %v2424
        %v2429 = vmul.f32 %v2408, %v2424
        %v2430 = vmul.f32 %v2409, %v2424
        %v2431 = vmul.f32 %v2410, %v2424
        %v2432 = vmul.f32 %v2411, %v2424
        %v2433 = vmul.f32 %v2412, %v2424
        %v2434 = vmul.f32 %v2413, %v2424
        %v2435 = vmul.f32 %v2414, %v2424
        %v2436 = vmul.f32 %v2415, %v2424
        %v2437 = vmul.f32 %v2416, %v2424
        %v2438 = vmul.f32 %v2417, %v2424
        %v2439 = vmul.f32 %v2418, %v2424
        %v2440 = vmul.f32 %v2419, %v2424
        %v2441 = vadd.f32 %v2388, %v2425
        %v2442 = vadd.f32 %v2389, %v2426
        %v2443 = vadd.f32 %v2390, %v2427
        %v2444 = vadd.f32 %v2391, %v2428
        %v2445 = vadd.f32 %v2392, %v2429
        %v2446 = vadd.f32 %v2393, %v2430
        %v2447 = vadd.f32 %v2394, %v2431
        %v2448 = vadd.f32 %v2395, %v2432
        %v2449 = vadd.f32 %v2396, %v2433
        %v2450 = vadd.f32 %v2397, %v2434
        %v2451 = vadd.f32 %v2398, %v2435
        %v2452 = vadd.f32 %v2399, %v2436
        %v2453 = vadd.f32 %v2400, %v2437
        %v2454 = vadd.f32 %v2401, %v2438
        %v2455 = vadd.f32 %v2402, %v2439
        %v2456 = vadd.f32 %v2403, %v2440
        %s2457 = scalar_lea.vmem [#allocation2], 216
        %v2458 = vld [vmem:[%s2457] sm:$0xff]
        %v2459 = vld [vmem:[%s2457 + $0x8] sm:$0xff]
        %v2460 = vld [vmem:[%s2457 + $0x18] sm:$0xff]
        %v2461 = vld [vmem:[%s2457 + $0x20] sm:$0xff]
        %v2462 = vld [vmem:[%s2457 + $0x30] sm:$0xff]
        %v2463 = vld [vmem:[%s2457 + $0x38] sm:$0xff]
        %v2464 = vld [vmem:[%s2457 + $0x48] sm:$0xff]
        %v2465 = vld [vmem:[%s2457 + $0x50] sm:$0xff]
        %v2466 = vld [vmem:[%s2457 + $0x60] sm:$0xff]
        %v2467 = vld [vmem:[%s2457 + $0x68] sm:$0xff]
        %v2468 = vld [vmem:[%s2457 + $0x78] sm:$0xff]
        %v2469 = vld [vmem:[%s2457 + $0x80] sm:$0xff]
        %v2470 = vld [vmem:[%s2457 + $0x90] sm:$0xff]
        %v2471 = vld [vmem:[%s2457 + $0x98] sm:$0xff]
        %v2472 = vld [vmem:[%s2457 + $0xa8] sm:$0xff]
        %v2473 = vld [vmem:[%s2457 + $0xb0] sm:$0xff]
        %v2474 = vld [vmem:[%s995] sm:$0x1]
        %v2475 = vlaneseq
        %v2476 = vshrl.u32 %v2475, 7
        %v2477 = vsub.s32 0, %v2476
        %v2478 = vrot.slane %v2474, %v2477
        %v2479 = vmul.f32 %v2458, %v2478
        %v2480 = vmul.f32 %v2459, %v2478
        %v2481 = vmul.f32 %v2460, %v2478
        %v2482 = vmul.f32 %v2461, %v2478
        %v2483 = vmul.f32 %v2462, %v2478
        %v2484 = vmul.f32 %v2463, %v2478
        %v2485 = vmul.f32 %v2464, %v2478
        %v2486 = vmul.f32 %v2465, %v2478
        %v2487 = vmul.f32 %v2466, %v2478
        %v2488 = vmul.f32 %v2467, %v2478
        %v2489 = vmul.f32 %v2468, %v2478
        %v2490 = vmul.f32 %v2469, %v2478
        %v2491 = vmul.f32 %v2470, %v2478
        %v2492 = vmul.f32 %v2471, %v2478
        %v2493 = vmul.f32 %v2472, %v2478
        %v2494 = vmul.f32 %v2473, %v2478
        %v2495 = vadd.f32 %v2441, %v2479
        %v2496 = vadd.f32 %v2442, %v2480
        %v2497 = vadd.f32 %v2443, %v2481
        %v2498 = vadd.f32 %v2444, %v2482
        %v2499 = vadd.f32 %v2445, %v2483
        %v2500 = vadd.f32 %v2446, %v2484
        %v2501 = vadd.f32 %v2447, %v2485
        %v2502 = vadd.f32 %v2448, %v2486
        %v2503 = vadd.f32 %v2449, %v2487
        %v2504 = vadd.f32 %v2450, %v2488
        %v2505 = vadd.f32 %v2451, %v2489
        %v2506 = vadd.f32 %v2452, %v2490
        %v2507 = vadd.f32 %v2453, %v2491
        %v2508 = vadd.f32 %v2454, %v2492
        %v2509 = vadd.f32 %v2455, %v2493
        %v2510 = vadd.f32 %v2456, %v2494
        %v2511 = vld [vmem:[%s2457 + $0x1] sm:$0xff]
        %v2512 = vld [vmem:[%s2457 + $0x9] sm:$0xff]
        %v2513 = vld [vmem:[%s2457 + $0x19] sm:$0xff]
        %v2514 = vld [vmem:[%s2457 + $0x21] sm:$0xff]
        %v2515 = vld [vmem:[%s2457 + $0x31] sm:$0xff]
        %v2516 = vld [vmem:[%s2457 + $0x39] sm:$0xff]
        %v2517 = vld [vmem:[%s2457 + $0x49] sm:$0xff]
        %v2518 = vld [vmem:[%s2457 + $0x51] sm:$0xff]
        %v2519 = vld [vmem:[%s2457 + $0x61] sm:$0xff]
        %v2520 = vld [vmem:[%s2457 + $0x69] sm:$0xff]
        %v2521 = vld [vmem:[%s2457 + $0x79] sm:$0xff]
        %v2522 = vld [vmem:[%s2457 + $0x81] sm:$0xff]
        %v2523 = vld [vmem:[%s2457 + $0x91] sm:$0xff]
        %v2524 = vld [vmem:[%s2457 + $0x99] sm:$0xff]
        %v2525 = vld [vmem:[%s2457 + $0xa9] sm:$0xff]
        %v2526 = vld [vmem:[%s2457 + $0xb1] sm:$0xff]
        %v2527 = vld [vmem:[%s995 + $0x1] sm:$0x1]
        %v2528 = vlaneseq
        %v2529 = vshrl.u32 %v2528, 7
        %v2530 = vsub.s32 0, %v2529
        %v2531 = vrot.slane %v2527, %v2530
        %v2532 = vmul.f32 %v2511, %v2531
        %v2533 = vmul.f32 %v2512, %v2531
        %v2534 = vmul.f32 %v2513, %v2531
        %v2535 = vmul.f32 %v2514, %v2531
        %v2536 = vmul.f32 %v2515, %v2531
        %v2537 = vmul.f32 %v2516, %v2531
        %v2538 = vmul.f32 %v2517, %v2531
        %v2539 = vmul.f32 %v2518, %v2531
        %v2540 = vmul.f32 %v2519, %v2531
        %v2541 = vmul.f32 %v2520, %v2531
        %v2542 = vmul.f32 %v2521, %v2531
        %v2543 = vmul.f32 %v2522, %v2531
        %v2544 = vmul.f32 %v2523, %v2531
        %v2545 = vmul.f32 %v2524, %v2531
        %v2546 = vmul.f32 %v2525, %v2531
        %v2547 = vmul.f32 %v2526, %v2531
        %v2548 = vadd.f32 %v2495, %v2532
        %v2549 = vadd.f32 %v2496, %v2533
        %v2550 = vadd.f32 %v2497, %v2534
        %v2551 = vadd.f32 %v2498, %v2535
        %v2552 = vadd.f32 %v2499, %v2536
        %v2553 = vadd.f32 %v2500, %v2537
        %v2554 = vadd.f32 %v2501, %v2538
        %v2555 = vadd.f32 %v2502, %v2539
        %v2556 = vadd.f32 %v2503, %v2540
        %v2557 = vadd.f32 %v2504, %v2541
        %v2558 = vadd.f32 %v2505, %v2542
        %v2559 = vadd.f32 %v2506, %v2543
        %v2560 = vadd.f32 %v2507, %v2544
        %v2561 = vadd.f32 %v2508, %v2545
        %v2562 = vadd.f32 %v2509, %v2546
        %v2563 = vadd.f32 %v2510, %v2547
        %v2564 = vld [vmem:[%s2457 + $0x2] sm:$0xff]
        %v2565 = vld [vmem:[%s2457 + $0xa] sm:$0xff]
        %v2566 = vld [vmem:[%s2457 + $0x1a] sm:$0xff]
        %v2567 = vld [vmem:[%s2457 + $0x22] sm:$0xff]
        %v2568 = vld [vmem:[%s2457 + $0x32] sm:$0xff]
        %v2569 = vld [vmem:[%s2457 + $0x3a] sm:$0xff]
        %v2570 = vld [vmem:[%s2457 + $0x4a] sm:$0xff]
        %v2571 = vld [vmem:[%s2457 + $0x52] sm:$0xff]
        %v2572 = vld [vmem:[%s2457 + $0x62] sm:$0xff]
        %v2573 = vld [vmem:[%s2457 + $0x6a] sm:$0xff]
        %v2574 = vld [vmem:[%s2457 + $0x7a] sm:$0xff]
        %v2575 = vld [vmem:[%s2457 + $0x82] sm:$0xff]
        %v2576 = vld [vmem:[%s2457 + $0x92] sm:$0xff]
        %v2577 = vld [vmem:[%s2457 + $0x9a] sm:$0xff]
        %v2578 = vld [vmem:[%s2457 + $0xaa] sm:$0xff]
        %v2579 = vld [vmem:[%s2457 + $0xb2] sm:$0xff]
        %v2580 = vld [vmem:[%s995 + $0x2] sm:$0x1]
        %v2581 = vlaneseq
        %v2582 = vshrl.u32 %v2581, 7
        %v2583 = vsub.s32 0, %v2582
        %v2584 = vrot.slane %v2580, %v2583
        %v2585 = vmul.f32 %v2564, %v2584
        %v2586 = vmul.f32 %v2565, %v2584
        %v2587 = vmul.f32 %v2566, %v2584
        %v2588 = vmul.f32 %v2567, %v2584
        %v2589 = vmul.f32 %v2568, %v2584
        %v2590 = vmul.f32 %v2569, %v2584
        %v2591 = vmul.f32 %v2570, %v2584
        %v2592 = vmul.f32 %v2571, %v2584
        %v2593 = vmul.f32 %v2572, %v2584
        %v2594 = vmul.f32 %v2573, %v2584
        %v2595 = vmul.f32 %v2574, %v2584
        %v2596 = vmul.f32 %v2575, %v2584
        %v2597 = vmul.f32 %v2576, %v2584
        %v2598 = vmul.f32 %v2577, %v2584
        %v2599 = vmul.f32 %v2578, %v2584
        %v2600 = vmul.f32 %v2579, %v2584
        %v2601 = vadd.f32 %v2548, %v2585
        %v2602 = vadd.f32 %v2549, %v2586
        %v2603 = vadd.f32 %v2550, %v2587
        %v2604 = vadd.f32 %v2551, %v2588
        %v2605 = vadd.f32 %v2552, %v2589
        %v2606 = vadd.f32 %v2553, %v2590
        %v2607 = vadd.f32 %v2554, %v2591
        %v2608 = vadd.f32 %v2555, %v2592
        %v2609 = vadd.f32 %v2556, %v2593
        %v2610 = vadd.f32 %v2557, %v2594
        %v2611 = vadd.f32 %v2558, %v2595
        %v2612 = vadd.f32 %v2559, %v2596
        %v2613 = vadd.f32 %v2560, %v2597
        %v2614 = vadd.f32 %v2561, %v2598
        %v2615 = vadd.f32 %v2562, %v2599
        %v2616 = vadd.f32 %v2563, %v2600
        %v2617 = vld [vmem:[%s2457 + $0x3] sm:$0xff]
        %v2618 = vld [vmem:[%s2457 + $0xb] sm:$0xff]
        %v2619 = vld [vmem:[%s2457 + $0x1b] sm:$0xff]
        %v2620 = vld [vmem:[%s2457 + $0x23] sm:$0xff]
        %v2621 = vld [vmem:[%s2457 + $0x33] sm:$0xff]
        %v2622 = vld [vmem:[%s2457 + $0x3b] sm:$0xff]
        %v2623 = vld [vmem:[%s2457 + $0x4b] sm:$0xff]
        %v2624 = vld [vmem:[%s2457 + $0x53] sm:$0xff]
        %v2625 = vld [vmem:[%s2457 + $0x63] sm:$0xff]
        %v2626 = vld [vmem:[%s2457 + $0x6b] sm:$0xff]
        %v2627 = vld [vmem:[%s2457 + $0x7b] sm:$0xff]
        %v2628 = vld [vmem:[%s2457 + $0x83] sm:$0xff]
        %v2629 = vld [vmem:[%s2457 + $0x93] sm:$0xff]
        %v2630 = vld [vmem:[%s2457 + $0x9b] sm:$0xff]
        %v2631 = vld [vmem:[%s2457 + $0xab] sm:$0xff]
        %v2632 = vld [vmem:[%s2457 + $0xb3] sm:$0xff]
        %v2633 = vld [vmem:[%s995 + $0x3] sm:$0x1]
        %v2634 = vlaneseq
        %v2635 = vshrl.u32 %v2634, 7
        %v2636 = vsub.s32 0, %v2635
        %v2637 = vrot.slane %v2633, %v2636
        %v2638 = vmul.f32 %v2617, %v2637
        %v2639 = vmul.f32 %v2618, %v2637
        %v2640 = vmul.f32 %v2619, %v2637
        %v2641 = vmul.f32 %v2620, %v2637
        %v2642 = vmul.f32 %v2621, %v2637
        %v2643 = vmul.f32 %v2622, %v2637
        %v2644 = vmul.f32 %v2623, %v2637
        %v2645 = vmul.f32 %v2624, %v2637
        %v2646 = vmul.f32 %v2625, %v2637
        %v2647 = vmul.f32 %v2626, %v2637
        %v2648 = vmul.f32 %v2627, %v2637
        %v2649 = vmul.f32 %v2628, %v2637
        %v2650 = vmul.f32 %v2629, %v2637
        %v2651 = vmul.f32 %v2630, %v2637
        %v2652 = vmul.f32 %v2631, %v2637
        %v2653 = vmul.f32 %v2632, %v2637
        %v2654 = vadd.f32 %v2601, %v2638
        %v2655 = vadd.f32 %v2602, %v2639
        %v2656 = vadd.f32 %v2603, %v2640
        %v2657 = vadd.f32 %v2604, %v2641
        %v2658 = vadd.f32 %v2605, %v2642
        %v2659 = vadd.f32 %v2606, %v2643
        %v2660 = vadd.f32 %v2607, %v2644
        %v2661 = vadd.f32 %v2608, %v2645
        %v2662 = vadd.f32 %v2609, %v2646
        %v2663 = vadd.f32 %v2610, %v2647
        %v2664 = vadd.f32 %v2611, %v2648
        %v2665 = vadd.f32 %v2612, %v2649
        %v2666 = vadd.f32 %v2613, %v2650
        %v2667 = vadd.f32 %v2614, %v2651
        %v2668 = vadd.f32 %v2615, %v2652
        %v2669 = vadd.f32 %v2616, %v2653
        %v2670 = vld [vmem:[%s2457 + $0x4] sm:$0xff]
        %v2671 = vld [vmem:[%s2457 + $0xc] sm:$0xff]
        %v2672 = vld [vmem:[%s2457 + $0x1c] sm:$0xff]
        %v2673 = vld [vmem:[%s2457 + $0x24] sm:$0xff]
        %v2674 = vld [vmem:[%s2457 + $0x34] sm:$0xff]
        %v2675 = vld [vmem:[%s2457 + $0x3c] sm:$0xff]
        %v2676 = vld [vmem:[%s2457 + $0x4c] sm:$0xff]
        %v2677 = vld [vmem:[%s2457 + $0x54] sm:$0xff]
        %v2678 = vld [vmem:[%s2457 + $0x64] sm:$0xff]
        %v2679 = vld [vmem:[%s2457 + $0x6c] sm:$0xff]
        %v2680 = vld [vmem:[%s2457 + $0x7c] sm:$0xff]
        %v2681 = vld [vmem:[%s2457 + $0x84] sm:$0xff]
        %v2682 = vld [vmem:[%s2457 + $0x94] sm:$0xff]
        %v2683 = vld [vmem:[%s2457 + $0x9c] sm:$0xff]
        %v2684 = vld [vmem:[%s2457 + $0xac] sm:$0xff]
        %v2685 = vld [vmem:[%s2457 + $0xb4] sm:$0xff]
        %v2686 = vld [vmem:[%s995 + $0x4] sm:$0x1]
        %v2687 = vlaneseq
        %v2688 = vshrl.u32 %v2687, 7
        %v2689 = vsub.s32 0, %v2688
        %v2690 = vrot.slane %v2686, %v2689
        %v2691 = vmul.f32 %v2670, %v2690
        %v2692 = vmul.f32 %v2671, %v2690
        %v2693 = vmul.f32 %v2672, %v2690
        %v2694 = vmul.f32 %v2673, %v2690
        %v2695 = vmul.f32 %v2674, %v2690
        %v2696 = vmul.f32 %v2675, %v2690
        %v2697 = vmul.f32 %v2676, %v2690
        %v2698 = vmul.f32 %v2677, %v2690
        %v2699 = vmul.f32 %v2678, %v2690
        %v2700 = vmul.f32 %v2679, %v2690
        %v2701 = vmul.f32 %v2680, %v2690
        %v2702 = vmul.f32 %v2681, %v2690
        %v2703 = vmul.f32 %v2682, %v2690
        %v2704 = vmul.f32 %v2683, %v2690
        %v2705 = vmul.f32 %v2684, %v2690
        %v2706 = vmul.f32 %v2685, %v2690
        %v2707 = vadd.f32 %v2654, %v2691
        %v2708 = vadd.f32 %v2655, %v2692
        %v2709 = vadd.f32 %v2656, %v2693
        %v2710 = vadd.f32 %v2657, %v2694
        %v2711 = vadd.f32 %v2658, %v2695
        %v2712 = vadd.f32 %v2659, %v2696
        %v2713 = vadd.f32 %v2660, %v2697
        %v2714 = vadd.f32 %v2661, %v2698
        %v2715 = vadd.f32 %v2662, %v2699
        %v2716 = vadd.f32 %v2663, %v2700
        %v2717 = vadd.f32 %v2664, %v2701
        %v2718 = vadd.f32 %v2665, %v2702
        %v2719 = vadd.f32 %v2666, %v2703
        %v2720 = vadd.f32 %v2667, %v2704
        %v2721 = vadd.f32 %v2668, %v2705
        %v2722 = vadd.f32 %v2669, %v2706
        %s2723 = scalar_lea.vmem [#allocation2], 240
        %v2724 = vld [vmem:[%s2723] sm:$0xff]
        %v2725 = vld [vmem:[%s2723 + $0x8] sm:$0xff]
        %v2726 = vld [vmem:[%s2723 + $0x18] sm:$0xff]
        %v2727 = vld [vmem:[%s2723 + $0x20] sm:$0xff]
        %v2728 = vld [vmem:[%s2723 + $0x30] sm:$0xff]
        %v2729 = vld [vmem:[%s2723 + $0x38] sm:$0xff]
        %v2730 = vld [vmem:[%s2723 + $0x48] sm:$0xff]
        %v2731 = vld [vmem:[%s2723 + $0x50] sm:$0xff]
        %v2732 = vld [vmem:[%s2723 + $0x60] sm:$0xff]
        %v2733 = vld [vmem:[%s2723 + $0x68] sm:$0xff]
        %v2734 = vld [vmem:[%s2723 + $0x78] sm:$0xff]
        %v2735 = vld [vmem:[%s2723 + $0x80] sm:$0xff]
        %v2736 = vld [vmem:[%s2723 + $0x90] sm:$0xff]
        %v2737 = vld [vmem:[%s2723 + $0x98] sm:$0xff]
        %v2738 = vld [vmem:[%s2723 + $0xa8] sm:$0xff]
        %v2739 = vld [vmem:[%s2723 + $0xb0] sm:$0xff]
        %v2740 = vld [vmem:[%s1261] sm:$0x1]
        %v2741 = vlaneseq
        %v2742 = vshrl.u32 %v2741, 7
        %v2743 = vsub.s32 0, %v2742
        %v2744 = vrot.slane %v2740, %v2743
        %v2745 = vmul.f32 %v2724, %v2744
        %v2746 = vmul.f32 %v2725, %v2744
        %v2747 = vmul.f32 %v2726, %v2744
        %v2748 = vmul.f32 %v2727, %v2744
        %v2749 = vmul.f32 %v2728, %v2744
        %v2750 = vmul.f32 %v2729, %v2744
        %v2751 = vmul.f32 %v2730, %v2744
        %v2752 = vmul.f32 %v2731, %v2744
        %v2753 = vmul.f32 %v2732, %v2744
        %v2754 = vmul.f32 %v2733, %v2744
        %v2755 = vmul.f32 %v2734, %v2744
        %v2756 = vmul.f32 %v2735, %v2744
        %v2757 = vmul.f32 %v2736, %v2744
        %v2758 = vmul.f32 %v2737, %v2744
        %v2759 = vmul.f32 %v2738, %v2744
        %v2760 = vmul.f32 %v2739, %v2744
        %v2761 = vadd.f32 %v2707, %v2745
        %v2762 = vadd.f32 %v2708, %v2746
        %v2763 = vadd.f32 %v2709, %v2747
        %v2764 = vadd.f32 %v2710, %v2748
        %v2765 = vadd.f32 %v2711, %v2749
        %v2766 = vadd.f32 %v2712, %v2750
        %v2767 = vadd.f32 %v2713, %v2751
        %v2768 = vadd.f32 %v2714, %v2752
        %v2769 = vadd.f32 %v2715, %v2753
        %v2770 = vadd.f32 %v2716, %v2754
        %v2771 = vadd.f32 %v2717, %v2755
        %v2772 = vadd.f32 %v2718, %v2756
        %v2773 = vadd.f32 %v2719, %v2757
        %v2774 = vadd.f32 %v2720, %v2758
        %v2775 = vadd.f32 %v2721, %v2759
        %v2776 = vadd.f32 %v2722, %v2760
        %v2777 = vld [vmem:[%s2723 + $0x1] sm:$0xff]
        %v2778 = vld [vmem:[%s2723 + $0x9] sm:$0xff]
        %v2779 = vld [vmem:[%s2723 + $0x19] sm:$0xff]
        %v2780 = vld [vmem:[%s2723 + $0x21] sm:$0xff]
        %v2781 = vld [vmem:[%s2723 + $0x31] sm:$0xff]
        %v2782 = vld [vmem:[%s2723 + $0x39] sm:$0xff]
        %v2783 = vld [vmem:[%s2723 + $0x49] sm:$0xff]
        %v2784 = vld [vmem:[%s2723 + $0x51] sm:$0xff]
        %v2785 = vld [vmem:[%s2723 + $0x61] sm:$0xff]
        %v2786 = vld [vmem:[%s2723 + $0x69] sm:$0xff]
        %v2787 = vld [vmem:[%s2723 + $0x79] sm:$0xff]
        %v2788 = vld [vmem:[%s2723 + $0x81] sm:$0xff]
        %v2789 = vld [vmem:[%s2723 + $0x91] sm:$0xff]
        %v2790 = vld [vmem:[%s2723 + $0x99] sm:$0xff]
        %v2791 = vld [vmem:[%s2723 + $0xa9] sm:$0xff]
        %v2792 = vld [vmem:[%s2723 + $0xb1] sm:$0xff]
        %v2793 = vld [vmem:[%s1261 + $0x1] sm:$0x1]
        %v2794 = vlaneseq
        %v2795 = vshrl.u32 %v2794, 7
        %v2796 = vsub.s32 0, %v2795
        %v2797 = vrot.slane %v2793, %v2796
        %v2798 = vmul.f32 %v2777, %v2797
        %v2799 = vmul.f32 %v2778, %v2797
        %v2800 = vmul.f32 %v2779, %v2797
        %v2801 = vmul.f32 %v2780, %v2797
        %v2802 = vmul.f32 %v2781, %v2797
        %v2803 = vmul.f32 %v2782, %v2797
        %v2804 = vmul.f32 %v2783, %v2797
        %v2805 = vmul.f32 %v2784, %v2797
        %v2806 = vmul.f32 %v2785, %v2797
        %v2807 = vmul.f32 %v2786, %v2797
        %v2808 = vmul.f32 %v2787, %v2797
        %v2809 = vmul.f32 %v2788, %v2797
        %v2810 = vmul.f32 %v2789, %v2797
        %v2811 = vmul.f32 %v2790, %v2797
        %v2812 = vmul.f32 %v2791, %v2797
        %v2813 = vmul.f32 %v2792, %v2797
        %v2814 = vadd.f32 %v2761, %v2798
        %v2815 = vadd.f32 %v2762, %v2799
        %v2816 = vadd.f32 %v2763, %v2800
        %v2817 = vadd.f32 %v2764, %v2801
        %v2818 = vadd.f32 %v2765, %v2802
        %v2819 = vadd.f32 %v2766, %v2803
        %v2820 = vadd.f32 %v2767, %v2804
        %v2821 = vadd.f32 %v2768, %v2805
        %v2822 = vadd.f32 %v2769, %v2806
        %v2823 = vadd.f32 %v2770, %v2807
        %v2824 = vadd.f32 %v2771, %v2808
        %v2825 = vadd.f32 %v2772, %v2809
        %v2826 = vadd.f32 %v2773, %v2810
        %v2827 = vadd.f32 %v2774, %v2811
        %v2828 = vadd.f32 %v2775, %v2812
        %v2829 = vadd.f32 %v2776, %v2813
        %v2830 = vld [vmem:[%s2723 + $0x2] sm:$0xff]
        %v2831 = vld [vmem:[%s2723 + $0xa] sm:$0xff]
        %v2832 = vld [vmem:[%s2723 + $0x1a] sm:$0xff]
        %v2833 = vld [vmem:[%s2723 + $0x22] sm:$0xff]
        %v2834 = vld [vmem:[%s2723 + $0x32] sm:$0xff]
        %v2835 = vld [vmem:[%s2723 + $0x3a] sm:$0xff]
        %v2836 = vld [vmem:[%s2723 + $0x4a] sm:$0xff]
        %v2837 = vld [vmem:[%s2723 + $0x52] sm:$0xff]
        %v2838 = vld [vmem:[%s2723 + $0x62] sm:$0xff]
        %v2839 = vld [vmem:[%s2723 + $0x6a] sm:$0xff]
        %v2840 = vld [vmem:[%s2723 + $0x7a] sm:$0xff]
        %v2841 = vld [vmem:[%s2723 + $0x82] sm:$0xff]
        %v2842 = vld [vmem:[%s2723 + $0x92] sm:$0xff]
        %v2843 = vld [vmem:[%s2723 + $0x9a] sm:$0xff]
        %v2844 = vld [vmem:[%s2723 + $0xaa] sm:$0xff]
        %v2845 = vld [vmem:[%s2723 + $0xb2] sm:$0xff]
        %v2846 = vld [vmem:[%s1261 + $0x2] sm:$0x1]
        %v2847 = vlaneseq
        %v2848 = vshrl.u32 %v2847, 7
        %v2849 = vsub.s32 0, %v2848
        %v2850 = vrot.slane %v2846, %v2849
        %v2851 = vmul.f32 %v2830, %v2850
        %v2852 = vmul.f32 %v2831, %v2850
        %v2853 = vmul.f32 %v2832, %v2850
        %v2854 = vmul.f32 %v2833, %v2850
        %v2855 = vmul.f32 %v2834, %v2850
        %v2856 = vmul.f32 %v2835, %v2850
        %v2857 = vmul.f32 %v2836, %v2850
        %v2858 = vmul.f32 %v2837, %v2850
        %v2859 = vmul.f32 %v2838, %v2850
        %v2860 = vmul.f32 %v2839, %v2850
        %v2861 = vmul.f32 %v2840, %v2850
        %v2862 = vmul.f32 %v2841, %v2850
        %v2863 = vmul.f32 %v2842, %v2850
        %v2864 = vmul.f32 %v2843, %v2850
        %v2865 = vmul.f32 %v2844, %v2850
        %v2866 = vmul.f32 %v2845, %v2850
        %v2867 = vadd.f32 %v2814, %v2851
        %v2868 = vadd.f32 %v2815, %v2852
        %v2869 = vadd.f32 %v2816, %v2853
        %v2870 = vadd.f32 %v2817, %v2854
        %v2871 = vadd.f32 %v2818, %v2855
        %v2872 = vadd.f32 %v2819, %v2856
        %v2873 = vadd.f32 %v2820, %v2857
        %v2874 = vadd.f32 %v2821, %v2858
        %v2875 = vadd.f32 %v2822, %v2859
        %v2876 = vadd.f32 %v2823, %v2860
        %v2877 = vadd.f32 %v2824, %v2861
        %v2878 = vadd.f32 %v2825, %v2862
        %v2879 = vadd.f32 %v2826, %v2863
        %v2880 = vadd.f32 %v2827, %v2864
        %v2881 = vadd.f32 %v2828, %v2865
        %v2882 = vadd.f32 %v2829, %v2866
        %v2883 = vld [vmem:[%s2723 + $0x3] sm:$0xff]
        %v2884 = vld [vmem:[%s2723 + $0xb] sm:$0xff]
        %v2885 = vld [vmem:[%s2723 + $0x1b] sm:$0xff]
        %v2886 = vld [vmem:[%s2723 + $0x23] sm:$0xff]
        %v2887 = vld [vmem:[%s2723 + $0x33] sm:$0xff]
        %v2888 = vld [vmem:[%s2723 + $0x3b] sm:$0xff]
        %v2889 = vld [vmem:[%s2723 + $0x4b] sm:$0xff]
        %v2890 = vld [vmem:[%s2723 + $0x53] sm:$0xff]
        %v2891 = vld [vmem:[%s2723 + $0x63] sm:$0xff]
        %v2892 = vld [vmem:[%s2723 + $0x6b] sm:$0xff]
        %v2893 = vld [vmem:[%s2723 + $0x7b] sm:$0xff]
        %v2894 = vld [vmem:[%s2723 + $0x83] sm:$0xff]
        %v2895 = vld [vmem:[%s2723 + $0x93] sm:$0xff]
        %v2896 = vld [vmem:[%s2723 + $0x9b] sm:$0xff]
        %v2897 = vld [vmem:[%s2723 + $0xab] sm:$0xff]
        %v2898 = vld [vmem:[%s2723 + $0xb3] sm:$0xff]
        %v2899 = vld [vmem:[%s1261 + $0x3] sm:$0x1]
        %v2900 = vlaneseq
        %v2901 = vshrl.u32 %v2900, 7
        %v2902 = vsub.s32 0, %v2901
        %v2903 = vrot.slane %v2899, %v2902
        %v2904 = vmul.f32 %v2883, %v2903
        %v2905 = vmul.f32 %v2884, %v2903
        %v2906 = vmul.f32 %v2885, %v2903
        %v2907 = vmul.f32 %v2886, %v2903
        %v2908 = vmul.f32 %v2887, %v2903
        %v2909 = vmul.f32 %v2888, %v2903
        %v2910 = vmul.f32 %v2889, %v2903
        %v2911 = vmul.f32 %v2890, %v2903
        %v2912 = vmul.f32 %v2891, %v2903
        %v2913 = vmul.f32 %v2892, %v2903
        %v2914 = vmul.f32 %v2893, %v2903
        %v2915 = vmul.f32 %v2894, %v2903
        %v2916 = vmul.f32 %v2895, %v2903
        %v2917 = vmul.f32 %v2896, %v2903
        %v2918 = vmul.f32 %v2897, %v2903
        %v2919 = vmul.f32 %v2898, %v2903
        %v2920 = vadd.f32 %v2867, %v2904
        %v2921 = vadd.f32 %v2868, %v2905
        %v2922 = vadd.f32 %v2869, %v2906
        %v2923 = vadd.f32 %v2870, %v2907
        %v2924 = vadd.f32 %v2871, %v2908
        %v2925 = vadd.f32 %v2872, %v2909
        %v2926 = vadd.f32 %v2873, %v2910
        %v2927 = vadd.f32 %v2874, %v2911
        %v2928 = vadd.f32 %v2875, %v2912
        %v2929 = vadd.f32 %v2876, %v2913
        %v2930 = vadd.f32 %v2877, %v2914
        %v2931 = vadd.f32 %v2878, %v2915
        %v2932 = vadd.f32 %v2879, %v2916
        %v2933 = vadd.f32 %v2880, %v2917
        %v2934 = vadd.f32 %v2881, %v2918
        %v2935 = vadd.f32 %v2882, %v2919
        %v2936 = vld [vmem:[%s2723 + $0x4] sm:$0xff]
        %v2937 = vld [vmem:[%s2723 + $0xc] sm:$0xff]
        %v2938 = vld [vmem:[%s2723 + $0x1c] sm:$0xff]
        %v2939 = vld [vmem:[%s2723 + $0x24] sm:$0xff]
        %v2940 = vld [vmem:[%s2723 + $0x34] sm:$0xff]
        %v2941 = vld [vmem:[%s2723 + $0x3c] sm:$0xff]
        %v2942 = vld [vmem:[%s2723 + $0x4c] sm:$0xff]
        %v2943 = vld [vmem:[%s2723 + $0x54] sm:$0xff]
        %v2944 = vld [vmem:[%s2723 + $0x64] sm:$0xff]
        %v2945 = vld [vmem:[%s2723 + $0x6c] sm:$0xff]
        %v2946 = vld [vmem:[%s2723 + $0x7c] sm:$0xff]
        %v2947 = vld [vmem:[%s2723 + $0x84] sm:$0xff]
        %v2948 = vld [vmem:[%s2723 + $0x94] sm:$0xff]
        %v2949 = vld [vmem:[%s2723 + $0x9c] sm:$0xff]
        %v2950 = vld [vmem:[%s2723 + $0xac] sm:$0xff]
        %v2951 = vld [vmem:[%s2723 + $0xb4] sm:$0xff]
        %v2952 = vld [vmem:[%s1261 + $0x4] sm:$0x1]
        %v2953 = vlaneseq
        %v2954 = vshrl.u32 %v2953, 7
        %v2955 = vsub.s32 0, %v2954
        %v2956 = vrot.slane %v2952, %v2955
        %v2957 = vmul.f32 %v2936, %v2956
        %v2958 = vmul.f32 %v2937, %v2956
        %v2959 = vmul.f32 %v2938, %v2956
        %v2960 = vmul.f32 %v2939, %v2956
        %v2961 = vmul.f32 %v2940, %v2956
        %v2962 = vmul.f32 %v2941, %v2956
        %v2963 = vmul.f32 %v2942, %v2956
        %v2964 = vmul.f32 %v2943, %v2956
        %v2965 = vmul.f32 %v2944, %v2956
        %v2966 = vmul.f32 %v2945, %v2956
        %v2967 = vmul.f32 %v2946, %v2956
        %v2968 = vmul.f32 %v2947, %v2956
        %v2969 = vmul.f32 %v2948, %v2956
        %v2970 = vmul.f32 %v2949, %v2956
        %v2971 = vmul.f32 %v2950, %v2956
        %v2972 = vmul.f32 %v2951, %v2956
        %v2973 = vadd.f32 %v2920, %v2957
        %v2974 = vadd.f32 %v2921, %v2958
        %v2975 = vadd.f32 %v2922, %v2959
        %v2976 = vadd.f32 %v2923, %v2960
        %v2977 = vadd.f32 %v2924, %v2961
        %v2978 = vadd.f32 %v2925, %v2962
        %v2979 = vadd.f32 %v2926, %v2963
        %v2980 = vadd.f32 %v2927, %v2964
        %v2981 = vadd.f32 %v2928, %v2965
        %v2982 = vadd.f32 %v2929, %v2966
        %v2983 = vadd.f32 %v2930, %v2967
        %v2984 = vadd.f32 %v2931, %v2968
        %v2985 = vadd.f32 %v2932, %v2969
        %v2986 = vadd.f32 %v2933, %v2970
        %v2987 = vadd.f32 %v2934, %v2971
        %v2988 = vadd.f32 %v2935, %v2972
        %s2989 = scalar_lea.vmem [#allocation2], 264
        %v2990 = vld [vmem:[%s2989] sm:$0xff]
        %v2991 = vld [vmem:[%s2989 + $0x8] sm:$0xff]
        %v2992 = vld [vmem:[%s2989 + $0x18] sm:$0xff]
        %v2993 = vld [vmem:[%s2989 + $0x20] sm:$0xff]
        %v2994 = vld [vmem:[%s2989 + $0x30] sm:$0xff]
        %v2995 = vld [vmem:[%s2989 + $0x38] sm:$0xff]
        %v2996 = vld [vmem:[%s2989 + $0x48] sm:$0xff]
        %v2997 = vld [vmem:[%s2989 + $0x50] sm:$0xff]
        %v2998 = vld [vmem:[%s2989 + $0x60] sm:$0xff]
        %v2999 = vld [vmem:[%s2989 + $0x68] sm:$0xff]
        %v3000 = vld [vmem:[%s2989 + $0x78] sm:$0xff]
        %v3001 = vld [vmem:[%s2989 + $0x80] sm:$0xff]
        %v3002 = vld [vmem:[%s2989 + $0x90] sm:$0xff]
        %v3003 = vld [vmem:[%s2989 + $0x98] sm:$0xff]
        %v3004 = vld [vmem:[%s2989 + $0xa8] sm:$0xff]
        %v3005 = vld [vmem:[%s2989 + $0xb0] sm:$0xff]
        %v3006 = vld [vmem:[%s1528] sm:$0x1]
        %v3007 = vlaneseq
        %v3008 = vshrl.u32 %v3007, 7
        %v3009 = vsub.s32 0, %v3008
        %v3010 = vrot.slane %v3006, %v3009
        %v3011 = vmul.f32 %v2990, %v3010
        %v3012 = vmul.f32 %v2991, %v3010
        %v3013 = vmul.f32 %v2992, %v3010
        %v3014 = vmul.f32 %v2993, %v3010
        %v3015 = vmul.f32 %v2994, %v3010
        %v3016 = vmul.f32 %v2995, %v3010
        %v3017 = vmul.f32 %v2996, %v3010
        %v3018 = vmul.f32 %v2997, %v3010
        %v3019 = vmul.f32 %v2998, %v3010
        %v3020 = vmul.f32 %v2999, %v3010
        %v3021 = vmul.f32 %v3000, %v3010
        %v3022 = vmul.f32 %v3001, %v3010
        %v3023 = vmul.f32 %v3002, %v3010
        %v3024 = vmul.f32 %v3003, %v3010
        %v3025 = vmul.f32 %v3004, %v3010
        %v3026 = vmul.f32 %v3005, %v3010
        %v3027 = vadd.f32 %v2973, %v3011
        %v3028 = vadd.f32 %v2974, %v3012
        %v3029 = vadd.f32 %v2975, %v3013
        %v3030 = vadd.f32 %v2976, %v3014
        %v3031 = vadd.f32 %v2977, %v3015
        %v3032 = vadd.f32 %v2978, %v3016
        %v3033 = vadd.f32 %v2979, %v3017
        %v3034 = vadd.f32 %v2980, %v3018
        %v3035 = vadd.f32 %v2981, %v3019
        %v3036 = vadd.f32 %v2982, %v3020
        %v3037 = vadd.f32 %v2983, %v3021
        %v3038 = vadd.f32 %v2984, %v3022
        %v3039 = vadd.f32 %v2985, %v3023
        %v3040 = vadd.f32 %v2986, %v3024
        %v3041 = vadd.f32 %v2987, %v3025
        %v3042 = vadd.f32 %v2988, %v3026
        %v3043 = vld [vmem:[%s2989 + $0x1] sm:$0xff]
        %v3044 = vld [vmem:[%s2989 + $0x9] sm:$0xff]
        %v3045 = vld [vmem:[%s2989 + $0x19] sm:$0xff]
        %v3046 = vld [vmem:[%s2989 + $0x21] sm:$0xff]
        %v3047 = vld [vmem:[%s2989 + $0x31] sm:$0xff]
        %v3048 = vld [vmem:[%s2989 + $0x39] sm:$0xff]
        %v3049 = vld [vmem:[%s2989 + $0x49] sm:$0xff]
        %v3050 = vld [vmem:[%s2989 + $0x51] sm:$0xff]
        %v3051 = vld [vmem:[%s2989 + $0x61] sm:$0xff]
        %v3052 = vld [vmem:[%s2989 + $0x69] sm:$0xff]
        %v3053 = vld [vmem:[%s2989 + $0x79] sm:$0xff]
        %v3054 = vld [vmem:[%s2989 + $0x81] sm:$0xff]
        %v3055 = vld [vmem:[%s2989 + $0x91] sm:$0xff]
        %v3056 = vld [vmem:[%s2989 + $0x99] sm:$0xff]
        %v3057 = vld [vmem:[%s2989 + $0xa9] sm:$0xff]
        %v3058 = vld [vmem:[%s2989 + $0xb1] sm:$0xff]
        %v3059 = vld [vmem:[%s1528 + $0x1] sm:$0x1]
        %v3060 = vlaneseq
        %v3061 = vshrl.u32 %v3060, 7
        %v3062 = vsub.s32 0, %v3061
        %v3063 = vrot.slane %v3059, %v3062
        %v3064 = vmul.f32 %v3043, %v3063
        %v3065 = vmul.f32 %v3044, %v3063
        %v3066 = vmul.f32 %v3045, %v3063
        %v3067 = vmul.f32 %v3046, %v3063
        %v3068 = vmul.f32 %v3047, %v3063
        %v3069 = vmul.f32 %v3048, %v3063
        %v3070 = vmul.f32 %v3049, %v3063
        %v3071 = vmul.f32 %v3050, %v3063
        %v3072 = vmul.f32 %v3051, %v3063
        %v3073 = vmul.f32 %v3052, %v3063
        %v3074 = vmul.f32 %v3053, %v3063
        %v3075 = vmul.f32 %v3054, %v3063
        %v3076 = vmul.f32 %v3055, %v3063
        %v3077 = vmul.f32 %v3056, %v3063
        %v3078 = vmul.f32 %v3057, %v3063
        %v3079 = vmul.f32 %v3058, %v3063
        %v3080 = vadd.f32 %v3027, %v3064
        %v3081 = vadd.f32 %v3028, %v3065
        %v3082 = vadd.f32 %v3029, %v3066
        %v3083 = vadd.f32 %v3030, %v3067
        %v3084 = vadd.f32 %v3031, %v3068
        %v3085 = vadd.f32 %v3032, %v3069
        %v3086 = vadd.f32 %v3033, %v3070
        %v3087 = vadd.f32 %v3034, %v3071
        %v3088 = vadd.f32 %v3035, %v3072
        %v3089 = vadd.f32 %v3036, %v3073
        %v3090 = vadd.f32 %v3037, %v3074
        %v3091 = vadd.f32 %v3038, %v3075
        %v3092 = vadd.f32 %v3039, %v3076
        %v3093 = vadd.f32 %v3040, %v3077
        %v3094 = vadd.f32 %v3041, %v3078
        %v3095 = vadd.f32 %v3042, %v3079
        %v3096 = vld [vmem:[%s2989 + $0x2] sm:$0xff]
        %v3097 = vld [vmem:[%s2989 + $0xa] sm:$0xff]
        %v3098 = vld [vmem:[%s2989 + $0x1a] sm:$0xff]
        %v3099 = vld [vmem:[%s2989 + $0x22] sm:$0xff]
        %v3100 = vld [vmem:[%s2989 + $0x32] sm:$0xff]
        %v3101 = vld [vmem:[%s2989 + $0x3a] sm:$0xff]
        %v3102 = vld [vmem:[%s2989 + $0x4a] sm:$0xff]
        %v3103 = vld [vmem:[%s2989 + $0x52] sm:$0xff]
        %v3104 = vld [vmem:[%s2989 + $0x62] sm:$0xff]
        %v3105 = vld [vmem:[%s2989 + $0x6a] sm:$0xff]
        %v3106 = vld [vmem:[%s2989 + $0x7a] sm:$0xff]
        %v3107 = vld [vmem:[%s2989 + $0x82] sm:$0xff]
        %v3108 = vld [vmem:[%s2989 + $0x92] sm:$0xff]
        %v3109 = vld [vmem:[%s2989 + $0x9a] sm:$0xff]
        %v3110 = vld [vmem:[%s2989 + $0xaa] sm:$0xff]
        %v3111 = vld [vmem:[%s2989 + $0xb2] sm:$0xff]
        %v3112 = vld [vmem:[%s1528 + $0x2] sm:$0x1]
        %v3113 = vlaneseq
        %v3114 = vshrl.u32 %v3113, 7
        %v3115 = vsub.s32 0, %v3114
        %v3116 = vrot.slane %v3112, %v3115
        %v3117 = vmul.f32 %v3096, %v3116
        %v3118 = vmul.f32 %v3097, %v3116
        %v3119 = vmul.f32 %v3098, %v3116
        %v3120 = vmul.f32 %v3099, %v3116
        %v3121 = vmul.f32 %v3100, %v3116
        %v3122 = vmul.f32 %v3101, %v3116
        %v3123 = vmul.f32 %v3102, %v3116
        %v3124 = vmul.f32 %v3103, %v3116
        %v3125 = vmul.f32 %v3104, %v3116
        %v3126 = vmul.f32 %v3105, %v3116
        %v3127 = vmul.f32 %v3106, %v3116
        %v3128 = vmul.f32 %v3107, %v3116
        %v3129 = vmul.f32 %v3108, %v3116
        %v3130 = vmul.f32 %v3109, %v3116
        %v3131 = vmul.f32 %v3110, %v3116
        %v3132 = vmul.f32 %v3111, %v3116
        %v3133 = vadd.f32 %v3080, %v3117
        %v3134 = vadd.f32 %v3081, %v3118
        %v3135 = vadd.f32 %v3082, %v3119
        %v3136 = vadd.f32 %v3083, %v3120
        %v3137 = vadd.f32 %v3084, %v3121
        %v3138 = vadd.f32 %v3085, %v3122
        %v3139 = vadd.f32 %v3086, %v3123
        %v3140 = vadd.f32 %v3087, %v3124
        %v3141 = vadd.f32 %v3088, %v3125
        %v3142 = vadd.f32 %v3089, %v3126
        %v3143 = vadd.f32 %v3090, %v3127
        %v3144 = vadd.f32 %v3091, %v3128
        %v3145 = vadd.f32 %v3092, %v3129
        %v3146 = vadd.f32 %v3093, %v3130
        %v3147 = vadd.f32 %v3094, %v3131
        %v3148 = vadd.f32 %v3095, %v3132
        %v3149 = vld [vmem:[%s2989 + $0x3] sm:$0xff]
        %v3150 = vld [vmem:[%s2989 + $0xb] sm:$0xff]
        %v3151 = vld [vmem:[%s2989 + $0x1b] sm:$0xff]
        %v3152 = vld [vmem:[%s2989 + $0x23] sm:$0xff]
        %v3153 = vld [vmem:[%s2989 + $0x33] sm:$0xff]
        %v3154 = vld [vmem:[%s2989 + $0x3b] sm:$0xff]
        %v3155 = vld [vmem:[%s2989 + $0x4b] sm:$0xff]
        %v3156 = vld [vmem:[%s2989 + $0x53] sm:$0xff]
        %v3157 = vld [vmem:[%s2989 + $0x63] sm:$0xff]
        %v3158 = vld [vmem:[%s2989 + $0x6b] sm:$0xff]
        %v3159 = vld [vmem:[%s2989 + $0x7b] sm:$0xff]
        %v3160 = vld [vmem:[%s2989 + $0x83] sm:$0xff]
        %v3161 = vld [vmem:[%s2989 + $0x93] sm:$0xff]
        %v3162 = vld [vmem:[%s2989 + $0x9b] sm:$0xff]
        %v3163 = vld [vmem:[%s2989 + $0xab] sm:$0xff]
        %v3164 = vld [vmem:[%s2989 + $0xb3] sm:$0xff]
        %v3165 = vld [vmem:[%s1528 + $0x3] sm:$0x1]
        %v3166 = vlaneseq
        %v3167 = vshrl.u32 %v3166, 7
        %v3168 = vsub.s32 0, %v3167
        %v3169 = vrot.slane %v3165, %v3168
        %v3170 = vmul.f32 %v3149, %v3169
        %v3171 = vmul.f32 %v3150, %v3169
        %v3172 = vmul.f32 %v3151, %v3169
        %v3173 = vmul.f32 %v3152, %v3169
        %v3174 = vmul.f32 %v3153, %v3169
        %v3175 = vmul.f32 %v3154, %v3169
        %v3176 = vmul.f32 %v3155, %v3169
        %v3177 = vmul.f32 %v3156, %v3169
        %v3178 = vmul.f32 %v3157, %v3169
        %v3179 = vmul.f32 %v3158, %v3169
        %v3180 = vmul.f32 %v3159, %v3169
        %v3181 = vmul.f32 %v3160, %v3169
        %v3182 = vmul.f32 %v3161, %v3169
        %v3183 = vmul.f32 %v3162, %v3169
        %v3184 = vmul.f32 %v3163, %v3169
        %v3185 = vmul.f32 %v3164, %v3169
        %v3186 = vadd.f32 %v3133, %v3170
        %v3187 = vadd.f32 %v3134, %v3171
        %v3188 = vadd.f32 %v3135, %v3172
        %v3189 = vadd.f32 %v3136, %v3173
        %v3190 = vadd.f32 %v3137, %v3174
        %v3191 = vadd.f32 %v3138, %v3175
        %v3192 = vadd.f32 %v3139, %v3176
        %v3193 = vadd.f32 %v3140, %v3177
        %v3194 = vadd.f32 %v3141, %v3178
        %v3195 = vadd.f32 %v3142, %v3179
        %v3196 = vadd.f32 %v3143, %v3180
        %v3197 = vadd.f32 %v3144, %v3181
        %v3198 = vadd.f32 %v3145, %v3182
        %v3199 = vadd.f32 %v3146, %v3183
        %v3200 = vadd.f32 %v3147, %v3184
        %v3201 = vadd.f32 %v3148, %v3185
        %v3202 = vld [vmem:[%s2989 + $0x4] sm:$0xff]
        %v3203 = vld [vmem:[%s2989 + $0xc] sm:$0xff]
        %v3204 = vld [vmem:[%s2989 + $0x1c] sm:$0xff]
        %v3205 = vld [vmem:[%s2989 + $0x24] sm:$0xff]
        %v3206 = vld [vmem:[%s2989 + $0x34] sm:$0xff]
        %v3207 = vld [vmem:[%s2989 + $0x3c] sm:$0xff]
        %v3208 = vld [vmem:[%s2989 + $0x4c] sm:$0xff]
        %v3209 = vld [vmem:[%s2989 + $0x54] sm:$0xff]
        %v3210 = vld [vmem:[%s2989 + $0x64] sm:$0xff]
        %v3211 = vld [vmem:[%s2989 + $0x6c] sm:$0xff]
        %v3212 = vld [vmem:[%s2989 + $0x7c] sm:$0xff]
        %v3213 = vld [vmem:[%s2989 + $0x84] sm:$0xff]
        %v3214 = vld [vmem:[%s2989 + $0x94] sm:$0xff]
        %v3215 = vld [vmem:[%s2989 + $0x9c] sm:$0xff]
        %v3216 = vld [vmem:[%s2989 + $0xac] sm:$0xff]
        %v3217 = vld [vmem:[%s2989 + $0xb4] sm:$0xff]
        %v3218 = vld [vmem:[%s1528 + $0x4] sm:$0x1]
        %v3219 = vlaneseq
        %v3220 = vshrl.u32 %v3219, 7
        %v3221 = vsub.s32 0, %v3220
        %v3222 = vrot.slane %v3218, %v3221
        %v3223 = vmul.f32 %v3202, %v3222
        %v3224 = vmul.f32 %v3203, %v3222
        %v3225 = vmul.f32 %v3204, %v3222
        %v3226 = vmul.f32 %v3205, %v3222
        %v3227 = vmul.f32 %v3206, %v3222
        %v3228 = vmul.f32 %v3207, %v3222
        %v3229 = vmul.f32 %v3208, %v3222
        %v3230 = vmul.f32 %v3209, %v3222
        %v3231 = vmul.f32 %v3210, %v3222
        %v3232 = vmul.f32 %v3211, %v3222
        %v3233 = vmul.f32 %v3212, %v3222
        %v3234 = vmul.f32 %v3213, %v3222
        %v3235 = vmul.f32 %v3214, %v3222
        %v3236 = vmul.f32 %v3215, %v3222
        %v3237 = vmul.f32 %v3216, %v3222
        %v3238 = vmul.f32 %v3217, %v3222
        %v3239 = vadd.f32 %v3186, %v3223
        %v3240 = vadd.f32 %v3187, %v3224
        %v3241 = vadd.f32 %v3188, %v3225
        %v3242 = vadd.f32 %v3189, %v3226
        %v3243 = vadd.f32 %v3190, %v3227
        %v3244 = vadd.f32 %v3191, %v3228
        %v3245 = vadd.f32 %v3192, %v3229
        %v3246 = vadd.f32 %v3193, %v3230
        %v3247 = vadd.f32 %v3194, %v3231
        %v3248 = vadd.f32 %v3195, %v3232
        %v3249 = vadd.f32 %v3196, %v3233
        %v3250 = vadd.f32 %v3197, %v3234
        %v3251 = vadd.f32 %v3198, %v3235
        %v3252 = vadd.f32 %v3199, %v3236
        %v3253 = vadd.f32 %v3200, %v3237
        %v3254 = vadd.f32 %v3201, %v3238
        %s3255 = scalar_lea.vmem [#allocation2], 288
        %v3256 = vld [vmem:[%s3255] sm:$0xff]
        %v3257 = vld [vmem:[%s3255 + $0x8] sm:$0xff]
        %v3258 = vld [vmem:[%s3255 + $0x18] sm:$0xff]
        %v3259 = vld [vmem:[%s3255 + $0x20] sm:$0xff]
        %v3260 = vld [vmem:[%s3255 + $0x30] sm:$0xff]
        %v3261 = vld [vmem:[%s3255 + $0x38] sm:$0xff]
        %v3262 = vld [vmem:[%s3255 + $0x48] sm:$0xff]
        %v3263 = vld [vmem:[%s3255 + $0x50] sm:$0xff]
        %v3264 = vld [vmem:[%s3255 + $0x60] sm:$0xff]
        %v3265 = vld [vmem:[%s3255 + $0x68] sm:$0xff]
        %v3266 = vld [vmem:[%s3255 + $0x78] sm:$0xff]
        %v3267 = vld [vmem:[%s3255 + $0x80] sm:$0xff]
        %v3268 = vld [vmem:[%s3255 + $0x90] sm:$0xff]
        %v3269 = vld [vmem:[%s3255 + $0x98] sm:$0xff]
        %v3270 = vld [vmem:[%s3255 + $0xa8] sm:$0xff]
        %v3271 = vld [vmem:[%s3255 + $0xb0] sm:$0xff]
        %v3272 = vld [vmem:[%s1795] sm:$0x1]
        %v3273 = vlaneseq
        %v3274 = vshrl.u32 %v3273, 7
        %v3275 = vsub.s32 0, %v3274
        %v3276 = vrot.slane %v3272, %v3275
        %v3277 = vmul.f32 %v3256, %v3276
        %v3278 = vmul.f32 %v3257, %v3276
        %v3279 = vmul.f32 %v3258, %v3276
        %v3280 = vmul.f32 %v3259, %v3276
        %v3281 = vmul.f32 %v3260, %v3276
        %v3282 = vmul.f32 %v3261, %v3276
        %v3283 = vmul.f32 %v3262, %v3276
        %v3284 = vmul.f32 %v3263, %v3276
        %v3285 = vmul.f32 %v3264, %v3276
        %v3286 = vmul.f32 %v3265, %v3276
        %v3287 = vmul.f32 %v3266, %v3276
        %v3288 = vmul.f32 %v3267, %v3276
        %v3289 = vmul.f32 %v3268, %v3276
        %v3290 = vmul.f32 %v3269, %v3276
        %v3291 = vmul.f32 %v3270, %v3276
        %v3292 = vmul.f32 %v3271, %v3276
        %v3293 = vadd.f32 %v3239, %v3277
        %v3294 = vadd.f32 %v3240, %v3278
        %v3295 = vadd.f32 %v3241, %v3279
        %v3296 = vadd.f32 %v3242, %v3280
        %v3297 = vadd.f32 %v3243, %v3281
        %v3298 = vadd.f32 %v3244, %v3282
        %v3299 = vadd.f32 %v3245, %v3283
        %v3300 = vadd.f32 %v3246, %v3284
        %v3301 = vadd.f32 %v3247, %v3285
        %v3302 = vadd.f32 %v3248, %v3286
        %v3303 = vadd.f32 %v3249, %v3287
        %v3304 = vadd.f32 %v3250, %v3288
        %v3305 = vadd.f32 %v3251, %v3289
        %v3306 = vadd.f32 %v3252, %v3290
        %v3307 = vadd.f32 %v3253, %v3291
        %v3308 = vadd.f32 %v3254, %v3292
        %v3309 = vld [vmem:[%s3255 + $0x1] sm:$0xff]
        %v3310 = vld [vmem:[%s3255 + $0x9] sm:$0xff]
        %v3311 = vld [vmem:[%s3255 + $0x19] sm:$0xff]
        %v3312 = vld [vmem:[%s3255 + $0x21] sm:$0xff]
        %v3313 = vld [vmem:[%s3255 + $0x31] sm:$0xff]
        %v3314 = vld [vmem:[%s3255 + $0x39] sm:$0xff]
        %v3315 = vld [vmem:[%s3255 + $0x49] sm:$0xff]
        %v3316 = vld [vmem:[%s3255 + $0x51] sm:$0xff]
        %v3317 = vld [vmem:[%s3255 + $0x61] sm:$0xff]
        %v3318 = vld [vmem:[%s3255 + $0x69] sm:$0xff]
        %v3319 = vld [vmem:[%s3255 + $0x79] sm:$0xff]
        %v3320 = vld [vmem:[%s3255 + $0x81] sm:$0xff]
        %v3321 = vld [vmem:[%s3255 + $0x91] sm:$0xff]
        %v3322 = vld [vmem:[%s3255 + $0x99] sm:$0xff]
        %v3323 = vld [vmem:[%s3255 + $0xa9] sm:$0xff]
        %v3324 = vld [vmem:[%s3255 + $0xb1] sm:$0xff]
        %v3325 = vld [vmem:[%s1795 + $0x1] sm:$0x1]
        %v3326 = vlaneseq
        %v3327 = vshrl.u32 %v3326, 7
        %v3328 = vsub.s32 0, %v3327
        %v3329 = vrot.slane %v3325, %v3328
        %v3330 = vmul.f32 %v3309, %v3329
        %v3331 = vmul.f32 %v3310, %v3329
        %v3332 = vmul.f32 %v3311, %v3329
        %v3333 = vmul.f32 %v3312, %v3329
        %v3334 = vmul.f32 %v3313, %v3329
        %v3335 = vmul.f32 %v3314, %v3329
        %v3336 = vmul.f32 %v3315, %v3329
        %v3337 = vmul.f32 %v3316, %v3329
        %v3338 = vmul.f32 %v3317, %v3329
        %v3339 = vmul.f32 %v3318, %v3329
        %v3340 = vmul.f32 %v3319, %v3329
        %v3341 = vmul.f32 %v3320, %v3329
        %v3342 = vmul.f32 %v3321, %v3329
        %v3343 = vmul.f32 %v3322, %v3329
        %v3344 = vmul.f32 %v3323, %v3329
        %v3345 = vmul.f32 %v3324, %v3329
        %v3346 = vadd.f32 %v3293, %v3330
        %v3347 = vadd.f32 %v3294, %v3331
        %v3348 = vadd.f32 %v3295, %v3332
        %v3349 = vadd.f32 %v3296, %v3333
        %v3350 = vadd.f32 %v3297, %v3334
        %v3351 = vadd.f32 %v3298, %v3335
        %v3352 = vadd.f32 %v3299, %v3336
        %v3353 = vadd.f32 %v3300, %v3337
        %v3354 = vadd.f32 %v3301, %v3338
        %v3355 = vadd.f32 %v3302, %v3339
        %v3356 = vadd.f32 %v3303, %v3340
        %v3357 = vadd.f32 %v3304, %v3341
        %v3358 = vadd.f32 %v3305, %v3342
        %v3359 = vadd.f32 %v3306, %v3343
        %v3360 = vadd.f32 %v3307, %v3344
        %v3361 = vadd.f32 %v3308, %v3345
        %v3362 = vld [vmem:[%s3255 + $0x2] sm:$0xff]
        %v3363 = vld [vmem:[%s3255 + $0xa] sm:$0xff]
        %v3364 = vld [vmem:[%s3255 + $0x1a] sm:$0xff]
        %v3365 = vld [vmem:[%s3255 + $0x22] sm:$0xff]
        %v3366 = vld [vmem:[%s3255 + $0x32] sm:$0xff]
        %v3367 = vld [vmem:[%s3255 + $0x3a] sm:$0xff]
        %v3368 = vld [vmem:[%s3255 + $0x4a] sm:$0xff]
        %v3369 = vld [vmem:[%s3255 + $0x52] sm:$0xff]
        %v3370 = vld [vmem:[%s3255 + $0x62] sm:$0xff]
        %v3371 = vld [vmem:[%s3255 + $0x6a] sm:$0xff]
        %v3372 = vld [vmem:[%s3255 + $0x7a] sm:$0xff]
        %v3373 = vld [vmem:[%s3255 + $0x82] sm:$0xff]
        %v3374 = vld [vmem:[%s3255 + $0x92] sm:$0xff]
        %v3375 = vld [vmem:[%s3255 + $0x9a] sm:$0xff]
        %v3376 = vld [vmem:[%s3255 + $0xaa] sm:$0xff]
        %v3377 = vld [vmem:[%s3255 + $0xb2] sm:$0xff]
        %v3378 = vld [vmem:[%s1795 + $0x2] sm:$0x1]
        %v3379 = vlaneseq
        %v3380 = vshrl.u32 %v3379, 7
        %v3381 = vsub.s32 0, %v3380
        %v3382 = vrot.slane %v3378, %v3381
        %v3383 = vmul.f32 %v3362, %v3382
        %v3384 = vmul.f32 %v3363, %v3382
        %v3385 = vmul.f32 %v3364, %v3382
        %v3386 = vmul.f32 %v3365, %v3382
        %v3387 = vmul.f32 %v3366, %v3382
        %v3388 = vmul.f32 %v3367, %v3382
        %v3389 = vmul.f32 %v3368, %v3382
        %v3390 = vmul.f32 %v3369, %v3382
        %v3391 = vmul.f32 %v3370, %v3382
        %v3392 = vmul.f32 %v3371, %v3382
        %v3393 = vmul.f32 %v3372, %v3382
        %v3394 = vmul.f32 %v3373, %v3382
        %v3395 = vmul.f32 %v3374, %v3382
        %v3396 = vmul.f32 %v3375, %v3382
        %v3397 = vmul.f32 %v3376, %v3382
        %v3398 = vmul.f32 %v3377, %v3382
        %v3399 = vadd.f32 %v3346, %v3383
        %v3400 = vadd.f32 %v3347, %v3384
        %v3401 = vadd.f32 %v3348, %v3385
        %v3402 = vadd.f32 %v3349, %v3386
        %v3403 = vadd.f32 %v3350, %v3387
        %v3404 = vadd.f32 %v3351, %v3388
        %v3405 = vadd.f32 %v3352, %v3389
        %v3406 = vadd.f32 %v3353, %v3390
        %v3407 = vadd.f32 %v3354, %v3391
        %v3408 = vadd.f32 %v3355, %v3392
        %v3409 = vadd.f32 %v3356, %v3393
        %v3410 = vadd.f32 %v3357, %v3394
        %v3411 = vadd.f32 %v3358, %v3395
        %v3412 = vadd.f32 %v3359, %v3396
        %v3413 = vadd.f32 %v3360, %v3397
        %v3414 = vadd.f32 %v3361, %v3398
        %v3415 = vld [vmem:[%s3255 + $0x3] sm:$0xff]
        %v3416 = vld [vmem:[%s3255 + $0xb] sm:$0xff]
        %v3417 = vld [vmem:[%s3255 + $0x1b] sm:$0xff]
        %v3418 = vld [vmem:[%s3255 + $0x23] sm:$0xff]
        %v3419 = vld [vmem:[%s3255 + $0x33] sm:$0xff]
        %v3420 = vld [vmem:[%s3255 + $0x3b] sm:$0xff]
        %v3421 = vld [vmem:[%s3255 + $0x4b] sm:$0xff]
        %v3422 = vld [vmem:[%s3255 + $0x53] sm:$0xff]
        %v3423 = vld [vmem:[%s3255 + $0x63] sm:$0xff]
        %v3424 = vld [vmem:[%s3255 + $0x6b] sm:$0xff]
        %v3425 = vld [vmem:[%s3255 + $0x7b] sm:$0xff]
        %v3426 = vld [vmem:[%s3255 + $0x83] sm:$0xff]
        %v3427 = vld [vmem:[%s3255 + $0x93] sm:$0xff]
        %v3428 = vld [vmem:[%s3255 + $0x9b] sm:$0xff]
        %v3429 = vld [vmem:[%s3255 + $0xab] sm:$0xff]
        %v3430 = vld [vmem:[%s3255 + $0xb3] sm:$0xff]
        %v3431 = vld [vmem:[%s1795 + $0x3] sm:$0x1]
        %v3432 = vlaneseq
        %v3433 = vshrl.u32 %v3432, 7
        %v3434 = vsub.s32 0, %v3433
        %v3435 = vrot.slane %v3431, %v3434
        %v3436 = vmul.f32 %v3415, %v3435
        %v3437 = vmul.f32 %v3416, %v3435
        %v3438 = vmul.f32 %v3417, %v3435
        %v3439 = vmul.f32 %v3418, %v3435
        %v3440 = vmul.f32 %v3419, %v3435
        %v3441 = vmul.f32 %v3420, %v3435
        %v3442 = vmul.f32 %v3421, %v3435
        %v3443 = vmul.f32 %v3422, %v3435
        %v3444 = vmul.f32 %v3423, %v3435
        %v3445 = vmul.f32 %v3424, %v3435
        %v3446 = vmul.f32 %v3425, %v3435
        %v3447 = vmul.f32 %v3426, %v3435
        %v3448 = vmul.f32 %v3427, %v3435
        %v3449 = vmul.f32 %v3428, %v3435
        %v3450 = vmul.f32 %v3429, %v3435
        %v3451 = vmul.f32 %v3430, %v3435
        %v3452 = vadd.f32 %v3399, %v3436
        %v3453 = vadd.f32 %v3400, %v3437
        %v3454 = vadd.f32 %v3401, %v3438
        %v3455 = vadd.f32 %v3402, %v3439
        %v3456 = vadd.f32 %v3403, %v3440
        %v3457 = vadd.f32 %v3404, %v3441
        %v3458 = vadd.f32 %v3405, %v3442
        %v3459 = vadd.f32 %v3406, %v3443
        %v3460 = vadd.f32 %v3407, %v3444
        %v3461 = vadd.f32 %v3408, %v3445
        %v3462 = vadd.f32 %v3409, %v3446
        %v3463 = vadd.f32 %v3410, %v3447
        %v3464 = vadd.f32 %v3411, %v3448
        %v3465 = vadd.f32 %v3412, %v3449
        %v3466 = vadd.f32 %v3413, %v3450
        %v3467 = vadd.f32 %v3414, %v3451
        %v3468 = vld [vmem:[%s3255 + $0x4] sm:$0xff]
        %v3469 = vld [vmem:[%s3255 + $0xc] sm:$0xff]
        %v3470 = vld [vmem:[%s3255 + $0x1c] sm:$0xff]
        %v3471 = vld [vmem:[%s3255 + $0x24] sm:$0xff]
        %v3472 = vld [vmem:[%s3255 + $0x34] sm:$0xff]
        %v3473 = vld [vmem:[%s3255 + $0x3c] sm:$0xff]
        %v3474 = vld [vmem:[%s3255 + $0x4c] sm:$0xff]
        %v3475 = vld [vmem:[%s3255 + $0x54] sm:$0xff]
        %v3476 = vld [vmem:[%s3255 + $0x64] sm:$0xff]
        %v3477 = vld [vmem:[%s3255 + $0x6c] sm:$0xff]
        %v3478 = vld [vmem:[%s3255 + $0x7c] sm:$0xff]
        %v3479 = vld [vmem:[%s3255 + $0x84] sm:$0xff]
        %v3480 = vld [vmem:[%s3255 + $0x94] sm:$0xff]
        %v3481 = vld [vmem:[%s3255 + $0x9c] sm:$0xff]
        %v3482 = vld [vmem:[%s3255 + $0xac] sm:$0xff]
        %v3483 = vld [vmem:[%s3255 + $0xb4] sm:$0xff]
        %v3484 = vld [vmem:[%s1795 + $0x4] sm:$0x1]
        %v3485 = vlaneseq
        %v3486 = vshrl.u32 %v3485, 7
        %v3487 = vsub.s32 0, %v3486
        %v3488 = vrot.slane %v3484, %v3487
        %v3489 = vmul.f32 %v3468, %v3488
        %v3490 = vmul.f32 %v3469, %v3488
        %v3491 = vmul.f32 %v3470, %v3488
        %v3492 = vmul.f32 %v3471, %v3488
        %v3493 = vmul.f32 %v3472, %v3488
        %v3494 = vmul.f32 %v3473, %v3488
        %v3495 = vmul.f32 %v3474, %v3488
        %v3496 = vmul.f32 %v3475, %v3488
        %v3497 = vmul.f32 %v3476, %v3488
        %v3498 = vmul.f32 %v3477, %v3488
        %v3499 = vmul.f32 %v3478, %v3488
        %v3500 = vmul.f32 %v3479, %v3488
        %v3501 = vmul.f32 %v3480, %v3488
        %v3502 = vmul.f32 %v3481, %v3488
        %v3503 = vmul.f32 %v3482, %v3488
        %v3504 = vmul.f32 %v3483, %v3488
        %v3505 = vadd.f32 %v3452, %v3489
        %v3506 = vadd.f32 %v3453, %v3490
        %v3507 = vadd.f32 %v3454, %v3491
        %v3508 = vadd.f32 %v3455, %v3492
        %v3509 = vadd.f32 %v3456, %v3493
        %v3510 = vadd.f32 %v3457, %v3494
        %v3511 = vadd.f32 %v3458, %v3495
        %v3512 = vadd.f32 %v3459, %v3496
        %v3513 = vadd.f32 %v3460, %v3497
        %v3514 = vadd.f32 %v3461, %v3498
        %v3515 = vadd.f32 %v3462, %v3499
        %v3516 = vadd.f32 %v3463, %v3500
        %v3517 = vadd.f32 %v3464, %v3501
        %v3518 = vadd.f32 %v3465, %v3502
        %v3519 = vadd.f32 %v3466, %v3503
        %v3520 = vadd.f32 %v3467, %v3504
        %v3521 = vmul.f32 %v3505, 0.5
        %v3522 = vmul.f32 %v3506, 0.5
        %v3523 = vmul.f32 %v3507, 0.5
        %v3524 = vmul.f32 %v3508, 0.5
        %v3525 = vmul.f32 %v3509, 0.5
        %v3526 = vmul.f32 %v3510, 0.5
        %v3527 = vmul.f32 %v3511, 0.5
        %v3528 = vmul.f32 %v3512, 0.5
        %v3529 = vmul.f32 %v3513, 0.5
        %v3530 = vmul.f32 %v3514, 0.5
        %v3531 = vmul.f32 %v3515, 0.5
        %v3532 = vmul.f32 %v3516, 0.5
        %v3533 = vmul.f32 %v3517, 0.5
        %v3534 = vmul.f32 %v3518, 0.5
        %v3535 = vmul.f32 %v3519, 0.5
        %v3536 = vmul.f32 %v3520, 0.5
        %v3537 = vmul.f32 %v3505, 0.70710677
        %v3538 = vmul.f32 %v3506, 0.70710677
        %v3539 = vmul.f32 %v3507, 0.70710677
        %v3540 = vmul.f32 %v3508, 0.70710677
        %v3541 = vmul.f32 %v3509, 0.70710677
        %v3542 = vmul.f32 %v3510, 0.70710677
        %v3543 = vmul.f32 %v3511, 0.70710677
        %v3544 = vmul.f32 %v3512, 0.70710677
        %v3545 = vmul.f32 %v3513, 0.70710677
        %v3546 = vmul.f32 %v3514, 0.70710677
        %v3547 = vmul.f32 %v3515, 0.70710677
        %v3548 = vmul.f32 %v3516, 0.70710677
        %v3549 = vmul.f32 %v3517, 0.70710677
        %v3550 = vmul.f32 %v3518, 0.70710677
        %v3551 = vmul.f32 %v3519, 0.70710677
        %v3552 = vmul.f32 %v3520, 0.70710677
        %v3553 = verf.f32.pop %v3537
        %v3554 = verf.f32.pop %v3538
        %v3555 = verf.f32.pop %v3539
        %v3556 = verf.f32.pop %v3540
        %v3557 = verf.f32.pop %v3541
        %v3558 = verf.f32.pop %v3542
        %v3559 = verf.f32.pop %v3543
        %v3560 = verf.f32.pop %v3544
        %v3561 = verf.f32.pop %v3545
        %v3562 = verf.f32.pop %v3546
        %v3563 = verf.f32.pop %v3547
        %v3564 = verf.f32.pop %v3548
        %v3565 = verf.f32.pop %v3549
        %v3566 = verf.f32.pop %v3550
        %v3567 = verf.f32.pop %v3551
        %v3568 = verf.f32.pop %v3552
        %v3569 = vadd.f32 %v3553, 1.0
        %v3570 = vadd.f32 %v3554, 1.0
        %v3571 = vadd.f32 %v3555, 1.0
        %v3572 = vadd.f32 %v3556, 1.0
        %v3573 = vadd.f32 %v3557, 1.0
        %v3574 = vadd.f32 %v3558, 1.0
        %v3575 = vadd.f32 %v3559, 1.0
        %v3576 = vadd.f32 %v3560, 1.0
        %v3577 = vadd.f32 %v3561, 1.0
        %v3578 = vadd.f32 %v3562, 1.0
        %v3579 = vadd.f32 %v3563, 1.0
        %v3580 = vadd.f32 %v3564, 1.0
        %v3581 = vadd.f32 %v3565, 1.0
        %v3582 = vadd.f32 %v3566, 1.0
        %v3583 = vadd.f32 %v3567, 1.0
        %v3584 = vadd.f32 %v3568, 1.0
        %v3585 = vmul.f32 %v3521, %v3569
        %v3586 = vmul.f32 %v3522, %v3570
        %v3587 = vmul.f32 %v3523, %v3571
        %v3588 = vmul.f32 %v3524, %v3572
        %v3589 = vmul.f32 %v3525, %v3573
        %v3590 = vmul.f32 %v3526, %v3574
        %v3591 = vmul.f32 %v3527, %v3575
        %v3592 = vmul.f32 %v3528, %v3576
        %v3593 = vmul.f32 %v3529, %v3577
        %v3594 = vmul.f32 %v3530, %v3578
        %v3595 = vmul.f32 %v3531, %v3579
        %v3596 = vmul.f32 %v3532, %v3580
        %v3597 = vmul.f32 %v3533, %v3581
        %v3598 = vmul.f32 %v3534, %v3582
        %v3599 = vmul.f32 %v3535, %v3583
        %v3600 = vmul.f32 %v3536, %v3584
        %s3601 = scalar_lea.vmem [#allocation3], 128
        %3602 = vst [vmem:[%s3601] sm:$0xff] %v3585
        %3603 = vst [vmem:[%s3601 + $0x8] sm:$0xff] %v3586
        %3604 = vst [vmem:[%s3601 + $0x10] sm:$0xff] %v3587
        %3605 = vst [vmem:[%s3601 + $0x18] sm:$0xff] %v3588
        %3606 = vst [vmem:[%s3601 + $0x20] sm:$0xff] %v3589
        %3607 = vst [vmem:[%s3601 + $0x28] sm:$0xff] %v3590
        %3608 = vst [vmem:[%s3601 + $0x30] sm:$0xff] %v3591
        %3609 = vst [vmem:[%s3601 + $0x38] sm:$0xff] %v3592
        %3610 = vst [vmem:[%s3601 + $0x40] sm:$0xff] %v3593
        %3611 = vst [vmem:[%s3601 + $0x48] sm:$0xff] %v3594
        %3612 = vst [vmem:[%s3601 + $0x50] sm:$0xff] %v3595
        %3613 = vst [vmem:[%s3601 + $0x58] sm:$0xff] %v3596
        %3614 = vst [vmem:[%s3601 + $0x60] sm:$0xff] %v3597
        %3615 = vst [vmem:[%s3601 + $0x68] sm:$0xff] %v3598
        %3616 = vst [vmem:[%s3601 + $0x70] sm:$0xff] %v3599
        %3617 = vst [vmem:[%s3601 + $0x78] sm:$0xff] %v3600
        %v3618 = vadd.f32 %v3585, %v3586
        %v3619 = vadd.f32 %v3618, %v3587
        %v3620 = vadd.f32 %v3619, %v3588
        %v3621 = vadd.f32 %v3620, %v3589
        %v3622 = vadd.f32 %v3621, %v3590
        %v3623 = vadd.f32 %v3622, %v3591
        %v3624 = vadd.f32 %v3623, %v3592
        %v3625 = vadd.f32 %v3624, %v3593
        %v3626 = vadd.f32 %v3625, %v3594
        %v3627 = vadd.f32 %v3626, %v3595
        %v3628 = vadd.f32 %v3627, %v3596
        %v3629 = vadd.f32 %v3628, %v3597
        %v3630 = vadd.f32 %v3629, %v3598
        %v3631 = vadd.f32 %v3630, %v3599
        %v3632 = vadd.f32 %v3631, %v3600
        %3633 = vadd.xlane.f32.xlu0 %v3632
        %v3634 = vpop.xlane.xlu0 %3633
        %v3635 = vrot.slane %v3634, 4
        %v3636 = vadd.f32 %v3634, %v3635
        %v3637 = vrot.slane %v3636, 2
        %v3638 = vadd.f32 %v3636, %v3637
        %v3639 = vrot.slane %v3638, 1
        %v3640 = vadd.f32 %v3638, %v3639
        %s3641 = vtos %v3640
        %s3642 = sadd.f32 %s2165, %s3641
        %v3643 = vmul.f32 %v3585, %v3585
        %v3644 = vmul.f32 %v3586, %v3586
        %v3645 = vmul.f32 %v3587, %v3587
        %v3646 = vmul.f32 %v3588, %v3588
        %v3647 = vmul.f32 %v3589, %v3589
        %v3648 = vmul.f32 %v3590, %v3590
        %v3649 = vmul.f32 %v3591, %v3591
        %v3650 = vmul.f32 %v3592, %v3592
        %v3651 = vmul.f32 %v3593, %v3593
        %v3652 = vmul.f32 %v3594, %v3594
        %v3653 = vmul.f32 %v3595, %v3595
        %v3654 = vmul.f32 %v3596, %v3596
        %v3655 = vmul.f32 %v3597, %v3597
        %v3656 = vmul.f32 %v3598, %v3598
        %v3657 = vmul.f32 %v3599, %v3599
        %v3658 = vmul.f32 %v3600, %v3600
        %v3659 = vadd.f32 %v3643, %v3644
        %v3660 = vadd.f32 %v3659, %v3645
        %v3661 = vadd.f32 %v3660, %v3646
        %v3662 = vadd.f32 %v3661, %v3647
        %v3663 = vadd.f32 %v3662, %v3648
        %v3664 = vadd.f32 %v3663, %v3649
        %v3665 = vadd.f32 %v3664, %v3650
        %v3666 = vadd.f32 %v3665, %v3651
        %v3667 = vadd.f32 %v3666, %v3652
        %v3668 = vadd.f32 %v3667, %v3653
        %v3669 = vadd.f32 %v3668, %v3654
        %v3670 = vadd.f32 %v3669, %v3655
        %v3671 = vadd.f32 %v3670, %v3656
        %v3672 = vadd.f32 %v3671, %v3657
        %v3673 = vadd.f32 %v3672, %v3658
        %3674 = vadd.xlane.f32.xlu0 %v3673
        %v3675 = vpop.xlane.xlu0 %3674
        %v3676 = vrot.slane %v3675, 4
        %v3677 = vadd.f32 %v3675, %v3676
        %v3678 = vrot.slane %v3677, 2
        %v3679 = vadd.f32 %v3677, %v3678
        %v3680 = vrot.slane %v3679, 1
        %v3681 = vadd.f32 %v3679, %v3680
        %s3682 = vtos %v3681
        %s3683 = sadd.f32 %s2206, %s3682
        %s3684 = smul.f32 %s3642, 0.00048828125
        %s3685 = smul.f32 %s3683, 0.00048828125
        %s3686 = smul.f32 %s3684, %s3684
        %s3687 = ssub.f32 %s3685, %s3686
        %s3688 = smax.f32 %s3687, 0.0
        %s3689 = sadd.f32 %s3688, 1e-05
        %v3690 = vstv %s3689
        %v3691 = vrsqrt.pop %v3690
        %s3692 = vtos %v3691
        %v3693 = vld [vmem:[#allocation9] sm:$0xf]
        %v3694 = vld [vmem:[#allocation9 + $0x4] sm:$0xf]
        %v3695 = vld [vmem:[#allocation9 + $0x8] sm:$0xf]
        %v3696 = vld [vmem:[#allocation9 + $0xc] sm:$0xf]
        %v3697 = vld [vmem:[#allocation9 + $0x10] sm:$0xf]
        %v3698 = vld [vmem:[#allocation9 + $0x14] sm:$0xf]
        %v3699 = vld [vmem:[#allocation9 + $0x18] sm:$0xf]
        %v3700 = vld [vmem:[#allocation9 + $0x1c] sm:$0xf]
        %v3701 = vld [vmem:[#allocation9 + $0x20] sm:$0xf]
        %v3702 = vld [vmem:[#allocation9 + $0x24] sm:$0xf]
        %v3703 = vld [vmem:[#allocation9 + $0x28] sm:$0xf]
        %v3704 = vld [vmem:[#allocation9 + $0x2c] sm:$0xf]
        %v3705 = vld [vmem:[#allocation9 + $0x30] sm:$0xf]
        %v3706 = vld [vmem:[#allocation9 + $0x34] sm:$0xf]
        %v3707 = vld [vmem:[#allocation9 + $0x38] sm:$0xf]
        %v3708 = vld [vmem:[#allocation9 + $0x3c] sm:$0xf]
        %v3709 = vld [vmem:[#allocation3] sm:$0xff]
        %v3710 = vld [vmem:[#allocation3 + $0x8] sm:$0xff]
        %v3711 = vld [vmem:[#allocation3 + $0x10] sm:$0xff]
        %v3712 = vld [vmem:[#allocation3 + $0x18] sm:$0xff]
        %v3713 = vld [vmem:[#allocation3 + $0x20] sm:$0xff]
        %v3714 = vld [vmem:[#allocation3 + $0x28] sm:$0xff]
        %v3715 = vld [vmem:[#allocation3 + $0x30] sm:$0xff]
        %v3716 = vld [vmem:[#allocation3 + $0x38] sm:$0xff]
        %v3717 = vld [vmem:[#allocation3 + $0x40] sm:$0xff]
        %v3718 = vld [vmem:[#allocation3 + $0x48] sm:$0xff]
        %v3719 = vld [vmem:[#allocation3 + $0x50] sm:$0xff]
        %v3720 = vld [vmem:[#allocation3 + $0x58] sm:$0xff]
        %v3721 = vld [vmem:[#allocation3 + $0x60] sm:$0xff]
        %v3722 = vld [vmem:[#allocation3 + $0x68] sm:$0xff]
        %v3723 = vld [vmem:[#allocation3 + $0x70] sm:$0xff]
        %v3724 = vld [vmem:[#allocation3 + $0x78] sm:$0xff]
        %v3725 = vstv %s3684
        %v3726 = vsub.f32 %v3709, %v3725
        %v3727 = vsub.f32 %v3710, %v3725
        %v3728 = vsub.f32 %v3711, %v3725
        %v3729 = vsub.f32 %v3712, %v3725
        %v3730 = vsub.f32 %v3713, %v3725
        %v3731 = vsub.f32 %v3714, %v3725
        %v3732 = vsub.f32 %v3715, %v3725
        %v3733 = vsub.f32 %v3716, %v3725
        %v3734 = vsub.f32 %v3717, %v3725
        %v3735 = vsub.f32 %v3718, %v3725
        %v3736 = vsub.f32 %v3719, %v3725
        %v3737 = vsub.f32 %v3720, %v3725
        %v3738 = vsub.f32 %v3721, %v3725
        %v3739 = vsub.f32 %v3722, %v3725
        %v3740 = vsub.f32 %v3723, %v3725
        %v3741 = vsub.f32 %v3724, %v3725
        %v3742 = vstv %s3692
        %v3743 = vmul.f32 %v3726, %v3742
        %v3744 = vmul.f32 %v3727, %v3742
        %v3745 = vmul.f32 %v3728, %v3742
        %v3746 = vmul.f32 %v3729, %v3742
        %v3747 = vmul.f32 %v3730, %v3742
        %v3748 = vmul.f32 %v3731, %v3742
        %v3749 = vmul.f32 %v3732, %v3742
        %v3750 = vmul.f32 %v3733, %v3742
        %v3751 = vmul.f32 %v3734, %v3742
        %v3752 = vmul.f32 %v3735, %v3742
        %v3753 = vmul.f32 %v3736, %v3742
        %v3754 = vmul.f32 %v3737, %v3742
        %v3755 = vmul.f32 %v3738, %v3742
        %v3756 = vmul.f32 %v3739, %v3742
        %v3757 = vmul.f32 %v3740, %v3742
        %v3758 = vmul.f32 %v3741, %v3742
        %v3759 = vld [vmem:[%s6] sm:$0x1]
        %v3761 = vlaneseq
        %v3762 = vshrl.u32 %v3761, 7
        %v3763 = vsub.s32 0, %v3762
        %v3764 = vrot.slane %v3759, %v3763
        %v3766 = vmul.f32 %v3743, %v3764
        %v3767 = vmul.f32 %v3744, %v3764
        %v3768 = vmul.f32 %v3745, %v3764
        %v3769 = vmul.f32 %v3746, %v3764
        %v3770 = vmul.f32 %v3747, %v3764
        %v3771 = vmul.f32 %v3748, %v3764
        %v3772 = vmul.f32 %v3749, %v3764
        %v3773 = vmul.f32 %v3750, %v3764
        %v3774 = vmul.f32 %v3751, %v3764
        %v3775 = vmul.f32 %v3752, %v3764
        %v3776 = vmul.f32 %v3753, %v3764
        %v3777 = vmul.f32 %v3754, %v3764
        %v3778 = vmul.f32 %v3755, %v3764
        %v3779 = vmul.f32 %v3756, %v3764
        %v3780 = vmul.f32 %v3757, %v3764
        %v3781 = vmul.f32 %v3758, %v3764
        %v3782 = vld [vmem:[%s7] sm:$0x1]
        %v3784 = vlaneseq
        %v3785 = vshrl.u32 %v3784, 7
        %v3786 = vsub.s32 0, %v3785
        %v3787 = vrot.slane %v3782, %v3786
        %v3789 = vadd.f32 %v3766, %v3787
        %v3790 = vadd.f32 %v3767, %v3787
        %v3791 = vadd.f32 %v3768, %v3787
        %v3792 = vadd.f32 %v3769, %v3787
        %v3793 = vadd.f32 %v3770, %v3787
        %v3794 = vadd.f32 %v3771, %v3787
        %v3795 = vadd.f32 %v3772, %v3787
        %v3796 = vadd.f32 %v3773, %v3787
        %v3797 = vadd.f32 %v3774, %v3787
        %v3798 = vadd.f32 %v3775, %v3787
        %v3799 = vadd.f32 %v3776, %v3787
        %v3800 = vadd.f32 %v3777, %v3787
        %v3801 = vadd.f32 %v3778, %v3787
        %v3802 = vadd.f32 %v3779, %v3787
        %v3803 = vadd.f32 %v3780, %v3787
        %v3804 = vadd.f32 %v3781, %v3787
        %v3805 = vld [vmem:[%s312] sm:$0xff]
        %v3806 = vld [vmem:[%s312 + $0x8] sm:$0xff]
        %v3807 = vld [vmem:[%s312 + $0x10] sm:$0xff]
        %v3808 = vld [vmem:[%s312 + $0x18] sm:$0xff]
        %v3809 = vld [vmem:[%s312 + $0x20] sm:$0xff]
        %v3810 = vld [vmem:[%s312 + $0x28] sm:$0xff]
        %v3811 = vld [vmem:[%s312 + $0x30] sm:$0xff]
        %v3812 = vld [vmem:[%s312 + $0x38] sm:$0xff]
        %v3813 = vld [vmem:[%s312 + $0x40] sm:$0xff]
        %v3814 = vld [vmem:[%s312 + $0x48] sm:$0xff]
        %v3815 = vld [vmem:[%s312 + $0x50] sm:$0xff]
        %v3816 = vld [vmem:[%s312 + $0x58] sm:$0xff]
        %v3817 = vld [vmem:[%s312 + $0x60] sm:$0xff]
        %v3818 = vld [vmem:[%s312 + $0x68] sm:$0xff]
        %v3819 = vld [vmem:[%s312 + $0x70] sm:$0xff]
        %v3820 = vld [vmem:[%s312 + $0x78] sm:$0xff]
        %v3821 = vadd.f32 %v3805, %v3789
        %v3822 = vadd.f32 %v3806, %v3790
        %v3823 = vadd.f32 %v3807, %v3791
        %v3824 = vadd.f32 %v3808, %v3792
        %v3825 = vadd.f32 %v3809, %v3793
        %v3826 = vadd.f32 %v3810, %v3794
        %v3827 = vadd.f32 %v3811, %v3795
        %v3828 = vadd.f32 %v3812, %v3796
        %v3829 = vadd.f32 %v3813, %v3797
        %v3830 = vadd.f32 %v3814, %v3798
        %v3831 = vadd.f32 %v3815, %v3799
        %v3832 = vadd.f32 %v3816, %v3800
        %v3833 = vadd.f32 %v3817, %v3801
        %v3834 = vadd.f32 %v3818, %v3802
        %v3835 = vadd.f32 %v3819, %v3803
        %v3836 = vadd.f32 %v3820, %v3804
        %v3837 = vpack.c.bf16 %v3822, %v3821
        %v3838 = vpack.c.bf16 %v3824, %v3823
        %v3839 = vpack.c.bf16 %v3826, %v3825
        %v3840 = vpack.c.bf16 %v3828, %v3827
        %v3841 = vpack.c.bf16 %v3830, %v3829
        %v3842 = vpack.c.bf16 %v3832, %v3831
        %v3843 = vpack.c.bf16 %v3834, %v3833
        %v3844 = vpack.c.bf16 %v3836, %v3835
        %v3845 = vld [vmem:[%s3] sm:$0x1]
        %v3847 = vlaneseq
        %v3848 = vshrl.u32 %v3847, 7
        %v3849 = vsub.s32 0, %v3848
        %v3850 = vrot.slane %v3845, %v3849
        %v3868 = vunpack.c.l.b16 %v3693
        %v3869 = vunpack.c.l.b16 %v3694
        %v3870 = vunpack.c.l.b16 %v3695
        %v3871 = vunpack.c.l.b16 %v3696
        %v3872 = vunpack.c.l.b16 %v3697
        %v3873 = vunpack.c.l.b16 %v3698
        %v3874 = vunpack.c.l.b16 %v3699
        %v3875 = vunpack.c.l.b16 %v3700
        %v3876 = vunpack.c.l.b16 %v3701
        %v3877 = vunpack.c.l.b16 %v3702
        %v3878 = vunpack.c.l.b16 %v3703
        %v3879 = vunpack.c.l.b16 %v3704
        %v3880 = vunpack.c.l.b16 %v3705
        %v3881 = vunpack.c.l.b16 %v3706
        %v3882 = vunpack.c.l.b16 %v3707
        %v3883 = vunpack.c.l.b16 %v3708
        %v3884 = vpack.c.b16 %v3869, %v3868
        %v3885 = vpack.c.b16 %v3871, %v3870
        %v3886 = vpack.c.b16 %v3873, %v3872
        %v3887 = vpack.c.b16 %v3875, %v3874
        %v3888 = vpack.c.b16 %v3877, %v3876
        %v3889 = vpack.c.b16 %v3879, %v3878
        %v3890 = vpack.c.b16 %v3881, %v3880
        %v3891 = vpack.c.b16 %v3883, %v3882
        %3900 = vmatprep.subr.bf16.mxu0 0
        %3901 = vmatpush1.bf16.msra.mxu0 %v3884
        %3902 = vmatprep.subr.bf16.mxu0 0
        %3903 = vmatpush1.bf16.msra.mxu0 %v3885
        %3904 = vmatprep.subr.bf16.mxu0 0
        %3905 = vmatpush1.bf16.msra.mxu0 %v3886
        %3906 = vmatprep.subr.bf16.mxu0 0
        %3907 = vmatpush1.bf16.msra.mxu0 %v3887
        %3908 = vmatprep.subr.bf16.mxu0 0
        %3909 = vmatpush1.bf16.msra.mxu0 %v3888
        %3910 = vmatprep.subr.bf16.mxu0 0
        %3911 = vmatpush1.bf16.msra.mxu0 %v3889
        %3912 = vmatprep.subr.bf16.mxu0 0
        %3913 = vmatpush1.bf16.msra.mxu0 %v3890
        %3914 = vmatprep.subr.bf16.mxu0 0
        %3915 = vmatpush1.bf16.msra.mxu0 %v3891
        %3916 = vmatprep.subr.bf16.mxu0 0
        %3917 = vmatpush1.bf16.msra.mxu0 0
        %3918 = vmatprep.subr.bf16.mxu0 0
        %3919 = vmatpush1.bf16.msra.mxu0 0
        %3920 = vmatprep.subr.bf16.mxu0 0
        %3921 = vmatpush1.bf16.msra.mxu0 0
        %3922 = vmatprep.subr.bf16.mxu0 0
        %3923 = vmatpush1.bf16.msra.mxu0 0
        %3924 = vmatprep.subr.bf16.mxu0 0
        %3925 = vmatpush1.bf16.msra.mxu0 0
        %3926 = vmatprep.subr.bf16.mxu0 0
        %3927 = vmatpush1.bf16.msra.mxu0 0
        %3928 = vmatprep.subr.bf16.mxu0 0
        %3929 = vmatpush1.bf16.msra.mxu0 0
        %3930 = vmatprep.subr.bf16.mxu0 0
        %3931 = vmatpush1.bf16.msra.mxu0 0
        %3932 = vmatprep.mubr.bf16.mxu0 0
        %3933 = vmatmul.mubr.bf16.gmra.mrb[0].mxu0 %v3837
        %v3934 = vpop.f32.mrb[0].mxu0
        %v3935 = vadd.f32 %v3850, %v3934
        %v3936 = vpop.f32.mrb[0].mxu0
        %v3937 = vpop.f32.mrb[0].mxu0
        %v3938 = vadd.f32 %v3850, %v3937
        %v3939 = vpop.f32.mrb[0].mxu0
        %3940 = vmatprep.mubr.bf16.mxu0 0
        %3941 = vmatmul.mubr.bf16.gmra.mrb[0].mxu0 %v3838
        %v3942 = vpop.f32.mrb[0].mxu0
        %v3943 = vadd.f32 %v3850, %v3942
        %v3944 = vpop.f32.mrb[0].mxu0
        %v3945 = vpop.f32.mrb[0].mxu0
        %v3946 = vadd.f32 %v3850, %v3945
        %v3947 = vpop.f32.mrb[0].mxu0
        %3948 = vmatprep.mubr.bf16.mxu0 0
        %3949 = vmatmul.mubr.bf16.gmra.mrb[0].mxu0 %v3839
        %v3950 = vpop.f32.mrb[0].mxu0
        %v3951 = vadd.f32 %v3850, %v3950
        %v3952 = vpop.f32.mrb[0].mxu0
        %v3953 = vpop.f32.mrb[0].mxu0
        %v3954 = vadd.f32 %v3850, %v3953
        %v3955 = vpop.f32.mrb[0].mxu0
        %3956 = vmatprep.mubr.bf16.mxu0 0
        %3957 = vmatmul.mubr.bf16.gmra.mrb[0].mxu0 %v3840
        %v3958 = vpop.f32.mrb[0].mxu0
        %v3959 = vadd.f32 %v3850, %v3958
        %v3960 = vpop.f32.mrb[0].mxu0
        %v3961 = vpop.f32.mrb[0].mxu0
        %v3962 = vadd.f32 %v3850, %v3961
        %v3963 = vpop.f32.mrb[0].mxu0
        %3964 = vmatprep.mubr.bf16.mxu0 0
        %3965 = vmatmul.mubr.bf16.gmra.mrb[0].mxu0 %v3841
        %v3966 = vpop.f32.mrb[0].mxu0
        %v3967 = vadd.f32 %v3850, %v3966
        %v3968 = vpop.f32.mrb[0].mxu0
        %v3969 = vpop.f32.mrb[0].mxu0
        %v3970 = vadd.f32 %v3850, %v3969
        %v3971 = vpop.f32.mrb[0].mxu0
        %3972 = vmatprep.mubr.bf16.mxu0 0
        %3973 = vmatmul.mubr.bf16.gmra.mrb[0].mxu0 %v3842
        %v3974 = vpop.f32.mrb[0].mxu0
        %v3975 = vadd.f32 %v3850, %v3974
        %v3976 = vpop.f32.mrb[0].mxu0
        %v3977 = vpop.f32.mrb[0].mxu0
        %v3978 = vadd.f32 %v3850, %v3977
        %v3979 = vpop.f32.mrb[0].mxu0
        %3980 = vmatprep.mubr.bf16.mxu0 0
        %3981 = vmatmul.mubr.bf16.gmra.mrb[0].mxu0 %v3843
        %v3982 = vpop.f32.mrb[0].mxu0
        %v3983 = vadd.f32 %v3850, %v3982
        %v3984 = vpop.f32.mrb[0].mxu0
        %v3985 = vpop.f32.mrb[0].mxu0
        %v3986 = vadd.f32 %v3850, %v3985
        %v3987 = vpop.f32.mrb[0].mxu0
        %3988 = vmatprep.mubr.bf16.mxu0 0
        %3989 = vmatmul.mubr.bf16.gmra.mrb[0].mxu0 %v3844
        %v3990 = vpop.f32.mrb[0].mxu0
        %v3991 = vadd.f32 %v3850, %v3990
        %v3992 = vpop.f32.mrb[0].mxu0
        %v3993 = vpop.f32.mrb[0].mxu0
        %v3994 = vadd.f32 %v3850, %v3993
        %v3995 = vpop.f32.mrb[0].mxu0
        %3996 = vdwg.mxu0
        %v3997 = vmul.f32 %v3935, 0.5
        %v3998 = vmul.f32 %v3938, 0.5
        %v3999 = vmul.f32 %v3943, 0.5
        %v4000 = vmul.f32 %v3946, 0.5
        %v4001 = vmul.f32 %v3951, 0.5
        %v4002 = vmul.f32 %v3954, 0.5
        %v4003 = vmul.f32 %v3959, 0.5
        %v4004 = vmul.f32 %v3962, 0.5
        %v4005 = vmul.f32 %v3967, 0.5
        %v4006 = vmul.f32 %v3970, 0.5
        %v4007 = vmul.f32 %v3975, 0.5
        %v4008 = vmul.f32 %v3978, 0.5
        %v4009 = vmul.f32 %v3983, 0.5
        %v4010 = vmul.f32 %v3986, 0.5
        %v4011 = vmul.f32 %v3991, 0.5
        %v4012 = vmul.f32 %v3994, 0.5
        %v4013 = vmul.f32 %v3935, 0.70710677
        %v4014 = vmul.f32 %v3938, 0.70710677
        %v4015 = vmul.f32 %v3943, 0.70710677
        %v4016 = vmul.f32 %v3946, 0.70710677
        %v4017 = vmul.f32 %v3951, 0.70710677
        %v4018 = vmul.f32 %v3954, 0.70710677
        %v4019 = vmul.f32 %v3959, 0.70710677
        %v4020 = vmul.f32 %v3962, 0.70710677
        %v4021 = vmul.f32 %v3967, 0.70710677
        %v4022 = vmul.f32 %v3970, 0.70710677
        %v4023 = vmul.f32 %v3975, 0.70710677
        %v4024 = vmul.f32 %v3978, 0.70710677
        %v4025 = vmul.f32 %v3983, 0.70710677
        %v4026 = vmul.f32 %v3986, 0.70710677
        %v4027 = vmul.f32 %v3991, 0.70710677
        %v4028 = vmul.f32 %v3994, 0.70710677
        %v4029 = verf.f32.pop %v4013
        %v4030 = verf.f32.pop %v4014
        %v4031 = verf.f32.pop %v4015
        %v4032 = verf.f32.pop %v4016
        %v4033 = verf.f32.pop %v4017
        %v4034 = verf.f32.pop %v4018
        %v4035 = verf.f32.pop %v4019
        %v4036 = verf.f32.pop %v4020
        %v4037 = verf.f32.pop %v4021
        %v4038 = verf.f32.pop %v4022
        %v4039 = verf.f32.pop %v4023
        %v4040 = verf.f32.pop %v4024
        %v4041 = verf.f32.pop %v4025
        %v4042 = verf.f32.pop %v4026
        %v4043 = verf.f32.pop %v4027
        %v4044 = verf.f32.pop %v4028
        %v4045 = vadd.f32 %v4029, 1.0
        %v4046 = vadd.f32 %v4030, 1.0
        %v4047 = vadd.f32 %v4031, 1.0
        %v4048 = vadd.f32 %v4032, 1.0
        %v4049 = vadd.f32 %v4033, 1.0
        %v4050 = vadd.f32 %v4034, 1.0
        %v4051 = vadd.f32 %v4035, 1.0
        %v4052 = vadd.f32 %v4036, 1.0
        %v4053 = vadd.f32 %v4037, 1.0
        %v4054 = vadd.f32 %v4038, 1.0
        %v4055 = vadd.f32 %v4039, 1.0
        %v4056 = vadd.f32 %v4040, 1.0
        %v4057 = vadd.f32 %v4041, 1.0
        %v4058 = vadd.f32 %v4042, 1.0
        %v4059 = vadd.f32 %v4043, 1.0
        %v4060 = vadd.f32 %v4044, 1.0
        %v4061 = vmul.f32 %v3997, %v4045
        %v4062 = vmul.f32 %v3998, %v4046
        %v4063 = vmul.f32 %v3999, %v4047
        %v4064 = vmul.f32 %v4000, %v4048
        %v4065 = vmul.f32 %v4001, %v4049
        %v4066 = vmul.f32 %v4002, %v4050
        %v4067 = vmul.f32 %v4003, %v4051
        %v4068 = vmul.f32 %v4004, %v4052
        %v4069 = vmul.f32 %v4005, %v4053
        %v4070 = vmul.f32 %v4006, %v4054
        %v4071 = vmul.f32 %v4007, %v4055
        %v4072 = vmul.f32 %v4008, %v4056
        %v4073 = vmul.f32 %v4009, %v4057
        %v4074 = vmul.f32 %v4010, %v4058
        %v4075 = vmul.f32 %v4011, %v4059
        %v4076 = vmul.f32 %v4012, %v4060
        %4077 = vst [vmem:[%s352] sm:$0xff] %v4061
        %4078 = vst [vmem:[%s352 + $0x8] sm:$0xff] %v4062
        %4079 = vst [vmem:[%s352 + $0x10] sm:$0xff] %v4063
        %4080 = vst [vmem:[%s352 + $0x18] sm:$0xff] %v4064
        %4081 = vst [vmem:[%s352 + $0x20] sm:$0xff] %v4065
        %4082 = vst [vmem:[%s352 + $0x28] sm:$0xff] %v4066
        %4083 = vst [vmem:[%s352 + $0x30] sm:$0xff] %v4067
        %4084 = vst [vmem:[%s352 + $0x38] sm:$0xff] %v4068
        %4085 = vst [vmem:[%s352 + $0x40] sm:$0xff] %v4069
        %4086 = vst [vmem:[%s352 + $0x48] sm:$0xff] %v4070
        %4087 = vst [vmem:[%s352 + $0x50] sm:$0xff] %v4071
        %4088 = vst [vmem:[%s352 + $0x58] sm:$0xff] %v4072
        %4089 = vst [vmem:[%s352 + $0x60] sm:$0xff] %v4073
        %4090 = vst [vmem:[%s352 + $0x68] sm:$0xff] %v4074
        %4091 = vst [vmem:[%s352 + $0x70] sm:$0xff] %v4075
        %4092 = vst [vmem:[%s352 + $0x78] sm:$0xff] %v4076
        %v4093 = vld [vmem:[%s3601] sm:$0xff]
        %v4094 = vld [vmem:[%s3601 + $0x8] sm:$0xff]
        %v4095 = vld [vmem:[%s3601 + $0x10] sm:$0xff]
        %v4096 = vld [vmem:[%s3601 + $0x18] sm:$0xff]
        %v4097 = vld [vmem:[%s3601 + $0x20] sm:$0xff]
        %v4098 = vld [vmem:[%s3601 + $0x28] sm:$0xff]
        %v4099 = vld [vmem:[%s3601 + $0x30] sm:$0xff]
        %v4100 = vld [vmem:[%s3601 + $0x38] sm:$0xff]
        %v4101 = vld [vmem:[%s3601 + $0x40] sm:$0xff]
        %v4102 = vld [vmem:[%s3601 + $0x48] sm:$0xff]
        %v4103 = vld [vmem:[%s3601 + $0x50] sm:$0xff]
        %v4104 = vld [vmem:[%s3601 + $0x58] sm:$0xff]
        %v4105 = vld [vmem:[%s3601 + $0x60] sm:$0xff]
        %v4106 = vld [vmem:[%s3601 + $0x68] sm:$0xff]
        %v4107 = vld [vmem:[%s3601 + $0x70] sm:$0xff]
        %v4108 = vld [vmem:[%s3601 + $0x78] sm:$0xff]
        %v4109 = vsub.f32 %v4093, %v3725
        %v4110 = vsub.f32 %v4094, %v3725
        %v4111 = vsub.f32 %v4095, %v3725
        %v4112 = vsub.f32 %v4096, %v3725
        %v4113 = vsub.f32 %v4097, %v3725
        %v4114 = vsub.f32 %v4098, %v3725
        %v4115 = vsub.f32 %v4099, %v3725
        %v4116 = vsub.f32 %v4100, %v3725
        %v4117 = vsub.f32 %v4101, %v3725
        %v4118 = vsub.f32 %v4102, %v3725
        %v4119 = vsub.f32 %v4103, %v3725
        %v4120 = vsub.f32 %v4104, %v3725
        %v4121 = vsub.f32 %v4105, %v3725
        %v4122 = vsub.f32 %v4106, %v3725
        %v4123 = vsub.f32 %v4107, %v3725
        %v4124 = vsub.f32 %v4108, %v3725
        %v4125 = vmul.f32 %v4109, %v3742
        %v4126 = vmul.f32 %v4110, %v3742
        %v4127 = vmul.f32 %v4111, %v3742
        %v4128 = vmul.f32 %v4112, %v3742
        %v4129 = vmul.f32 %v4113, %v3742
        %v4130 = vmul.f32 %v4114, %v3742
        %v4131 = vmul.f32 %v4115, %v3742
        %v4132 = vmul.f32 %v4116, %v3742
        %v4133 = vmul.f32 %v4117, %v3742
        %v4134 = vmul.f32 %v4118, %v3742
        %v4135 = vmul.f32 %v4119, %v3742
        %v4136 = vmul.f32 %v4120, %v3742
        %v4137 = vmul.f32 %v4121, %v3742
        %v4138 = vmul.f32 %v4122, %v3742
        %v4139 = vmul.f32 %v4123, %v3742
        %v4140 = vmul.f32 %v4124, %v3742
        %v4141 = vld [vmem:[%s6] sm:$0x1]
        %v4143 = vlaneseq
        %v4144 = vshrl.u32 %v4143, 7
        %v4145 = vsub.s32 0, %v4144
        %v4146 = vrot.slane %v4141, %v4145
        %v4148 = vmul.f32 %v4125, %v4146
        %v4149 = vmul.f32 %v4126, %v4146
        %v4150 = vmul.f32 %v4127, %v4146
        %v4151 = vmul.f32 %v4128, %v4146
        %v4152 = vmul.f32 %v4129, %v4146
        %v4153 = vmul.f32 %v4130, %v4146
        %v4154 = vmul.f32 %v4131, %v4146
        %v4155 = vmul.f32 %v4132, %v4146
        %v4156 = vmul.f32 %v4133, %v4146
        %v4157 = vmul.f32 %v4134, %v4146
        %v4158 = vmul.f32 %v4135, %v4146
        %v4159 = vmul.f32 %v4136, %v4146
        %v4160 = vmul.f32 %v4137, %v4146
        %v4161 = vmul.f32 %v4138, %v4146
        %v4162 = vmul.f32 %v4139, %v4146
        %v4163 = vmul.f32 %v4140, %v4146
        %v4164 = vld [vmem:[%s7] sm:$0x1]
        %v4166 = vlaneseq
        %v4167 = vshrl.u32 %v4166, 7
        %v4168 = vsub.s32 0, %v4167
        %v4169 = vrot.slane %v4164, %v4168
        %v4171 = vadd.f32 %v4148, %v4169
        %v4172 = vadd.f32 %v4149, %v4169
        %v4173 = vadd.f32 %v4150, %v4169
        %v4174 = vadd.f32 %v4151, %v4169
        %v4175 = vadd.f32 %v4152, %v4169
        %v4176 = vadd.f32 %v4153, %v4169
        %v4177 = vadd.f32 %v4154, %v4169
        %v4178 = vadd.f32 %v4155, %v4169
        %v4179 = vadd.f32 %v4156, %v4169
        %v4180 = vadd.f32 %v4157, %v4169
        %v4181 = vadd.f32 %v4158, %v4169
        %v4182 = vadd.f32 %v4159, %v4169
        %v4183 = vadd.f32 %v4160, %v4169
        %v4184 = vadd.f32 %v4161, %v4169
        %v4185 = vadd.f32 %v4162, %v4169
        %v4186 = vadd.f32 %v4163, %v4169
        %s4187 = scalar_lea.vmem %s312, 128 [#allocation4]
        %v4188 = vld [vmem:[%s4187] sm:$0xff]
        %v4189 = vld [vmem:[%s4187 + $0x8] sm:$0xff]
        %v4190 = vld [vmem:[%s4187 + $0x10] sm:$0xff]
        %v4191 = vld [vmem:[%s4187 + $0x18] sm:$0xff]
        %v4192 = vld [vmem:[%s4187 + $0x20] sm:$0xff]
        %v4193 = vld [vmem:[%s4187 + $0x28] sm:$0xff]
        %v4194 = vld [vmem:[%s4187 + $0x30] sm:$0xff]
        %v4195 = vld [vmem:[%s4187 + $0x38] sm:$0xff]
        %v4196 = vld [vmem:[%s4187 + $0x40] sm:$0xff]
        %v4197 = vld [vmem:[%s4187 + $0x48] sm:$0xff]
        %v4198 = vld [vmem:[%s4187 + $0x50] sm:$0xff]
        %v4199 = vld [vmem:[%s4187 + $0x58] sm:$0xff]
        %v4200 = vld [vmem:[%s4187 + $0x60] sm:$0xff]
        %v4201 = vld [vmem:[%s4187 + $0x68] sm:$0xff]
        %v4202 = vld [vmem:[%s4187 + $0x70] sm:$0xff]
        %v4203 = vld [vmem:[%s4187 + $0x78] sm:$0xff]
        %v4204 = vadd.f32 %v4188, %v4171
        %v4205 = vadd.f32 %v4189, %v4172
        %v4206 = vadd.f32 %v4190, %v4173
        %v4207 = vadd.f32 %v4191, %v4174
        %v4208 = vadd.f32 %v4192, %v4175
        %v4209 = vadd.f32 %v4193, %v4176
        %v4210 = vadd.f32 %v4194, %v4177
        %v4211 = vadd.f32 %v4195, %v4178
        %v4212 = vadd.f32 %v4196, %v4179
        %v4213 = vadd.f32 %v4197, %v4180
        %v4214 = vadd.f32 %v4198, %v4181
        %v4215 = vadd.f32 %v4199, %v4182
        %v4216 = vadd.f32 %v4200, %v4183
        %v4217 = vadd.f32 %v4201, %v4184
        %v4218 = vadd.f32 %v4202, %v4185
        %v4219 = vadd.f32 %v4203, %v4186
        %v4220 = vpack.c.bf16 %v4205, %v4204
        %v4221 = vpack.c.bf16 %v4207, %v4206
        %v4222 = vpack.c.bf16 %v4209, %v4208
        %v4223 = vpack.c.bf16 %v4211, %v4210
        %v4224 = vpack.c.bf16 %v4213, %v4212
        %v4225 = vpack.c.bf16 %v4215, %v4214
        %v4226 = vpack.c.bf16 %v4217, %v4216
        %v4227 = vpack.c.bf16 %v4219, %v4218
        %v4228 = vld [vmem:[%s3] sm:$0x1]
        %v4230 = vlaneseq
        %v4231 = vshrl.u32 %v4230, 7
        %v4232 = vsub.s32 0, %v4231
        %v4233 = vrot.slane %v4228, %v4232
        %4235 = vmatprep.subr.bf16.mxu0 0
        %4236 = vmatpush1.bf16.msra.mxu0 %v3884
        %4237 = vmatprep.subr.bf16.mxu0 0
        %4238 = vmatpush1.bf16.msra.mxu0 %v3885
        %4239 = vmatprep.subr.bf16.mxu0 0
        %4240 = vmatpush1.bf16.msra.mxu0 %v3886
        %4241 = vmatprep.subr.bf16.mxu0 0
        %4242 = vmatpush1.bf16.msra.mxu0 %v3887
        %4243 = vmatprep.subr.bf16.mxu0 0
        %4244 = vmatpush1.bf16.msra.mxu0 %v3888
        %4245 = vmatprep.subr.bf16.mxu0 0
        %4246 = vmatpush1.bf16.msra.mxu0 %v3889
        %4247 = vmatprep.subr.bf16.mxu0 0
        %4248 = vmatpush1.bf16.msra.mxu0 %v3890
        %4249 = vmatprep.subr.bf16.mxu0 0
        %4250 = vmatpush1.bf16.msra.mxu0 %v3891
        %4251 = vmatprep.subr.bf16.mxu0 0
        %4252 = vmatpush1.bf16.msra.mxu0 0
        %4253 = vmatprep.subr.bf16.mxu0 0
        %4254 = vmatpush1.bf16.msra.mxu0 0
        %4255 = vmatprep.subr.bf16.mxu0 0
        %4256 = vmatpush1.bf16.msra.mxu0 0
        %4257 = vmatprep.subr.bf16.mxu0 0
        %4258 = vmatpush1.bf16.msra.mxu0 0
        %4259 = vmatprep.subr.bf16.mxu0 0
        %4260 = vmatpush1.bf16.msra.mxu0 0
        %4261 = vmatprep.subr.bf16.mxu0 0
        %4262 = vmatpush1.bf16.msra.mxu0 0
        %4263 = vmatprep.subr.bf16.mxu0 0
        %4264 = vmatpush1.bf16.msra.mxu0 0
        %4265 = vmatprep.subr.bf16.mxu0 0
        %4266 = vmatpush1.bf16.msra.mxu0 0
        %4267 = vmatprep.mubr.bf16.mxu0 0
        %4268 = vmatmul.mubr.bf16.gmra.mrb[0].mxu0 %v4220
        %v4269 = vpop.f32.mrb[0].mxu0
        %v4270 = vadd.f32 %v4233, %v4269
        %v4271 = vpop.f32.mrb[0].mxu0
        %v4272 = vpop.f32.mrb[0].mxu0
        %v4273 = vadd.f32 %v4233, %v4272
        %v4274 = vpop.f32.mrb[0].mxu0
        %4275 = vmatprep.mubr.bf16.mxu0 0
        %4276 = vmatmul.mubr.bf16.gmra.mrb[0].mxu0 %v4221
        %v4277 = vpop.f32.mrb[0].mxu0
        %v4278 = vadd.f32 %v4233, %v4277
        %v4279 = vpop.f32.mrb[0].mxu0
        %v4280 = vpop.f32.mrb[0].mxu0
        %v4281 = vadd.f32 %v4233, %v4280
        %v4282 = vpop.f32.mrb[0].mxu0
        %4283 = vmatprep.mubr.bf16.mxu0 0
        %4284 = vmatmul.mubr.bf16.gmra.mrb[0].mxu0 %v4222
        %v4285 = vpop.f32.mrb[0].mxu0
        %v4286 = vadd.f32 %v4233, %v4285
        %v4287 = vpop.f32.mrb[0].mxu0
        %v4288 = vpop.f32.mrb[0].mxu0
        %v4289 = vadd.f32 %v4233, %v4288
        %v4290 = vpop.f32.mrb[0].mxu0
        %4291 = vmatprep.mubr.bf16.mxu0 0
        %4292 = vmatmul.mubr.bf16.gmra.mrb[0].mxu0 %v4223
        %v4293 = vpop.f32.mrb[0].mxu0
        %v4294 = vadd.f32 %v4233, %v4293
        %v4295 = vpop.f32.mrb[0].mxu0
        %v4296 = vpop.f32.mrb[0].mxu0
        %v4297 = vadd.f32 %v4233, %v4296
        %v4298 = vpop.f32.mrb[0].mxu0
        %4299 = vmatprep.mubr.bf16.mxu0 0
        %4300 = vmatmul.mubr.bf16.gmra.mrb[0].mxu0 %v4224
        %v4301 = vpop.f32.mrb[0].mxu0
        %v4302 = vadd.f32 %v4233, %v4301
        %v4303 = vpop.f32.mrb[0].mxu0
        %v4304 = vpop.f32.mrb[0].mxu0
        %v4305 = vadd.f32 %v4233, %v4304
        %v4306 = vpop.f32.mrb[0].mxu0
        %4307 = vmatprep.mubr.bf16.mxu0 0
        %4308 = vmatmul.mubr.bf16.gmra.mrb[0].mxu0 %v4225
        %v4309 = vpop.f32.mrb[0].mxu0
        %v4310 = vadd.f32 %v4233, %v4309
        %v4311 = vpop.f32.mrb[0].mxu0
        %v4312 = vpop.f32.mrb[0].mxu0
        %v4313 = vadd.f32 %v4233, %v4312
        %v4314 = vpop.f32.mrb[0].mxu0
        %4315 = vmatprep.mubr.bf16.mxu0 0
        %4316 = vmatmul.mubr.bf16.gmra.mrb[0].mxu0 %v4226
        %v4317 = vpop.f32.mrb[0].mxu0
        %v4318 = vadd.f32 %v4233, %v4317
        %v4319 = vpop.f32.mrb[0].mxu0
        %v4320 = vpop.f32.mrb[0].mxu0
        %v4321 = vadd.f32 %v4233, %v4320
        %v4322 = vpop.f32.mrb[0].mxu0
        %4323 = vmatprep.mubr.bf16.mxu0 0
        %4324 = vmatmul.mubr.bf16.gmra.mrb[0].mxu0 %v4227
        %v4325 = vpop.f32.mrb[0].mxu0
        %v4326 = vadd.f32 %v4233, %v4325
        %v4327 = vpop.f32.mrb[0].mxu0
        %v4328 = vpop.f32.mrb[0].mxu0
        %v4329 = vadd.f32 %v4233, %v4328
        %v4330 = vpop.f32.mrb[0].mxu0
        %4331 = vdwg.mxu0
        %v4332 = vmul.f32 %v4270, 0.5
        %v4333 = vmul.f32 %v4273, 0.5
        %v4334 = vmul.f32 %v4278, 0.5
        %v4335 = vmul.f32 %v4281, 0.5
        %v4336 = vmul.f32 %v4286, 0.5
        %v4337 = vmul.f32 %v4289, 0.5
        %v4338 = vmul.f32 %v4294, 0.5
        %v4339 = vmul.f32 %v4297, 0.5
        %v4340 = vmul.f32 %v4302, 0.5
        %v4341 = vmul.f32 %v4305, 0.5
        %v4342 = vmul.f32 %v4310, 0.5
        %v4343 = vmul.f32 %v4313, 0.5
        %v4344 = vmul.f32 %v4318, 0.5
        %v4345 = vmul.f32 %v4321, 0.5
        %v4346 = vmul.f32 %v4326, 0.5
        %v4347 = vmul.f32 %v4329, 0.5
        %v4348 = vmul.f32 %v4270, 0.70710677
        %v4349 = vmul.f32 %v4273, 0.70710677
        %v4350 = vmul.f32 %v4278, 0.70710677
        %v4351 = vmul.f32 %v4281, 0.70710677
        %v4352 = vmul.f32 %v4286, 0.70710677
        %v4353 = vmul.f32 %v4289, 0.70710677
        %v4354 = vmul.f32 %v4294, 0.70710677
        %v4355 = vmul.f32 %v4297, 0.70710677
        %v4356 = vmul.f32 %v4302, 0.70710677
        %v4357 = vmul.f32 %v4305, 0.70710677
        %v4358 = vmul.f32 %v4310, 0.70710677
        %v4359 = vmul.f32 %v4313, 0.70710677
        %v4360 = vmul.f32 %v4318, 0.70710677
        %v4361 = vmul.f32 %v4321, 0.70710677
        %v4362 = vmul.f32 %v4326, 0.70710677
        %v4363 = vmul.f32 %v4329, 0.70710677
        %v4364 = verf.f32.pop %v4348
        %v4365 = verf.f32.pop %v4349
        %v4366 = verf.f32.pop %v4350
        %v4367 = verf.f32.pop %v4351
        %v4368 = verf.f32.pop %v4352
        %v4369 = verf.f32.pop %v4353
        %v4370 = verf.f32.pop %v4354
        %v4371 = verf.f32.pop %v4355
        %v4372 = verf.f32.pop %v4356
        %v4373 = verf.f32.pop %v4357
        %v4374 = verf.f32.pop %v4358
        %v4375 = verf.f32.pop %v4359
        %v4376 = verf.f32.pop %v4360
        %v4377 = verf.f32.pop %v4361
        %v4378 = verf.f32.pop %v4362
        %v4379 = verf.f32.pop %v4363
        %v4380 = vadd.f32 %v4364, 1.0
        %v4381 = vadd.f32 %v4365, 1.0
        %v4382 = vadd.f32 %v4366, 1.0
        %v4383 = vadd.f32 %v4367, 1.0
        %v4384 = vadd.f32 %v4368, 1.0
        %v4385 = vadd.f32 %v4369, 1.0
        %v4386 = vadd.f32 %v4370, 1.0
        %v4387 = vadd.f32 %v4371, 1.0
        %v4388 = vadd.f32 %v4372, 1.0
        %v4389 = vadd.f32 %v4373, 1.0
        %v4390 = vadd.f32 %v4374, 1.0
        %v4391 = vadd.f32 %v4375, 1.0
        %v4392 = vadd.f32 %v4376, 1.0
        %v4393 = vadd.f32 %v4377, 1.0
        %v4394 = vadd.f32 %v4378, 1.0
        %v4395 = vadd.f32 %v4379, 1.0
        %v4396 = vmul.f32 %v4332, %v4380
        %v4397 = vmul.f32 %v4333, %v4381
        %v4398 = vmul.f32 %v4334, %v4382
        %v4399 = vmul.f32 %v4335, %v4383
        %v4400 = vmul.f32 %v4336, %v4384
        %v4401 = vmul.f32 %v4337, %v4385
        %v4402 = vmul.f32 %v4338, %v4386
        %v4403 = vmul.f32 %v4339, %v4387
        %v4404 = vmul.f32 %v4340, %v4388
        %v4405 = vmul.f32 %v4341, %v4389
        %v4406 = vmul.f32 %v4342, %v4390
        %v4407 = vmul.f32 %v4343, %v4391
        %v4408 = vmul.f32 %v4344, %v4392
        %v4409 = vmul.f32 %v4345, %v4393
        %v4410 = vmul.f32 %v4346, %v4394
        %v4411 = vmul.f32 %v4347, %v4395
        %s4412 = scalar_lea.vmem %s352, 128 [#allocation10]
        %4413 = vst [vmem:[%s4412] sm:$0xff] %v4396
        %4414 = vst [vmem:[%s4412 + $0x8] sm:$0xff] %v4397
        %4415 = vst [vmem:[%s4412 + $0x10] sm:$0xff] %v4398
        %4416 = vst [vmem:[%s4412 + $0x18] sm:$0xff] %v4399
        %4417 = vst [vmem:[%s4412 + $0x20] sm:$0xff] %v4400
        %4418 = vst [vmem:[%s4412 + $0x28] sm:$0xff] %v4401
        %4419 = vst [vmem:[%s4412 + $0x30] sm:$0xff] %v4402
        %4420 = vst [vmem:[%s4412 + $0x38] sm:$0xff] %v4403
        %4421 = vst [vmem:[%s4412 + $0x40] sm:$0xff] %v4404
        %4422 = vst [vmem:[%s4412 + $0x48] sm:$0xff] %v4405
        %4423 = vst [vmem:[%s4412 + $0x50] sm:$0xff] %v4406
        %4424 = vst [vmem:[%s4412 + $0x58] sm:$0xff] %v4407
        %4425 = vst [vmem:[%s4412 + $0x60] sm:$0xff] %v4408
        %4426 = vst [vmem:[%s4412 + $0x68] sm:$0xff] %v4409
        %4427 = vst [vmem:[%s4412 + $0x70] sm:$0xff] %v4410
        %4428 = vst [vmem:[%s4412 + $0x78] sm:$0xff] %v4411
        %s4429 = sand.u32 %s207, 1
        %s4430 = scalar_lea.sflag [#allocation6], %s4429
        %s4431 = sand.u32 %s207, 1
        %s4432 = smul.addr %s4431, 256
        %s4433 = scalar_lea.vmem [#allocation10], %s4432
        // Predicated region
        $region65: #{tpu_custom_call.1} parent=51 // pred_check
          %p4434 = pneg %p217
        $region66: #{tpu_custom_call.1} parent=51 // pred_check_branch
          %4436 = sbr.rel (%p4434) target = $region68
        $region67: #{tpu_custom_call.1} parent=51 // pred_region
          %s4438 = ssub.s32 4096, 4096
          %4439 = vsyncadd %s4430, %s4438
          %s4440 = smul.addr %s26, 32
          %s4441 = smul.addr %s4440, 128
          %s4442 = scalar_lea.hbm %s8, %s4441
          %s4443 = sshll.u32 %s4433, 4
          %s4444 = int_to_ptr.vmem [resolvable:$true] %s4443
          %4449 = dma.vmem_to_hbm [thread:$0]  %s4444, 4096, %s4442, %s4430, 128, 128, 8
        $region68: #{tpu_custom_call.1} parent=51 // pred_fallthru
          _
      $region52: #{tpu_custom_call.1} parent=5 // pred_fallthru
        _
      %p4450 = scmp.le.s32.totalorder 2, %s21
      // Predicated region
      $region69: #{tpu_custom_call.1} parent=5 // pred_check
        %p4451 = pneg %p4450
      $region70: #{tpu_custom_call.1} parent=5 // pred_check_branch
        %4453 = sbr.rel (%p4451) target = $region72
      $region71: #{tpu_custom_call.1} parent=5 // pred_region
        %s4454 = ssub.s32 %s21, 2
        // Predicated region
        $region73: #{tpu_custom_call.1} parent=71 // pred_check
          %p4455 = pneg %p223
        $region74: #{tpu_custom_call.1} parent=71 // pred_check_branch
          %4457 = sbr.rel (%p4455) target = $region76
        $region75: #{tpu_custom_call.1} parent=71 // pred_region
          %s4458 = sand.u32 %s208, 1
          %s4459 = scalar_lea.sflag [#allocation6], %s4458
          %s4460 = sand.u32 %s208, 1
          %s4461 = smul.addr %s4460, 256
          %s4462 = scalar_lea.vmem [#allocation10], %s4461
          %4463 = dma.done %s4459, 4096
        $region76: #{tpu_custom_call.1} parent=71 // pred_fallthru
          _
      $region72: #{tpu_custom_call.1} parent=5 // pred_fallthru
        _
    $region6: #{tpu_custom_call.1} parent=1 // loop_footer
      %s25 = sadd.s32 1, %s21
    $region7: #{tpu_custom_call.1} parent=1 // loop_footer_branch
      %20 = sbr.rel target = $region3
    $region8: #{tpu_custom_call.1} parent=1 // loop_exit
      _
    %4464 = vsyncpa [#allocation5], 1
    %s4465 = scalar_lea.sflag [#allocation5], 1
    %4466 = vsyncpa %s4465, 1
    %4467 = vsyncpa [#allocation8], 1
    %4468 = vsyncpa [#allocation6], 1
    %s4469 = scalar_lea.sflag [#allocation6], 1
    %4470 = vsyncpa %s4469, 1

</llo_original>
